<compile_context>
chip_gen: v7x
topology: tpu7x:2x2x1
jax: 0.10.0
libtpu: 0.0.40
codegen_flags: <defaults>
</compile_context>

<pallas_src>
import functools

import jax
import jax.numpy as jnp
from jax.experimental import pallas as pl
from jax.experimental.pallas import tpu as pltpu

_LN_EPS = 1e-5
_NEG_BIG = -1e30        # finite "minus infinity" so fully-masked rows don't NaN
_PAD_LOGIT = -1e9       # bias on padded vocab columns -> softmax prob exactly 0
_VMEM_LIMIT = 48 * 1024 * 1024   # explicit scoped-VMEM limit (safe on v5e/v6e/v7x)


def _pick_tile_m(M, max_tm=512):
    """Largest convenient row tile <= max_tm that still gives >= 2 grid steps."""
    for c in (512, 256, 128, 64, 32, 16, 8):
        if c <= max_tm and M % c == 0 and M // c >= 2:
            return c
    return M          # block == full dim is always legal (may lose pipelining)


def _pick_tile_q(Lq, max_tq=256):
    for c in (256, 128, 64, 32, 16, 8):
        if c <= max_tq and Lq % c == 0:
            return c
    return Lq


# ---------------------------------------------------------------------------
# Kernels
# ---------------------------------------------------------------------------
def _mha_ln_kernel(q_ref, kvin_ref, pbias_ref, wq_ref, wkv_ref, wo_ref,
                   g_ref, b_ref, o_ref, kv_scr,
                   *, n_head, d_k, d_v, causal, tq, eps):
    """Fused MHA (+ residual + LayerNorm), tiled over the query length.

    grid = (batch, Lq // tq).  K/V projection of the (full) context is computed
    once per batch at q_tile == 0 into a bf16 VMEM scratch and reused.
    """
    qt = pl.program_id(1)

    @pl.when(qt == 0)
    def _():
        ctx = kvin_ref[0].astype(jnp.bfloat16)                    # (Lk, D)
        kv_scr[...] = jnp.dot(ctx, wkv_ref[...],
                              preferred_element_type=jnp.float32
                              ).astype(jnp.bfloat16)              # (Lk, H*(dk+dv))

    x = q_ref[0]                                                   # (tq, D) f32 (residual)
    # 1/sqrt(d_k) is pre-folded into W_q at prepare time.
    q = jnp.dot(x.astype(jnp.bfloat16), wq_ref[...],
                preferred_element_type=jnp.float32).astype(jnp.bfloat16)   # (tq, H*dk)

    kv = kv_scr[...]                                               # bf16
    k = kv[:, : n_head * d_k]                                      # (Lk, H*dk)
    v = kv[:, n_head * d_k:]                                       # (Lk, H*dv)
    Lk = k.shape[0]

    bias = pbias_ref[0]                                            # (1, Lk) additive pad bias
    if causal:
        row = qt * tq + jax.lax.broadcasted_iota(jnp.int32, (tq, Lk), 0)
        col = jax.lax.broadcasted_iota(jnp.int32, (tq, Lk), 1)
        bias = bias + jnp.where(col > row, jnp.float32(_NEG_BIG), jnp.float32(0.0))

    ctx_heads = []
    for h in range(n_head):                                        # n_head is small: static unroll
        qh = q[:, h * d_k:(h + 1) * d_k]
        kh = k[:, h * d_k:(h + 1) * d_k]
        vh = v[:, h * d_v:(h + 1) * d_v]
        s = jax.lax.dot_general(qh, kh, (((1,), (1,)), ((), ())),
                                preferred_element_type=jnp.float32)        # (tq, Lk)
        s = s + bias
        s = s - jnp.max(s, axis=-1, keepdims=True)
        p = jnp.exp(s)
        p = p * pl.reciprocal(jnp.sum(p, axis=-1, keepdims=True), approx=True)
        ctx_heads.append(jnp.dot(p.astype(jnp.bfloat16), vh,
                                 preferred_element_type=jnp.float32))      # (tq, dv)

    # Single full-K output projection (concat heads -> one MXU pass).
    ctx = jnp.concatenate(ctx_heads, axis=-1).astype(jnp.bfloat16)         # (tq, H*dv)
    attn_out = jnp.dot(ctx, wo_ref[...], preferred_element_type=jnp.float32)

    y = x + attn_out                               # residual (dropout == identity)
    mu = jnp.mean(y, axis=-1, keepdims=True)
    d = y - mu
    var = jnp.mean(d * d, axis=-1, keepdims=True)
    o_ref[0] = d * jax.lax.rsqrt(var + eps) * g_ref[...] + b_ref[...]


def _ffn_ln_kernel(x_ref, w1_ref, b1_ref, w2_ref, b2_ref, g_ref, bln_ref, o_ref, *, eps):
    """Row-tiled fused FFN (w1 + ReLU + w2) + residual + LayerNorm."""
    x = x_ref[...]                                                  # (tm, D) f32
    h = jnp.dot(x.astype(jnp.bfloat16), w1_ref[...],
                preferred_element_type=jnp.float32) + b1_ref[...]
    h = jnp.maximum(h, 0.0).astype(jnp.bfloat16)                    # bf16 hidden: half the spill/read traffic
    y = jnp.dot(h, w2_ref[...], preferred_element_type=jnp.float32) + b2_ref[...]
    y = x + y
    mu = jnp.mean(y, axis=-1, keepdims=True)
    d = y - mu
    var = jnp.mean(d * d, axis=-1, keepdims=True)
    o_ref[...] = d * jax.lax.rsqrt(var + eps) * g_ref[...] + bln_ref[...]


def _ln_kernel(x_ref, g_ref, b_ref, o_ref, *, eps):
    x = x_ref[...]
    mu = jnp.mean(x, axis=-1, keepdims=True)
    d = x - mu
    var = jnp.mean(d * d, axis=-1, keepdims=True)
    o_ref[...] = d * jax.lax.rsqrt(var + eps) * g_ref[...] + b_ref[...]


def _proj_stats_kernel(x_ref, w_ref, b_ref, logits_ref, m_ref, l_ref):
    """Pass 1: vocab-tiled logits + online (flash-style) row max / sum-exp."""
    vt = pl.program_id(1)
    logits = jnp.dot(x_ref[...].astype(jnp.bfloat16), w_ref[...],
                     preferred_element_type=jnp.float32) + b_ref[...]
    logits_ref[...] = logits
    tile_max = jnp.max(logits, axis=-1, keepdims=True)

    @pl.when(vt == 0)
    def _():
        m_ref[...] = tile_max
        l_ref[...] = jnp.sum(jnp.exp(logits - tile_max), axis=-1, keepdims=True)

    @pl.when(vt > 0)
    def _():
        m_old = m_ref[...]
        m_new = jnp.maximum(m_old, tile_max)
        l_ref[...] = (l_ref[...] * jnp.exp(m_old - m_new)
                      + jnp.sum(jnp.exp(logits - m_new), axis=-1, keepdims=True))
        m_ref[...] = m_new


def _softmax_norm_kernel(logits_ref, m_ref, l_ref, o_ref):
    """Pass 2: normalize logits with the precomputed row stats."""
    o_ref[...] = (jnp.exp(logits_ref[...] - m_ref[...])
                  * pl.reciprocal(l_ref[...], approx=True))


# ---------------------------------------------------------------------------
# Kernel wrappers
# ---------------------------------------------------------------------------
def fused_mha_ln(q_in, kv_in, pad_bias, attn_p, gamma, beta,
                 *, n_head, d_k, d_v, causal):
    """q_in:(B,Lq,D) kv_in:(B,Lk,D) pad_bias:(B,1,Lk)f32 -> LN(q_in + MHA)."""
    B, Lq, D = q_in.shape
    Lk = kv_in.shape[1]
    tq = _pick_tile_q(Lq)
    return pl.pallas_call(
        functools.partial(_mha_ln_kernel, n_head=n_head, d_k=d_k, d_v=d_v,
                          causal=causal, tq=tq, eps=_LN_EPS),
        out_shape=jax.ShapeDtypeStruct((B, Lq, D), jnp.float32),
        grid=(B, Lq // tq),
        in_specs=[
            pl.BlockSpec((1, tq, D), lambda b, i: (b, i, 0)),
            pl.BlockSpec((1, Lk, D), lambda b, i: (b, 0, 0)),
            pl.BlockSpec((1, 1, Lk), lambda b, i: (b, 0, 0)),
            pl.BlockSpec((D, n_head * d_k), lambda b, i: (0, 0)),
            pl.BlockSpec((D, n_head * (d_k + d_v)), lambda b, i: (0, 0)),
            pl.BlockSpec((n_head * d_v, D), lambda b, i: (0, 0)),
            pl.BlockSpec((1, D), lambda b, i: (0, 0)),
            pl.BlockSpec((1, D), lambda b, i: (0, 0)),
        ],
        out_specs=pl.BlockSpec((1, tq, D), lambda b, i: (b, i, 0)),
        scratch_shapes=[pltpu.VMEM((Lk, n_head * (d_k + d_v)), jnp.bfloat16)],
        compiler_params=pltpu.CompilerParams(
            dimension_semantics=("parallel", "arbitrary"),
            vmem_limit_bytes=_VMEM_LIMIT),
    )(q_in, kv_in, pad_bias, attn_p["wq"], attn_p["wkv"], attn_p["wo"],
      gamma, beta)


def fused_ffn_ln(x, ffn_p, gamma, beta):
    """x:(B,S,D) -> LN(x + FFN(x)), fused and row-tiled."""
    B, S, D = x.shape
    M = B * S
    dff = ffn_p["w1"].shape[1]
    # Cap the row tile by the (tm, dff) f32 intermediate footprint (~2 MiB).
    cap = max(8, min(512, (2 * 1024 * 1024) // (4 * dff)))
    tm = _pick_tile_m(M, max_tm=cap)
    out = pl.pallas_call(
        functools.partial(_ffn_ln_kernel, eps=_LN_EPS),
        out_shape=jax.ShapeDtypeStruct((M, D), jnp.float32),
        grid=(M // tm,),
        in_specs=[
            pl.BlockSpec((tm, D), lambda i: (i, 0)),
            pl.BlockSpec((D, dff), lambda i: (0, 0)),
            pl.BlockSpec((1, dff), lambda i: (0, 0)),
            pl.BlockSpec((dff, D), lambda i: (0, 0)),
            pl.BlockSpec((1, D), lambda i: (0, 0)),
            pl.BlockSpec((1, D), lambda i: (0, 0)),
            pl.BlockSpec((1, D), lambda i: (0, 0)),
        ],
        out_specs=pl.BlockSpec((tm, D), lambda i: (i, 0)),
        compiler_params=pltpu.CompilerParams(
            dimension_semantics=("parallel",), vmem_limit_bytes=_VMEM_LIMIT),
    )(x.reshape(M, D), ffn_p["w1"], ffn_p["b1"], ffn_p["w2"], ffn_p["b2"],
      gamma, beta)
    return out.reshape(B, S, D)


def layernorm(x, gamma, beta):
    """Plain LayerNorm over last dim (no residual). x:(B,S,D), gamma/beta:(1,D)."""
    B, S, D = x.shape
    M = B * S
    tm = _pick_tile_m(M)
    out = pl.pallas_call(
        functools.partial(_ln_kernel, eps=_LN_EPS),
        out_shape=jax.ShapeDtypeStruct((M, D), jnp.float32),
        grid=(M // tm,),
        in_specs=[
            pl.BlockSpec((tm, D), lambda i: (i, 0)),
            pl.BlockSpec((1, D), lambda i: (0, 0)),
            pl.BlockSpec((1, D), lambda i: (0, 0)),
        ],
        out_specs=pl.BlockSpec((tm, D), lambda i: (i, 0)),
        compiler_params=pltpu.CompilerParams(
            dimension_semantics=("parallel",), vmem_limit_bytes=_VMEM_LIMIT),
    )(x.reshape(M, D), gamma, beta)
    return out.reshape(B, S, D)


def fused_proj_softmax(x2d, w_pad, b_pad, vocab):
    """x2d:(M,D) @ w_pad:(D,Vp)bf16 + b_pad, softmax over vocab (vocab-tiled, 2-pass)."""
    M, D = x2d.shape
    Vp = w_pad.shape[1]
    tv = 128
    while tv < min(Vp, 2048) and Vp % (tv * 2) == 0:
        tv *= 2
    tm = _pick_tile_m(M, max_tm=max(8, min(512, (2 * 1024 * 1024) // (4 * tv))))
    grid = (M // tm, Vp // tv)

    logits, m, l = pl.pallas_call(
        _proj_stats_kernel,
        out_shape=(jax.ShapeDtypeStruct((M, Vp), jnp.float32),
                   jax.ShapeDtypeStruct((M, 1), jnp.float32),
                   jax.ShapeDtypeStruct((M, 1), jnp.float32)),
        grid=grid,
        in_specs=[
            pl.BlockSpec((tm, D), lambda i, v: (i, 0)),
            pl.BlockSpec((D, tv), lambda i, v: (0, v)),
            pl.BlockSpec((1, tv), lambda i, v: (0, v)),
        ],
        out_specs=(pl.BlockSpec((tm, tv), lambda i, v: (i, v)),
                   pl.BlockSpec((tm, 1), lambda i, v: (i, 0)),
                   pl.BlockSpec((tm, 1), lambda i, v: (i, 0))),
        compiler_params=pltpu.CompilerParams(
            dimension_semantics=("parallel", "arbitrary"),
            vmem_limit_bytes=_VMEM_LIMIT),
    )(x2d, w_pad, b_pad)

    probs = pl.pallas_call(
        _softmax_norm_kernel,
        out_shape=jax.ShapeDtypeStruct((M, Vp), jnp.float32),
        grid=grid,
        in_specs=[
            pl.BlockSpec((tm, tv), lambda i, v: (i, v)),
            pl.BlockSpec((tm, 1), lambda i, v: (i, 0)),
            pl.BlockSpec((tm, 1), lambda i, v: (i, 0)),
        ],
        out_specs=pl.BlockSpec((tm, tv), lambda i, v: (i, v)),
        compiler_params=pltpu.CompilerParams(
            dimension_semantics=("parallel", "parallel"),
            vmem_limit_bytes=_VMEM_LIMIT),
    )(logits, m, l)
    return probs[:, :vocab]


# ---------------------------------------------------------------------------
# Model composition (plain-JAX glue around the fused kernels)
# ---------------------------------------------------------------------------
def pad_mask_to_bias(mask_row):
    """mask_row:(B,1,Lk), 1 == masked -> additive f32 bias (B,1,Lk)."""
    return jnp.where(mask_row == 1, jnp.float32(_NEG_BIG), jnp.float32(0.0)
                     ).astype(jnp.float32)


def encoder_layer(x, src_pad_bias, lp, n_head, d_k, d_v):
    x = fused_mha_ln(x, x, src_pad_bias, lp["self_attn"], lp["ln1_g"], lp["ln1_b"],
                     n_head=n_head, d_k=d_k, d_v=d_v, causal=False)
    x = fused_ffn_ln(x, lp["ffn"], lp["ln2_g"], lp["ln2_b"])
    return x


def decoder_layer(x, enc_out, src_pad_bias, tgt_pad_bias, lp, n_head, d_k, d_v):
    x = fused_mha_ln(x, x, tgt_pad_bias, lp["self_attn"], lp["ln1_g"], lp["ln1_b"],
                     n_head=n_head, d_k=d_k, d_v=d_v, causal=True)
    x = fused_mha_ln(x, enc_out, src_pad_bias, lp["enc_dec_attn"], lp["ln2_g"], lp["ln2_b"],
                     n_head=n_head, d_k=d_k, d_v=d_v, causal=False)
    x = fused_ffn_ln(x, lp["ffn"], lp["ln3_g"], lp["ln3_b"])
    return x


def positional_encoding_table(max_len, d_model):
    pos = jnp.arange(max_len, dtype=jnp.float32)[:, None]
    div = jnp.exp(jnp.arange(0, d_model, 2, dtype=jnp.float32)
                  * (-jnp.log(10000.0) / d_model))
    pe = jnp.zeros((max_len, d_model), jnp.float32)
    pe = pe.at[:, 0::2].set(jnp.sin(pos * div))
    pe = pe.at[:, 1::2].set(jnp.cos(pos * div))
    return pe


def transformer_forward(pp, cfg, src, tgt, src_mask, tgt_mask):
    D = cfg["d_model"]
    n_head, d_k, d_v = cfg["n_head"], cfg["d_k"], cfg["d_v"]
    B, S_src = src.shape
    S_tgt = tgt.shape[1]
    scale = float(D) ** 0.5

    # Per-key padding biases only (tiny); the causal part is built in-kernel.
    # TODO(synk): arbitrary dense (Lq,Lk) masks are decomposed here as
    #   "per-key padding (+ causal)" — the standard Transformer usage.
    src_pad_bias = pad_mask_to_bias(src_mask[:, -1:, :])          # (B,1,S_src)
    tgt_pad_bias = pad_mask_to_bias(tgt_mask[:, -1:, :])          # (B,1,S_tgt)

    # --- encoder ---
    # Embedding gather + scale + positional add left to XLA (memory-bound, fuses).
    x = pp["enc_emb"][src] * scale + pp["pe_src"][None, :S_src, :]
    for lp in pp["enc_layers"]:
        x = encoder_layer(x, src_pad_bias, lp, n_head, d_k, d_v)
    enc_out = layernorm(x, pp["enc_ln_g"], pp["enc_ln_b"])

    # --- decoder ---
    y = pp["dec_emb"][tgt] * scale + pp["pe_tgt"][None, :S_tgt, :]
    for lp in pp["dec_layers"]:
        y = decoder_layer(y, enc_out, src_pad_bias, tgt_pad_bias, lp, n_head, d_k, d_v)
    y = layernorm(y, pp["dec_ln_g"], pp["dec_ln_b"])

    # --- output projection + softmax (vocab-tiled, 2-pass) ---
    probs = fused_proj_softmax(y.reshape(B * S_tgt, D),
                               pp["out_w"], pp["out_b"], cfg["tgt_vocab"])
    return probs.reshape(B, S_tgt, cfg["tgt_vocab"])


# ---------------------------------------------------------------------------
# Parameter init (f32, PyTorch-like) + one-time prepare (pack/cast for kernels)
# ---------------------------------------------------------------------------
def init_params(key, cfg):
    D, Hn, dk, dv, dff = cfg["d_model"], cfg["n_head"], cfg["d_k"], cfg["d_v"], cfg["d_ff"]
    keys = iter(jax.random.split(key, 512))

    def w(shape, scale=0.02):
        return (scale * jax.random.normal(next(keys), shape)).astype(jnp.float32)

    def mha_p():
        return {"wq": w((D, Hn * dk)), "wk": w((D, Hn * dk)),
                "wv": w((D, Hn * dv)), "wo": w((Hn * dv, D))}

    def ffn_p():
        return {"w1": w((D, dff)), "b1": jnp.zeros((dff,), jnp.float32),
                "w2": w((dff, D)), "b2": jnp.zeros((D,), jnp.float32)}

    def enc_layer_p():
        return {"self_attn": mha_p(), "ffn": ffn_p(),
                "ln1_g": jnp.ones((D,), jnp.float32), "ln1_b": jnp.zeros((D,), jnp.float32),
                "ln2_g": jnp.ones((D,), jnp.float32), "ln2_b": jnp.zeros((D,), jnp.float32)}

    def dec_layer_p():
        return {"self_attn": mha_p(), "enc_dec_attn": mha_p(), "ffn": ffn_p(),
                "ln1_g": jnp.ones((D,), jnp.float32), "ln1_b": jnp.zeros((D,), jnp.float32),
                "ln2_g": jnp.ones((D,), jnp.float32), "ln2_b": jnp.zeros((D,), jnp.float32),
                "ln3_g": jnp.ones((D,), jnp.float32), "ln3_b": jnp.zeros((D,), jnp.float32)}

    return {
        "enc_emb": w((cfg["src_vocab"], D), scale=1.0),
        "dec_emb": w((cfg["tgt_vocab"], D), scale=1.0),
        "pe_src": positional_encoding_table(cfg["max_src_len"], D),
        "pe_tgt": positional_encoding_table(cfg["max_tgt_len"], D),
        "enc_layers": [enc_layer_p() for _ in range(cfg["num_enc"])],
        "dec_layers": [dec_layer_p() for _ in range(cfg["num_dec"])],
        "enc_ln_g": jnp.ones((D,), jnp.float32), "enc_ln_b": jnp.zeros((D,), jnp.float32),
        "dec_ln_g": jnp.ones((D,), jnp.float32), "dec_ln_b": jnp.zeros((D,), jnp.float32),
        "out_w": w((D, cfg["tgt_vocab"])),
        "out_b": jnp.zeros((cfg["tgt_vocab"],), jnp.float32),
    }


def prepare_params(params, cfg):
    """One-time pre-pack / pre-cast so no per-forward convert/concat/pad ops remain."""
    D, dk, dv, dff = cfg["d_model"], cfg["d_k"], cfg["d_v"], cfg["d_ff"]
    V = cfg["tgt_vocab"]
    Vp = ((V + 127) // 128) * 128
    qk_scale = 1.0 / float(dk) ** 0.5

    def prep_attn(p):
        return {"wq": (p["wq"] * qk_scale).astype(jnp.bfloat16),         # scale folded in
                "wkv": jnp.concatenate([p["wk"], p["wv"]], axis=1).astype(jnp.bfloat16),
                "wo": p["wo"].astype(jnp.bfloat16)}

    def prep_ffn(p):
        return {"w1": p["w1"].astype(jnp.bfloat16), "b1": p["b1"].reshape(1, dff),
                "w2": p["w2"].astype(jnp.bfloat16), "b2": p["b2"].reshape(1, D)}

    def ln(v):
        return v.reshape(1, D).astype(jnp.float32)

    def prep_enc(lp):
        return {"self_attn": prep_attn(lp["self_attn"]), "ffn": prep_ffn(lp["ffn"]),
                "ln1_g": ln(lp["ln1_g"]), "ln1_b": ln(lp["ln1_b"]),
                "ln2_g": ln(lp["ln2_g"]), "ln2_b": ln(lp["ln2_b"])}

    def prep_dec(lp):
        return {"self_attn": prep_attn(lp["self_attn"]),
                "enc_dec_attn": prep_attn(lp["enc_dec_attn"]),
                "ffn": prep_ffn(lp["ffn"]),
                "ln1_g": ln(lp["ln1_g"]), "ln1_b": ln(lp["ln1_b"]),
                "ln2_g": ln(lp["ln2_g"]), "ln2_b": ln(lp["ln2_b"]),
                "ln3_g": ln(lp["ln3_g"]), "ln3_b": ln(lp["ln3_b"])}

    out_w = jnp.zeros((D, Vp), jnp.float32).at[:, :V].set(params["out_w"]).astype(jnp.bfloat16)
    out_b = jnp.full((Vp,), _PAD_LOGIT, jnp.float32).at[:V].set(params["out_b"]).reshape(1, Vp)

    return {
        "enc_emb": params["enc_emb"], "dec_emb": params["dec_emb"],
        "pe_src": params["pe_src"], "pe_tgt": params["pe_tgt"],
        "enc_layers": [prep_enc(lp) for lp in params["enc_layers"]],
        "dec_layers": [prep_dec(lp) for lp in params["dec_layers"]],
        "enc_ln_g": ln(params["enc_ln_g"]), "enc_ln_b": ln(params["enc_ln_b"]),
        "dec_ln_g": ln(params["dec_ln_g"]), "dec_ln_b": ln(params["dec_ln_b"]),
        "out_w": out_w, "out_b": out_b,
    }


# ---------------------------------------------------------------------------
if __name__ == "__main__":
    cfg = dict(d_model=32, n_head=4, d_k=8, d_v=8, d_ff=64,
               num_enc=2, num_dec=2, src_vocab=50, tgt_vocab=50,
               max_src_len=64, max_tgt_len=64)
    B, S_src, S_tgt = 2, 8, 8

    key = jax.random.PRNGKey(0)
    k_par, k_src, k_tgt = jax.random.split(key, 3)
    params = init_params(k_par, cfg)
    pparams = prepare_params(params, cfg)        # one-time pack/cast, outside jit

    src = jax.random.randint(k_src, (B, S_src), 0, cfg["src_vocab"], dtype=jnp.int32)
    tgt = jax.random.randint(k_tgt, (B, S_tgt), 0, cfg["tgt_vocab"], dtype=jnp.int32)

    # masks: 1 == masked (matches masked_fill(mask == 1, -inf) in the reference)
    src_mask = jnp.zeros((B, 1, S_src), jnp.int32)                      # no padding mask
    causal = (jnp.arange(S_tgt)[None, :] > jnp.arange(S_tgt)[:, None]).astype(jnp.int32)
    tgt_mask = jnp.broadcast_to(causal, (B, S_tgt, S_tgt))              # causal mask

    # TODO(synk): dropout layers are treated as identity (inference semantics).
    fwd = jax.jit(lambda p, s, t, sm, tm: transformer_forward(p, cfg, s, t, sm, tm))
    out = fwd(pparams, src, tgt, src_mask, tgt_mask)
    out = jax.block_until_ready(out)

    assert out.shape == (B, S_tgt, cfg["tgt_vocab"])
    assert bool(jnp.all(jnp.isfinite(out)))
    print("KERNEL_OK")
</pallas_src>

<mosaic_0001>
module attributes {stable_mosaic.version = 11 : i64} {
  func.func @_ln_kernel(%arg0: i32, %arg1: memref<8x32xf32, #tpu.memory_space<vmem>>, %arg2: memref<1x32xf32, #tpu.memory_space<vmem>>, %arg3: memref<1x32xf32, #tpu.memory_space<vmem>>, %arg4: memref<8x32xf32, #tpu.memory_space<vmem>>) attributes {dimension_semantics = [#tpu.dimension_semantics<parallel>], iteration_bounds = array<i64: 2>, scalar_prefetch = 0 : i64, scratch_operands = 0 : i64, tpu.core_type = #tpu.core_type<tc>, window_params = [{transform_indices = @transform_0, window_bounds = array<i64: 8, 32>}, {pipeline_mode = #tpu.pipeline_mode<synchronous>, transform_indices = @transform_1, window_bounds = array<i64: 1, 32>}, {pipeline_mode = #tpu.pipeline_mode<synchronous>, transform_indices = @transform_2, window_bounds = array<i64: 1, 32>}, {transform_indices = @transform_3, window_bounds = array<i64: 8, 32>}]} {
    %c0 = arith.constant 0 : index
    %c0_0 = arith.constant 0 : index
    %0 = vector.load %arg1[%c0, %c0_0] : memref<8x32xf32, #tpu.memory_space<vmem>>, vector<8x32xf32>
    %cst = arith.constant dense<0.000000e+00> : vector<8xf32>
    %1 = vector.multi_reduction <add>, %0, %cst [1] : vector<8x32xf32> to vector<8xf32>
    %2 = vector.shape_cast %1 : vector<8xf32> to vector<8x1xf32>
    %cst_1 = arith.constant 3.200000e+01 : f32
    %3 = vector.broadcast %cst_1 : f32 to vector<8x1xf32>
    %4 = arith.divf %2, %3 : vector<8x1xf32>
    %5 = vector.broadcast %4 : vector<8x1xf32> to vector<8x32xf32>
    %6 = arith.subf %0, %5 : vector<8x32xf32>
    %7 = arith.mulf %6, %6 : vector<8x32xf32>
    %cst_2 = arith.constant dense<0.000000e+00> : vector<8xf32>
    %8 = vector.multi_reduction <add>, %7, %cst_2 [1] : vector<8x32xf32> to vector<8xf32>
    %9 = vector.shape_cast %8 : vector<8xf32> to vector<8x1xf32>
    %cst_3 = arith.constant 3.200000e+01 : f32
    %10 = vector.broadcast %cst_3 : f32 to vector<8x1xf32>
    %11 = arith.divf %9, %10 : vector<8x1xf32>
    %cst_4 = arith.constant 9.99999974E-6 : f32
    %12 = vector.broadcast %cst_4 : f32 to vector<8x1xf32>
    %13 = arith.addf %11, %12 : vector<8x1xf32>
    %14 = math.rsqrt %13 : vector<8x1xf32>
    %15 = vector.broadcast %14 : vector<8x1xf32> to vector<8x32xf32>
    %16 = arith.mulf %6, %15 : vector<8x32xf32>
    %c0_5 = arith.constant 0 : index
    %c0_6 = arith.constant 0 : index
    %17 = vector.load %arg2[%c0_5, %c0_6] : memref<1x32xf32, #tpu.memory_space<vmem>>, vector<1x32xf32>
    %18 = vector.broadcast %17 : vector<1x32xf32> to vector<8x32xf32>
    %19 = arith.mulf %16, %18 : vector<8x32xf32>
    %c0_7 = arith.constant 0 : index
    %c0_8 = arith.constant 0 : index
    %20 = vector.load %arg3[%c0_7, %c0_8] : memref<1x32xf32, #tpu.memory_space<vmem>>, vector<1x32xf32>
    %21 = vector.broadcast %20 : vector<1x32xf32> to vector<8x32xf32>
    %22 = arith.addf %19, %21 : vector<8x32xf32>
    %c0_9 = arith.constant 0 : index
    %c0_10 = arith.constant 0 : index
    %23 = vector.load %arg4[%c0_9, %c0_10] : memref<8x32xf32, #tpu.memory_space<vmem>>, vector<8x32xf32>
    tpu.vector_store %arg4[%c0_9, %c0_10], %22 {strides = array<i32>} : memref<8x32xf32, #tpu.memory_space<vmem>>, vector<8x32xf32>,
    return
  }
  func.func @transform_0(%arg0: i32) -> (i32, i32) {
    %c0_i32 = arith.constant 0 : i32
    %c0_i32_0 = arith.constant 0 : i32
    return %arg0, %c0_i32 : i32, i32
  }
  func.func @transform_1(%arg0: i32) -> (i32, i32) {
    %c0_i32 = arith.constant 0 : i32
    %c0_i32_0 = arith.constant 0 : i32
    %c0_i32_1 = arith.constant 0 : i32
    return %c0_i32, %c0_i32_0 : i32, i32
  }
  func.func @transform_2(%arg0: i32) -> (i32, i32) {
    %c0_i32 = arith.constant 0 : i32
    %c0_i32_0 = arith.constant 0 : i32
    %c0_i32_1 = arith.constant 0 : i32
    return %c0_i32, %c0_i32_0 : i32, i32
  }
  func.func @transform_3(%arg0: i32) -> (i32, i32) {
    %c0_i32 = arith.constant 0 : i32
    %c0_i32_0 = arith.constant 0 : i32
    return %arg0, %c0_i32 : i32, i32
  }
}

module attributes {stable_mosaic.version = 11 : i64} {
  func.func @_mha_ln_kernel(%arg0: i32, %arg1: i32, %arg2: memref<1x8x32xf32, #tpu.memory_space<vmem>>, %arg3: memref<1x8x32xf32, #tpu.memory_space<vmem>>, %arg4: memref<1x1x8xf32, #tpu.memory_space<vmem>>, %arg5: memref<32x32xbf16, #tpu.memory_space<vmem>>, %arg6: memref<32x64xbf16, #tpu.memory_space<vmem>>, %arg7: memref<32x32xbf16, #tpu.memory_space<vmem>>, %arg8: memref<1x32xf32, #tpu.memory_space<vmem>>, %arg9: memref<1x32xf32, #tpu.memory_space<vmem>>, %arg10: memref<1x8x32xf32, #tpu.memory_space<vmem>>, %arg11: memref<8x64xbf16, #tpu.memory_space<vmem>>) attributes {dimension_semantics = [#tpu.dimension_semantics<parallel>, #tpu.dimension_semantics<arbitrary>], iteration_bounds = array<i64: 2, 1>, scalar_prefetch = 0 : i64, scratch_operands = 1 : i64, tpu.core_type = #tpu.core_type<tc>, window_params = [{transform_indices = @transform_0, window_bounds = array<i64: 1, 8, 32>}, {transform_indices = @transform_1, window_bounds = array<i64: 1, 8, 32>}, {transform_indices = @transform_2, window_bounds = array<i64: 1, 1, 8>}, {pipeline_mode = #tpu.pipeline_mode<synchronous>, transform_indices = @transform_3, window_bounds = array<i64: 32, 32>}, {pipeline_mode = #tpu.pipeline_mode<synchronous>, transform_indices = @transform_4, window_bounds = array<i64: 32, 64>}, {pipeline_mode = #tpu.pipeline_mode<synchronous>, transform_indices = @transform_5, window_bounds = array<i64: 32, 32>}, {pipeline_mode = #tpu.pipeline_mode<synchronous>, transform_indices = @transform_6, window_bounds = array<i64: 1, 32>}, {pipeline_mode = #tpu.pipeline_mode<synchronous>, transform_indices = @transform_7, window_bounds = array<i64: 1, 32>}, {transform_indices = @transform_8, window_bounds = array<i64: 1, 8, 32>}]} {
    %c0_i32 = arith.constant 0 : i32
    %0 = arith.cmpi eq, %arg1, %c0_i32 : i32
    %1 = arith.extui %0 : i1 to i32
    %c0_i32_0 = arith.constant 0 : i32
    %2 = arith.cmpi ne, %1, %c0_i32_0 : i32
    scf.if %2 {
      %c0_43 = arith.constant 0 : index
      %c0_44 = arith.constant 0 : index
      %c0_45 = arith.constant 0 : index
      %123 = vector.load %arg3[%c0_43, %c0_44, %c0_45] : memref<1x8x32xf32, #tpu.memory_space<vmem>>, vector<1x8x32xf32>
      %124 = vector.shape_cast %123 : vector<1x8x32xf32> to vector<8x32xf32>
      %125 = arith.truncf %124 : vector<8x32xf32> to vector<8x32xbf16>
      %c0_46 = arith.constant 0 : index
      %c0_47 = arith.constant 0 : index
      %126 = vector.load %arg6[%c0_46, %c0_47] : memref<32x64xbf16, #tpu.memory_space<vmem>>, vector<32x64xbf16>
      %cst_48 = arith.constant dense<0.000000e+00> : vector<8x64xf32>
      %127 = tpu.matmul %125, %126, %cst_48 {dimension_numbers = #tpu.dot_dimension_numbers<[1], [0], [0], [1], [0, 0, 1, 1], [], []>} : vector<8x32xbf16>, vector<32x64xbf16>, vector<8x64xf32> -> vector<8x64xf32>
      %128 = arith.truncf %127 : vector<8x64xf32> to vector<8x64xbf16>
      %c0_49 = arith.constant 0 : index
      %c0_50 = arith.constant 0 : index
      %129 = vector.load %arg11[%c0_49, %c0_50] : memref<8x64xbf16, #tpu.memory_space<vmem>>, vector<8x64xbf16>
      tpu.vector_store %arg11[%c0_49, %c0_50], %128 {strides = array<i32>} : memref<8x64xbf16, #tpu.memory_space<vmem>>, vector<8x64xbf16>,
    } else {
    }
    %c0 = arith.constant 0 : index
    %c0_1 = arith.constant 0 : index
    %c0_2 = arith.constant 0 : index
    %3 = vector.load %arg2[%c0, %c0_1, %c0_2] : memref<1x8x32xf32, #tpu.memory_space<vmem>>, vector<1x8x32xf32>
    %4 = vector.shape_cast %3 : vector<1x8x32xf32> to vector<8x32xf32>
    %5 = arith.truncf %4 : vector<8x32xf32> to vector<8x32xbf16>
    %c0_3 = arith.constant 0 : index
    %c0_4 = arith.constant 0 : index
    %6 = vector.load %arg5[%c0_3, %c0_4] : memref<32x32xbf16, #tpu.memory_space<vmem>>, vector<32x32xbf16>
    %cst = arith.constant dense<0.000000e+00> : vector<8x32xf32>
    %7 = tpu.matmul %5, %6, %cst {dimension_numbers = #tpu.dot_dimension_numbers<[1], [0], [0], [1], [0, 0, 1, 1], [], []>} : vector<8x32xbf16>, vector<32x32xbf16>, vector<8x32xf32> -> vector<8x32xf32>
    %8 = arith.truncf %7 : vector<8x32xf32> to vector<8x32xbf16>
    %c0_5 = arith.constant 0 : index
    %c0_6 = arith.constant 0 : index
    %9 = vector.load %arg11[%c0_5, %c0_6] : memref<8x64xbf16, #tpu.memory_space<vmem>>, vector<8x64xbf16>
    %10 = vector.extract_strided_slice %9 {offsets = [0, 0], sizes = [8, 32], strides = [1, 1]} : vector<8x64xbf16> to vector<8x32xbf16>
    %11 = vector.extract_strided_slice %9 {offsets = [0, 32], sizes = [8, 32], strides = [1, 1]} : vector<8x64xbf16> to vector<8x32xbf16>
    %c0_7 = arith.constant 0 : index
    %c0_8 = arith.constant 0 : index
    %c0_9 = arith.constant 0 : index
    %12 = vector.load %arg4[%c0_7, %c0_8, %c0_9] : memref<1x1x8xf32, #tpu.memory_space<vmem>>, vector<1x1x8xf32>
    %13 = vector.shape_cast %12 : vector<1x1x8xf32> to vector<1x8xf32>
    %c8_i32 = arith.constant 8 : i32
    %14 = arith.muli %arg1, %c8_i32 : i32
    %15 = tpu.iota {dimensions = array<i32: 0>} : vector<8x8xi32>
    %16 = vector.broadcast %14 : i32 to vector<8x8xi32>
    %17 = arith.addi %16, %15 : vector<8x8xi32>
    %18 = tpu.iota {dimensions = array<i32: 1>} : vector<8x8xi32>
    %19 = arith.cmpi sgt, %18, %17 : vector<8x8xi32>
    %cst_10 = arith.constant -1.000000e+30 : f32
    %cst_11 = arith.constant 0.000000e+00 : f32
    %20 = vector.broadcast %cst_10 : f32 to vector<8x8xf32>
    %21 = vector.broadcast %cst_11 : f32 to vector<8x8xf32>
    %22 = arith.select %19, %20, %21 : vector<8x8xi1>, vector<8x8xf32>
    %23 = vector.broadcast %13 : vector<1x8xf32> to vector<8x8xf32>
    %24 = arith.addf %23, %22 : vector<8x8xf32>
    %25 = vector.extract_strided_slice %8 {offsets = [0, 0], sizes = [8, 8], strides = [1, 1]} : vector<8x32xbf16> to vector<8x8xbf16>
    %26 = vector.extract_strided_slice %10 {offsets = [0, 0], sizes = [8, 8], strides = [1, 1]} : vector<8x32xbf16> to vector<8x8xbf16>
    %27 = vector.extract_strided_slice %11 {offsets = [0, 0], sizes = [8, 8], strides = [1, 1]} : vector<8x32xbf16> to vector<8x8xbf16>
    %cst_12 = arith.constant dense<0.000000e+00> : vector<8x8xf32>
    %28 = tpu.matmul %25, %26, %cst_12 {dimension_numbers = #tpu.dot_dimension_numbers<[1], [1], [0], [0], [0, 0, 1, 0], [], []>} : vector<8x8xbf16>, vector<8x8xbf16>, vector<8x8xf32> -> vector<8x8xf32>
    %29 = arith.addf %28, %24 : vector<8x8xf32>
    %cst_13 = arith.constant dense<0xFF800000> : vector<8xf32>
    %30 = vector.multi_reduction <maximumf>, %29, %cst_13 [1] : vector<8x8xf32> to vector<8xf32>
    %31 = vector.shape_cast %30 : vector<8xf32> to vector<8x1xf32>
    %32 = vector.broadcast %31 : vector<8x1xf32> to vector<8x8xf32>
    %33 = arith.subf %29, %32 : vector<8x8xf32>
    %34 = math.exp %33 : vector<8x8xf32>
    %cst_14 = arith.constant dense<0.000000e+00> : vector<8xf32>
    %35 = vector.multi_reduction <add>, %34, %cst_14 [1] : vector<8x8xf32> to vector<8xf32>
    %36 = vector.shape_cast %35 : vector<8xf32> to vector<8x1xf32>
    %37 = tpu.reciprocal %36 {approx = true} : vector<8x1xf32> -> vector<8x1xf32>
    %38 = vector.broadcast %37 : vector<8x1xf32> to vector<8x8xf32>
    %39 = arith.mulf %34, %38 : vector<8x8xf32>
    %40 = arith.truncf %39 : vector<8x8xf32> to vector<8x8xbf16>
    %cst_15 = arith.constant dense<0.000000e+00> : vector<8x8xf32>
    %41 = tpu.matmul %40, %27, %cst_15 {dimension_numbers = #tpu.dot_dimension_numbers<[1], [0], [0], [1], [0, 0, 1, 1], [], []>} : vector<8x8xbf16>, vector<8x8xbf16>, vector<8x8xf32> -> vector<8x8xf32>
    %42 = vector.extract_strided_slice %8 {offsets = [0, 8], sizes = [8, 8], strides = [1, 1]} : vector<8x32xbf16> to vector<8x8xbf16>
    %43 = vector.extract_strided_slice %10 {offsets = [0, 8], sizes = [8, 8], strides = [1, 1]} : vector<8x32xbf16> to vector<8x8xbf16>
    %44 = vector.extract_strided_slice %11 {offsets = [0, 8], sizes = [8, 8], strides = [1, 1]} : vector<8x32xbf16> to vector<8x8xbf16>
    %cst_16 = arith.constant dense<0.000000e+00> : vector<8x8xf32>
    %45 = tpu.matmul %42, %43, %cst_16 {dimension_numbers = #tpu.dot_dimension_numbers<[1], [1], [0], [0], [0, 0, 1, 0], [], []>} : vector<8x8xbf16>, vector<8x8xbf16>, vector<8x8xf32> -> vector<8x8xf32>
    %46 = arith.addf %45, %24 : vector<8x8xf32>
    %cst_17 = arith.constant dense<0xFF800000> : vector<8xf32>
    %47 = vector.multi_reduction <maximumf>, %46, %cst_17 [1] : vector<8x8xf32> to vector<8xf32>
    %48 = vector.shape_cast %47 : vector<8xf32> to vector<8x1xf32>
    %49 = vector.broadcast %48 : vector<8x1xf32> to vector<8x8xf32>
    %50 = arith.subf %46, %49 : vector<8x8xf32>
    %51 = math.exp %50 : vector<8x8xf32>
    %cst_18 = arith.constant dense<0.000000e+00> : vector<8xf32>
    %52 = vector.multi_reduction <add>, %51, %cst_18 [1] : vector<8x8xf32> to vector<8xf32>
    %53 = vector.shape_cast %52 : vector<8xf32> to vector<8x1xf32>
    %54 = tpu.reciprocal %53 {approx = true} : vector<8x1xf32> -> vector<8x1xf32>
    %55 = vector.broadcast %54 : vector<8x1xf32> to vector<8x8xf32>
    %56 = arith.mulf %51, %55 : vector<8x8xf32>
    %57 = arith.truncf %56 : vector<8x8xf32> to vector<8x8xbf16>
    %cst_19 = arith.constant dense<0.000000e+00> : vector<8x8xf32>
    %58 = tpu.matmul %57, %44, %cst_19 {dimension_numbers = #tpu.dot_dimension_numbers<[1], [0], [0], [1], [0, 0, 1, 1], [], []>} : vector<8x8xbf16>, vector<8x8xbf16>, vector<8x8xf32> -> vector<8x8xf32>
    %59 = vector.extract_strided_slice %8 {offsets = [0, 16], sizes = [8, 8], strides = [1, 1]} : vector<8x32xbf16> to vector<8x8xbf16>
    %60 = vector.extract_strided_slice %10 {offsets = [0, 16], sizes = [8, 8], strides = [1, 1]} : vector<8x32xbf16> to vector<8x8xbf16>
    %61 = vector.extract_strided_slice %11 {offsets = [0, 16], sizes = [8, 8], strides = [1, 1]} : vector<8x32xbf16> to vector<8x8xbf16>
    %cst_20 = arith.constant dense<0.000000e+00> : vector<8x8xf32>
    %62 = tpu.matmul %59, %60, %cst_20 {dimension_numbers = #tpu.dot_dimension_numbers<[1], [1], [0], [0], [0, 0, 1, 0], [], []>} : vector<8x8xbf16>, vector<8x8xbf16>, vector<8x8xf32> -> vector<8x8xf32>
    %63 = arith.addf %62, %24 : vector<8x8xf32>
    %cst_21 = arith.constant dense<0xFF800000> : vector<8xf32>
    %64 = vector.multi_reduction <maximumf>, %63, %cst_21 [1] : vector<8x8xf32> to vector<8xf32>
    %65 = vector.shape_cast %64 : vector<8xf32> to vector<8x1xf32>
    %66 = vector.broadcast %65 : vector<8x1xf32> to vector<8x8xf32>
    %67 = arith.subf %63, %66 : vector<8x8xf32>
    %68 = math.exp %67 : vector<8x8xf32>
    %cst_22 = arith.constant dense<0.000000e+00> : vector<8xf32>
    %69 = vector.multi_reduction <add>, %68, %cst_22 [1] : vector<8x8xf32> to vector<8xf32>
    %70 = vector.shape_cast %69 : vector<8xf32> to vector<8x1xf32>
    %71 = tpu.reciprocal %70 {approx = true} : vector<8x1xf32> -> vector<8x1xf32>
    %72 = vector.broadcast %71 : vector<8x1xf32> to vector<8x8xf32>
    %73 = arith.mulf %68, %72 : vector<8x8xf32>
    %74 = arith.truncf %73 : vector<8x8xf32> to vector<8x8xbf16>
    %cst_23 = arith.constant dense<0.000000e+00> : vector<8x8xf32>
    %75 = tpu.matmul %74, %61, %cst_23 {dimension_numbers = #tpu.dot_dimension_numbers<[1], [0], [0], [1], [0, 0, 1, 1], [], []>} : vector<8x8xbf16>, vector<8x8xbf16>, vector<8x8xf32> -> vector<8x8xf32>
    %76 = vector.extract_strided_slice %8 {offsets = [0, 24], sizes = [8, 8], strides = [1, 1]} : vector<8x32xbf16> to vector<8x8xbf16>
    %77 = vector.extract_strided_slice %10 {offsets = [0, 24], sizes = [8, 8], strides = [1, 1]} : vector<8x32xbf16> to vector<8x8xbf16>
    %78 = vector.extract_strided_slice %11 {offsets = [0, 24], sizes = [8, 8], strides = [1, 1]} : vector<8x32xbf16> to vector<8x8xbf16>
    %cst_24 = arith.constant dense<0.000000e+00> : vector<8x8xf32>
    %79 = tpu.matmul %76, %77, %cst_24 {dimension_numbers = #tpu.dot_dimension_numbers<[1], [1], [0], [0], [0, 0, 1, 0], [], []>} : vector<8x8xbf16>, vector<8x8xbf16>, vector<8x8xf32> -> vector<8x8xf32>
    %80 = arith.addf %79, %24 : vector<8x8xf32>
    %cst_25 = arith.constant dense<0xFF800000> : vector<8xf32>
    %81 = vector.multi_reduction <maximumf>, %80, %cst_25 [1] : vector<8x8xf32> to vector<8xf32>
    %82 = vector.shape_cast %81 : vector<8xf32> to vector<8x1xf32>
    %83 = vector.broadcast %82 : vector<8x1xf32> to vector<8x8xf32>
    %84 = arith.subf %80, %83 : vector<8x8xf32>
    %85 = math.exp %84 : vector<8x8xf32>
    %cst_26 = arith.constant dense<0.000000e+00> : vector<8xf32>
    %86 = vector.multi_reduction <add>, %85, %cst_26 [1] : vector<8x8xf32> to vector<8xf32>
    %87 = vector.shape_cast %86 : vector<8xf32> to vector<8x1xf32>
    %88 = tpu.reciprocal %87 {approx = true} : vector<8x1xf32> -> vector<8x1xf32>
    %89 = vector.broadcast %88 : vector<8x1xf32> to vector<8x8xf32>
    %90 = arith.mulf %85, %89 : vector<8x8xf32>
    %91 = arith.truncf %90 : vector<8x8xf32> to vector<8x8xbf16>
    %cst_27 = arith.constant dense<0.000000e+00> : vector<8x8xf32>
    %92 = tpu.matmul %91, %78, %cst_27 {dimension_numbers = #tpu.dot_dimension_numbers<[1], [0], [0], [1], [0, 0, 1, 1], [], []>} : vector<8x8xbf16>, vector<8x8xbf16>, vector<8x8xf32> -> vector<8x8xf32>
    %93 = tpu.concatenate %41, %58, %75, %92 in 1 : vector<8x8xf32>, vector<8x8xf32>, vector<8x8xf32>, vector<8x8xf32> -> vector<8x32xf32>
    %94 = arith.truncf %93 : vector<8x32xf32> to vector<8x32xbf16>
    %c0_28 = arith.constant 0 : index
    %c0_29 = arith.constant 0 : index
    %95 = vector.load %arg7[%c0_28, %c0_29] : memref<32x32xbf16, #tpu.memory_space<vmem>>, vector<32x32xbf16>
    %cst_30 = arith.constant dense<0.000000e+00> : vector<8x32xf32>
    %96 = tpu.matmul %94, %95, %cst_30 {dimension_numbers = #tpu.dot_dimension_numbers<[1], [0], [0], [1], [0, 0, 1, 1], [], []>} : vector<8x32xbf16>, vector<32x32xbf16>, vector<8x32xf32> -> vector<8x32xf32>
    %97 = arith.addf %4, %96 : vector<8x32xf32>
    %cst_31 = arith.constant dense<0.000000e+00> : vector<8xf32>
    %98 = vector.multi_reduction <add>, %97, %cst_31 [1] : vector<8x32xf32> to vector<8xf32>
    %99 = vector.shape_cast %98 : vector<8xf32> to vector<8x1xf32>
    %cst_32 = arith.constant 3.200000e+01 : f32
    %100 = vector.broadcast %cst_32 : f32 to vector<8x1xf32>
    %101 = arith.divf %99, %100 : vector<8x1xf32>
    %102 = vector.broadcast %101 : vector<8x1xf32> to vector<8x32xf32>
    %103 = arith.subf %97, %102 : vector<8x32xf32>
    %104 = arith.mulf %103, %103 : vector<8x32xf32>
    %cst_33 = arith.constant dense<0.000000e+00> : vector<8xf32>
    %105 = vector.multi_reduction <add>, %104, %cst_33 [1] : vector<8x32xf32> to vector<8xf32>
    %106 = vector.shape_cast %105 : vector<8xf32> to vector<8x1xf32>
    %cst_34 = arith.constant 3.200000e+01 : f32
    %107 = vector.broadcast %cst_34 : f32 to vector<8x1xf32>
    %108 = arith.divf %106, %107 : vector<8x1xf32>
    %cst_35 = arith.constant 9.99999974E-6 : f32
    %109 = vector.broadcast %cst_35 : f32 to vector<8x1xf32>
    %110 = arith.addf %108, %109 : vector<8x1xf32>
    %111 = math.rsqrt %110 : vector<8x1xf32>
    %112 = vector.broadcast %111 : vector<8x1xf32> to vector<8x32xf32>
    %113 = arith.mulf %103, %112 : vector<8x32xf32>
    %c0_36 = arith.constant 0 : index
    %c0_37 = arith.constant 0 : index
    %114 = vector.load %arg8[%c0_36, %c0_37] : memref<1x32xf32, #tpu.memory_space<vmem>>, vector<1x32xf32>
    %115 = vector.broadcast %114 : vector<1x32xf32> to vector<8x32xf32>
    %116 = arith.mulf %113, %115 : vector<8x32xf32>
    %c0_38 = arith.constant 0 : index
    %c0_39 = arith.constant 0 : index
    %117 = vector.load %arg9[%c0_38, %c0_39] : memref<1x32xf32, #tpu.memory_space<vmem>>, vector<1x32xf32>
    %118 = vector.broadcast %117 : vector<1x32xf32> to vector<8x32xf32>
    %119 = arith.addf %116, %118 : vector<8x32xf32>
    %c0_40 = arith.constant 0 : index
    %c0_41 = arith.constant 0 : index
    %c0_42 = arith.constant 0 : index
    %120 = vector.load %arg10[%c0_40, %c0_41, %c0_42] : memref<1x8x32xf32, #tpu.memory_space<vmem>>, vector<1x8x32xf32>
    %121 = vector.shape_cast %120 : vector<1x8x32xf32> to vector<8x32xf32>
    %122 = vector.shape_cast %119 : vector<8x32xf32> to vector<1x8x32xf32>
    tpu.vector_store %arg10[%c0_40, %c0_41, %c0_42], %122 {strides = array<i32>} : memref<1x8x32xf32, #tpu.memory_space<vmem>>, vector<1x8x32xf32>,
    return
  }
  func.func @transform_0(%arg0: i32, %arg1: i32) -> (i32, i32, i32) {
    %c0_i32 = arith.constant 0 : i32
    %c0_i32_0 = arith.constant 0 : i32
    return %arg0, %arg1, %c0_i32 : i32, i32, i32
  }
  func.func @transform_1(%arg0: i32, %arg1: i32) -> (i32, i32, i32) {
    %c0_i32 = arith.constant 0 : i32
    %c0_i32_0 = arith.constant 0 : i32
    %c0_i32_1 = arith.constant 0 : i32
    return %arg0, %c0_i32, %c0_i32_0 : i32, i32, i32
  }
  func.func @transform_2(%arg0: i32, %arg1: i32) -> (i32, i32, i32) {
    %c0_i32 = arith.constant 0 : i32
    %c0_i32_0 = arith.constant 0 : i32
    %c0_i32_1 = arith.constant 0 : i32
    return %arg0, %c0_i32, %c0_i32_0 : i32, i32, i32
  }
  func.func @transform_3(%arg0: i32, %arg1: i32) -> (i32, i32) {
    %c0_i32 = arith.constant 0 : i32
    %c0_i32_0 = arith.constant 0 : i32
    %c0_i32_1 = arith.constant 0 : i32
    return %c0_i32, %c0_i32_0 : i32, i32
  }
  func.func @transform_4(%arg0: i32, %arg1: i32) -> (i32, i32) {
    %c0_i32 = arith.constant 0 : i32
    %c0_i32_0 = arith.constant 0 : i32
    %c0_i32_1 = arith.constant 0 : i32
    return %c0_i32, %c0_i32_0 : i32, i32
  }
  func.func @transform_5(%arg0: i32, %arg1: i32) -> (i32, i32) {
    %c0_i32 = arith.constant 0 : i32
    %c0_i32_0 = arith.constant 0 : i32
    %c0_i32_1 = arith.constant 0 : i32
    return %c0_i32, %c0_i32_0 : i32, i32
  }
  func.func @transform_6(%arg0: i32, %arg1: i32) -> (i32, i32) {
    %c0_i32 = arith.constant 0 : i32
    %c0_i32_0 = arith.constant 0 : i32
    %c0_i32_1 = arith.constant 0 : i32
    return %c0_i32, %c0_i32_0 : i32, i32
  }
  func.func @transform_7(%arg0: i32, %arg1: i32) -> (i32, i32) {
    %c0_i32 = arith.constant 0 : i32
    %c0_i32_0 = arith.constant 0 : i32
    %c0_i32_1 = arith.constant 0 : i32
    return %c0_i32, %c0_i32_0 : i32, i32
  }
  func.func @transform_8(%arg0: i32, %arg1: i32) -> (i32, i32, i32) {
    %c0_i32 = arith.constant 0 : i32
    %c0_i32_0 = arith.constant 0 : i32
    return %arg0, %arg1, %c0_i32 : i32, i32, i32
  }
}

module attributes {stable_mosaic.version = 11 : i64} {
  func.func @_mha_ln_kernel(%arg0: i32, %arg1: i32, %arg2: memref<1x8x32xf32, #tpu.memory_space<vmem>>, %arg3: memref<1x8x32xf32, #tpu.memory_space<vmem>>, %arg4: memref<1x1x8xf32, #tpu.memory_space<vmem>>, %arg5: memref<32x32xbf16, #tpu.memory_space<vmem>>, %arg6: memref<32x64xbf16, #tpu.memory_space<vmem>>, %arg7: memref<32x32xbf16, #tpu.memory_space<vmem>>, %arg8: memref<1x32xf32, #tpu.memory_space<vmem>>, %arg9: memref<1x32xf32, #tpu.memory_space<vmem>>, %arg10: memref<1x8x32xf32, #tpu.memory_space<vmem>>, %arg11: memref<8x64xbf16, #tpu.memory_space<vmem>>) attributes {dimension_semantics = [#tpu.dimension_semantics<parallel>, #tpu.dimension_semantics<arbitrary>], iteration_bounds = array<i64: 2, 1>, scalar_prefetch = 0 : i64, scratch_operands = 1 : i64, tpu.core_type = #tpu.core_type<tc>, window_params = [{transform_indices = @transform_0, window_bounds = array<i64: 1, 8, 32>}, {transform_indices = @transform_1, window_bounds = array<i64: 1, 8, 32>}, {transform_indices = @transform_2, window_bounds = array<i64: 1, 1, 8>}, {pipeline_mode = #tpu.pipeline_mode<synchronous>, transform_indices = @transform_3, window_bounds = array<i64: 32, 32>}, {pipeline_mode = #tpu.pipeline_mode<synchronous>, transform_indices = @transform_4, window_bounds = array<i64: 32, 64>}, {pipeline_mode = #tpu.pipeline_mode<synchronous>, transform_indices = @transform_5, window_bounds = array<i64: 32, 32>}, {pipeline_mode = #tpu.pipeline_mode<synchronous>, transform_indices = @transform_6, window_bounds = array<i64: 1, 32>}, {pipeline_mode = #tpu.pipeline_mode<synchronous>, transform_indices = @transform_7, window_bounds = array<i64: 1, 32>}, {transform_indices = @transform_8, window_bounds = array<i64: 1, 8, 32>}]} {
    %c0_i32 = arith.constant 0 : i32
    %0 = arith.cmpi eq, %arg1, %c0_i32 : i32
    %1 = arith.extui %0 : i1 to i32
    %c0_i32_0 = arith.constant 0 : i32
    %2 = arith.cmpi ne, %1, %c0_i32_0 : i32
    scf.if %2 {
      %c0_41 = arith.constant 0 : index
      %c0_42 = arith.constant 0 : index
      %c0_43 = arith.constant 0 : index
      %116 = vector.load %arg3[%c0_41, %c0_42, %c0_43] : memref<1x8x32xf32, #tpu.memory_space<vmem>>, vector<1x8x32xf32>
      %117 = vector.shape_cast %116 : vector<1x8x32xf32> to vector<8x32xf32>
      %118 = arith.truncf %117 : vector<8x32xf32> to vector<8x32xbf16>
      %c0_44 = arith.constant 0 : index
      %c0_45 = arith.constant 0 : index
      %119 = vector.load %arg6[%c0_44, %c0_45] : memref<32x64xbf16, #tpu.memory_space<vmem>>, vector<32x64xbf16>
      %cst_46 = arith.constant dense<0.000000e+00> : vector<8x64xf32>
      %120 = tpu.matmul %118, %119, %cst_46 {dimension_numbers = #tpu.dot_dimension_numbers<[1], [0], [0], [1], [0, 0, 1, 1], [], []>} : vector<8x32xbf16>, vector<32x64xbf16>, vector<8x64xf32> -> vector<8x64xf32>
      %121 = arith.truncf %120 : vector<8x64xf32> to vector<8x64xbf16>
      %c0_47 = arith.constant 0 : index
      %c0_48 = arith.constant 0 : index
      %122 = vector.load %arg11[%c0_47, %c0_48] : memref<8x64xbf16, #tpu.memory_space<vmem>>, vector<8x64xbf16>
      tpu.vector_store %arg11[%c0_47, %c0_48], %121 {strides = array<i32>} : memref<8x64xbf16, #tpu.memory_space<vmem>>, vector<8x64xbf16>,
    } else {
    }
    %c0 = arith.constant 0 : index
    %c0_1 = arith.constant 0 : index
    %c0_2 = arith.constant 0 : index
    %3 = vector.load %arg2[%c0, %c0_1, %c0_2] : memref<1x8x32xf32, #tpu.memory_space<vmem>>, vector<1x8x32xf32>
    %4 = vector.shape_cast %3 : vector<1x8x32xf32> to vector<8x32xf32>
    %5 = arith.truncf %4 : vector<8x32xf32> to vector<8x32xbf16>
    %c0_3 = arith.constant 0 : index
    %c0_4 = arith.constant 0 : index
    %6 = vector.load %arg5[%c0_3, %c0_4] : memref<32x32xbf16, #tpu.memory_space<vmem>>, vector<32x32xbf16>
    %cst = arith.constant dense<0.000000e+00> : vector<8x32xf32>
    %7 = tpu.matmul %5, %6, %cst {dimension_numbers = #tpu.dot_dimension_numbers<[1], [0], [0], [1], [0, 0, 1, 1], [], []>} : vector<8x32xbf16>, vector<32x32xbf16>, vector<8x32xf32> -> vector<8x32xf32>
    %8 = arith.truncf %7 : vector<8x32xf32> to vector<8x32xbf16>
    %c0_5 = arith.constant 0 : index
    %c0_6 = arith.constant 0 : index
    %9 = vector.load %arg11[%c0_5, %c0_6] : memref<8x64xbf16, #tpu.memory_space<vmem>>, vector<8x64xbf16>
    %10 = vector.extract_strided_slice %9 {offsets = [0, 0], sizes = [8, 32], strides = [1, 1]} : vector<8x64xbf16> to vector<8x32xbf16>
    %11 = vector.extract_strided_slice %9 {offsets = [0, 32], sizes = [8, 32], strides = [1, 1]} : vector<8x64xbf16> to vector<8x32xbf16>
    %c0_7 = arith.constant 0 : index
    %c0_8 = arith.constant 0 : index
    %c0_9 = arith.constant 0 : index
    %12 = vector.load %arg4[%c0_7, %c0_8, %c0_9] : memref<1x1x8xf32, #tpu.memory_space<vmem>>, vector<1x1x8xf32>
    %13 = vector.shape_cast %12 : vector<1x1x8xf32> to vector<1x8xf32>
    %14 = vector.extract_strided_slice %8 {offsets = [0, 0], sizes = [8, 8], strides = [1, 1]} : vector<8x32xbf16> to vector<8x8xbf16>
    %15 = vector.extract_strided_slice %10 {offsets = [0, 0], sizes = [8, 8], strides = [1, 1]} : vector<8x32xbf16> to vector<8x8xbf16>
    %16 = vector.extract_strided_slice %11 {offsets = [0, 0], sizes = [8, 8], strides = [1, 1]} : vector<8x32xbf16> to vector<8x8xbf16>
    %cst_10 = arith.constant dense<0.000000e+00> : vector<8x8xf32>
    %17 = tpu.matmul %14, %15, %cst_10 {dimension_numbers = #tpu.dot_dimension_numbers<[1], [1], [0], [0], [0, 0, 1, 0], [], []>} : vector<8x8xbf16>, vector<8x8xbf16>, vector<8x8xf32> -> vector<8x8xf32>
    %18 = vector.broadcast %13 : vector<1x8xf32> to vector<8x8xf32>
    %19 = arith.addf %17, %18 : vector<8x8xf32>
    %cst_11 = arith.constant dense<0xFF800000> : vector<8xf32>
    %20 = vector.multi_reduction <maximumf>, %19, %cst_11 [1] : vector<8x8xf32> to vector<8xf32>
    %21 = vector.shape_cast %20 : vector<8xf32> to vector<8x1xf32>
    %22 = vector.broadcast %21 : vector<8x1xf32> to vector<8x8xf32>
    %23 = arith.subf %19, %22 : vector<8x8xf32>
    %24 = math.exp %23 : vector<8x8xf32>
    %cst_12 = arith.constant dense<0.000000e+00> : vector<8xf32>
    %25 = vector.multi_reduction <add>, %24, %cst_12 [1] : vector<8x8xf32> to vector<8xf32>
    %26 = vector.shape_cast %25 : vector<8xf32> to vector<8x1xf32>
    %27 = tpu.reciprocal %26 {approx = true} : vector<8x1xf32> -> vector<8x1xf32>
    %28 = vector.broadcast %27 : vector<8x1xf32> to vector<8x8xf32>
    %29 = arith.mulf %24, %28 : vector<8x8xf32>
    %30 = arith.truncf %29 : vector<8x8xf32> to vector<8x8xbf16>
    %cst_13 = arith.constant dense<0.000000e+00> : vector<8x8xf32>
    %31 = tpu.matmul %30, %16, %cst_13 {dimension_numbers = #tpu.dot_dimension_numbers<[1], [0], [0], [1], [0, 0, 1, 1], [], []>} : vector<8x8xbf16>, vector<8x8xbf16>, vector<8x8xf32> -> vector<8x8xf32>
    %32 = vector.extract_strided_slice %8 {offsets = [0, 8], sizes = [8, 8], strides = [1, 1]} : vector<8x32xbf16> to vector<8x8xbf16>
    %33 = vector.extract_strided_slice %10 {offsets = [0, 8], sizes = [8, 8], strides = [1, 1]} : vector<8x32xbf16> to vector<8x8xbf16>
    %34 = vector.extract_strided_slice %11 {offsets = [0, 8], sizes = [8, 8], strides = [1, 1]} : vector<8x32xbf16> to vector<8x8xbf16>
    %cst_14 = arith.constant dense<0.000000e+00> : vector<8x8xf32>
    %35 = tpu.matmul %32, %33, %cst_14 {dimension_numbers = #tpu.dot_dimension_numbers<[1], [1], [0], [0], [0, 0, 1, 0], [], []>} : vector<8x8xbf16>, vector<8x8xbf16>, vector<8x8xf32> -> vector<8x8xf32>
    %36 = vector.broadcast %13 : vector<1x8xf32> to vector<8x8xf32>
    %37 = arith.addf %35, %36 : vector<8x8xf32>
    %cst_15 = arith.constant dense<0xFF800000> : vector<8xf32>
    %38 = vector.multi_reduction <maximumf>, %37, %cst_15 [1] : vector<8x8xf32> to vector<8xf32>
    %39 = vector.shape_cast %38 : vector<8xf32> to vector<8x1xf32>
    %40 = vector.broadcast %39 : vector<8x1xf32> to vector<8x8xf32>
    %41 = arith.subf %37, %40 : vector<8x8xf32>
    %42 = math.exp %41 : vector<8x8xf32>
    %cst_16 = arith.constant dense<0.000000e+00> : vector<8xf32>
    %43 = vector.multi_reduction <add>, %42, %cst_16 [1] : vector<8x8xf32> to vector<8xf32>
    %44 = vector.shape_cast %43 : vector<8xf32> to vector<8x1xf32>
    %45 = tpu.reciprocal %44 {approx = true} : vector<8x1xf32> -> vector<8x1xf32>
    %46 = vector.broadcast %45 : vector<8x1xf32> to vector<8x8xf32>
    %47 = arith.mulf %42, %46 : vector<8x8xf32>
    %48 = arith.truncf %47 : vector<8x8xf32> to vector<8x8xbf16>
    %cst_17 = arith.constant dense<0.000000e+00> : vector<8x8xf32>
    %49 = tpu.matmul %48, %34, %cst_17 {dimension_numbers = #tpu.dot_dimension_numbers<[1], [0], [0], [1], [0, 0, 1, 1], [], []>} : vector<8x8xbf16>, vector<8x8xbf16>, vector<8x8xf32> -> vector<8x8xf32>
    %50 = vector.extract_strided_slice %8 {offsets = [0, 16], sizes = [8, 8], strides = [1, 1]} : vector<8x32xbf16> to vector<8x8xbf16>
    %51 = vector.extract_strided_slice %10 {offsets = [0, 16], sizes = [8, 8], strides = [1, 1]} : vector<8x32xbf16> to vector<8x8xbf16>
    %52 = vector.extract_strided_slice %11 {offsets = [0, 16], sizes = [8, 8], strides = [1, 1]} : vector<8x32xbf16> to vector<8x8xbf16>
    %cst_18 = arith.constant dense<0.000000e+00> : vector<8x8xf32>
    %53 = tpu.matmul %50, %51, %cst_18 {dimension_numbers = #tpu.dot_dimension_numbers<[1], [1], [0], [0], [0, 0, 1, 0], [], []>} : vector<8x8xbf16>, vector<8x8xbf16>, vector<8x8xf32> -> vector<8x8xf32>
    %54 = vector.broadcast %13 : vector<1x8xf32> to vector<8x8xf32>
    %55 = arith.addf %53, %54 : vector<8x8xf32>
    %cst_19 = arith.constant dense<0xFF800000> : vector<8xf32>
    %56 = vector.multi_reduction <maximumf>, %55, %cst_19 [1] : vector<8x8xf32> to vector<8xf32>
    %57 = vector.shape_cast %56 : vector<8xf32> to vector<8x1xf32>
    %58 = vector.broadcast %57 : vector<8x1xf32> to vector<8x8xf32>
    %59 = arith.subf %55, %58 : vector<8x8xf32>
    %60 = math.exp %59 : vector<8x8xf32>
    %cst_20 = arith.constant dense<0.000000e+00> : vector<8xf32>
    %61 = vector.multi_reduction <add>, %60, %cst_20 [1] : vector<8x8xf32> to vector<8xf32>
    %62 = vector.shape_cast %61 : vector<8xf32> to vector<8x1xf32>
    %63 = tpu.reciprocal %62 {approx = true} : vector<8x1xf32> -> vector<8x1xf32>
    %64 = vector.broadcast %63 : vector<8x1xf32> to vector<8x8xf32>
    %65 = arith.mulf %60, %64 : vector<8x8xf32>
    %66 = arith.truncf %65 : vector<8x8xf32> to vector<8x8xbf16>
    %cst_21 = arith.constant dense<0.000000e+00> : vector<8x8xf32>
    %67 = tpu.matmul %66, %52, %cst_21 {dimension_numbers = #tpu.dot_dimension_numbers<[1], [0], [0], [1], [0, 0, 1, 1], [], []>} : vector<8x8xbf16>, vector<8x8xbf16>, vector<8x8xf32> -> vector<8x8xf32>
    %68 = vector.extract_strided_slice %8 {offsets = [0, 24], sizes = [8, 8], strides = [1, 1]} : vector<8x32xbf16> to vector<8x8xbf16>
    %69 = vector.extract_strided_slice %10 {offsets = [0, 24], sizes = [8, 8], strides = [1, 1]} : vector<8x32xbf16> to vector<8x8xbf16>
    %70 = vector.extract_strided_slice %11 {offsets = [0, 24], sizes = [8, 8], strides = [1, 1]} : vector<8x32xbf16> to vector<8x8xbf16>
    %cst_22 = arith.constant dense<0.000000e+00> : vector<8x8xf32>
    %71 = tpu.matmul %68, %69, %cst_22 {dimension_numbers = #tpu.dot_dimension_numbers<[1], [1], [0], [0], [0, 0, 1, 0], [], []>} : vector<8x8xbf16>, vector<8x8xbf16>, vector<8x8xf32> -> vector<8x8xf32>
    %72 = vector.broadcast %13 : vector<1x8xf32> to vector<8x8xf32>
    %73 = arith.addf %71, %72 : vector<8x8xf32>
    %cst_23 = arith.constant dense<0xFF800000> : vector<8xf32>
    %74 = vector.multi_reduction <maximumf>, %73, %cst_23 [1] : vector<8x8xf32> to vector<8xf32>
    %75 = vector.shape_cast %74 : vector<8xf32> to vector<8x1xf32>
    %76 = vector.broadcast %75 : vector<8x1xf32> to vector<8x8xf32>
    %77 = arith.subf %73, %76 : vector<8x8xf32>
    %78 = math.exp %77 : vector<8x8xf32>
    %cst_24 = arith.constant dense<0.000000e+00> : vector<8xf32>
    %79 = vector.multi_reduction <add>, %78, %cst_24 [1] : vector<8x8xf32> to vector<8xf32>
    %80 = vector.shape_cast %79 : vector<8xf32> to vector<8x1xf32>
    %81 = tpu.reciprocal %80 {approx = true} : vector<8x1xf32> -> vector<8x1xf32>
    %82 = vector.broadcast %81 : vector<8x1xf32> to vector<8x8xf32>
    %83 = arith.mulf %78, %82 : vector<8x8xf32>
    %84 = arith.truncf %83 : vector<8x8xf32> to vector<8x8xbf16>
    %cst_25 = arith.constant dense<0.000000e+00> : vector<8x8xf32>
    %85 = tpu.matmul %84, %70, %cst_25 {dimension_numbers = #tpu.dot_dimension_numbers<[1], [0], [0], [1], [0, 0, 1, 1], [], []>} : vector<8x8xbf16>, vector<8x8xbf16>, vector<8x8xf32> -> vector<8x8xf32>
    %86 = tpu.concatenate %31, %49, %67, %85 in 1 : vector<8x8xf32>, vector<8x8xf32>, vector<8x8xf32>, vector<8x8xf32> -> vector<8x32xf32>
    %87 = arith.truncf %86 : vector<8x32xf32> to vector<8x32xbf16>
    %c0_26 = arith.constant 0 : index
    %c0_27 = arith.constant 0 : index
    %88 = vector.load %arg7[%c0_26, %c0_27] : memref<32x32xbf16, #tpu.memory_space<vmem>>, vector<32x32xbf16>
    %cst_28 = arith.constant dense<0.000000e+00> : vector<8x32xf32>
    %89 = tpu.matmul %87, %88, %cst_28 {dimension_numbers = #tpu.dot_dimension_numbers<[1], [0], [0], [1], [0, 0, 1, 1], [], []>} : vector<8x32xbf16>, vector<32x32xbf16>, vector<8x32xf32> -> vector<8x32xf32>
    %90 = arith.addf %4, %89 : vector<8x32xf32>
    %cst_29 = arith.constant dense<0.000000e+00> : vector<8xf32>
    %91 = vector.multi_reduction <add>, %90, %cst_29 [1] : vector<8x32xf32> to vector<8xf32>
    %92 = vector.shape_cast %91 : vector<8xf32> to vector<8x1xf32>
    %cst_30 = arith.constant 3.200000e+01 : f32
    %93 = vector.broadcast %cst_30 : f32 to vector<8x1xf32>
    %94 = arith.divf %92, %93 : vector<8x1xf32>
    %95 = vector.broadcast %94 : vector<8x1xf32> to vector<8x32xf32>
    %96 = arith.subf %90, %95 : vector<8x32xf32>
    %97 = arith.mulf %96, %96 : vector<8x32xf32>
    %cst_31 = arith.constant dense<0.000000e+00> : vector<8xf32>
    %98 = vector.multi_reduction <add>, %97, %cst_31 [1] : vector<8x32xf32> to vector<8xf32>
    %99 = vector.shape_cast %98 : vector<8xf32> to vector<8x1xf32>
    %cst_32 = arith.constant 3.200000e+01 : f32
    %100 = vector.broadcast %cst_32 : f32 to vector<8x1xf32>
    %101 = arith.divf %99, %100 : vector<8x1xf32>
    %cst_33 = arith.constant 9.99999974E-6 : f32
    %102 = vector.broadcast %cst_33 : f32 to vector<8x1xf32>
    %103 = arith.addf %101, %102 : vector<8x1xf32>
    %104 = math.rsqrt %103 : vector<8x1xf32>
    %105 = vector.broadcast %104 : vector<8x1xf32> to vector<8x32xf32>
    %106 = arith.mulf %96, %105 : vector<8x32xf32>
    %c0_34 = arith.constant 0 : index
    %c0_35 = arith.constant 0 : index
    %107 = vector.load %arg8[%c0_34, %c0_35] : memref<1x32xf32, #tpu.memory_space<vmem>>, vector<1x32xf32>
    %108 = vector.broadcast %107 : vector<1x32xf32> to vector<8x32xf32>
    %109 = arith.mulf %106, %108 : vector<8x32xf32>
    %c0_36 = arith.constant 0 : index
    %c0_37 = arith.constant 0 : index
    %110 = vector.load %arg9[%c0_36, %c0_37] : memref<1x32xf32, #tpu.memory_space<vmem>>, vector<1x32xf32>
    %111 = vector.broadcast %110 : vector<1x32xf32> to vector<8x32xf32>
    %112 = arith.addf %109, %111 : vector<8x32xf32>
    %c0_38 = arith.constant 0 : index
    %c0_39 = arith.constant 0 : index
    %c0_40 = arith.constant 0 : index
    %113 = vector.load %arg10[%c0_38, %c0_39, %c0_40] : memref<1x8x32xf32, #tpu.memory_space<vmem>>, vector<1x8x32xf32>
    %114 = vector.shape_cast %113 : vector<1x8x32xf32> to vector<8x32xf32>
    %115 = vector.shape_cast %112 : vector<8x32xf32> to vector<1x8x32xf32>
    tpu.vector_store %arg10[%c0_38, %c0_39, %c0_40], %115 {strides = array<i32>} : memref<1x8x32xf32, #tpu.memory_space<vmem>>, vector<1x8x32xf32>,
    return
  }
  func.func @transform_0(%arg0: i32, %arg1: i32) -> (i32, i32, i32) {
    %c0_i32 = arith.constant 0 : i32
    %c0_i32_0 = arith.constant 0 : i32
    return %arg0, %arg1, %c0_i32 : i32, i32, i32
  }
  func.func @transform_1(%arg0: i32, %arg1: i32) -> (i32, i32, i32) {
    %c0_i32 = arith.constant 0 : i32
    %c0_i32_0 = arith.constant 0 : i32
    %c0_i32_1 = arith.constant 0 : i32
    return %arg0, %c0_i32, %c0_i32_0 : i32, i32, i32
  }
  func.func @transform_2(%arg0: i32, %arg1: i32) -> (i32, i32, i32) {
    %c0_i32 = arith.constant 0 : i32
    %c0_i32_0 = arith.constant 0 : i32
    %c0_i32_1 = arith.constant 0 : i32
    return %arg0, %c0_i32, %c0_i32_0 : i32, i32, i32
  }
  func.func @transform_3(%arg0: i32, %arg1: i32) -> (i32, i32) {
    %c0_i32 = arith.constant 0 : i32
    %c0_i32_0 = arith.constant 0 : i32
    %c0_i32_1 = arith.constant 0 : i32
    return %c0_i32, %c0_i32_0 : i32, i32
  }
  func.func @transform_4(%arg0: i32, %arg1: i32) -> (i32, i32) {
    %c0_i32 = arith.constant 0 : i32
    %c0_i32_0 = arith.constant 0 : i32
    %c0_i32_1 = arith.constant 0 : i32
    return %c0_i32, %c0_i32_0 : i32, i32
  }
  func.func @transform_5(%arg0: i32, %arg1: i32) -> (i32, i32) {
    %c0_i32 = arith.constant 0 : i32
    %c0_i32_0 = arith.constant 0 : i32
    %c0_i32_1 = arith.constant 0 : i32
    return %c0_i32, %c0_i32_0 : i32, i32
  }
  func.func @transform_6(%arg0: i32, %arg1: i32) -> (i32, i32) {
    %c0_i32 = arith.constant 0 : i32
    %c0_i32_0 = arith.constant 0 : i32
    %c0_i32_1 = arith.constant 0 : i32
    return %c0_i32, %c0_i32_0 : i32, i32
  }
  func.func @transform_7(%arg0: i32, %arg1: i32) -> (i32, i32) {
    %c0_i32 = arith.constant 0 : i32
    %c0_i32_0 = arith.constant 0 : i32
    %c0_i32_1 = arith.constant 0 : i32
    return %c0_i32, %c0_i32_0 : i32, i32
  }
  func.func @transform_8(%arg0: i32, %arg1: i32) -> (i32, i32, i32) {
    %c0_i32 = arith.constant 0 : i32
    %c0_i32_0 = arith.constant 0 : i32
    return %arg0, %arg1, %c0_i32 : i32, i32, i32
  }
}

module attributes {stable_mosaic.version = 11 : i64} {
  func.func @_ffn_ln_kernel(%arg0: i32, %arg1: memref<8x32xf32, #tpu.memory_space<vmem>>, %arg2: memref<32x64xbf16, #tpu.memory_space<vmem>>, %arg3: memref<1x64xf32, #tpu.memory_space<vmem>>, %arg4: memref<64x32xbf16, #tpu.memory_space<vmem>>, %arg5: memref<1x32xf32, #tpu.memory_space<vmem>>, %arg6: memref<1x32xf32, #tpu.memory_space<vmem>>, %arg7: memref<1x32xf32, #tpu.memory_space<vmem>>, %arg8: memref<8x32xf32, #tpu.memory_space<vmem>>) attributes {dimension_semantics = [#tpu.dimension_semantics<parallel>], iteration_bounds = array<i64: 2>, scalar_prefetch = 0 : i64, scratch_operands = 0 : i64, tpu.core_type = #tpu.core_type<tc>, window_params = [{transform_indices = @transform_0, window_bounds = array<i64: 8, 32>}, {pipeline_mode = #tpu.pipeline_mode<synchronous>, transform_indices = @transform_1, window_bounds = array<i64: 32, 64>}, {pipeline_mode = #tpu.pipeline_mode<synchronous>, transform_indices = @transform_2, window_bounds = array<i64: 1, 64>}, {pipeline_mode = #tpu.pipeline_mode<synchronous>, transform_indices = @transform_3, window_bounds = array<i64: 64, 32>}, {pipeline_mode = #tpu.pipeline_mode<synchronous>, transform_indices = @transform_4, window_bounds = array<i64: 1, 32>}, {pipeline_mode = #tpu.pipeline_mode<synchronous>, transform_indices = @transform_5, window_bounds = array<i64: 1, 32>}, {pipeline_mode = #tpu.pipeline_mode<synchronous>, transform_indices = @transform_6, window_bounds = array<i64: 1, 32>}, {transform_indices = @transform_7, window_bounds = array<i64: 8, 32>}]} {
    %c0 = arith.constant 0 : index
    %c0_0 = arith.constant 0 : index
    %0 = vector.load %arg1[%c0, %c0_0] : memref<8x32xf32, #tpu.memory_space<vmem>>, vector<8x32xf32>
    %1 = arith.truncf %0 : vector<8x32xf32> to vector<8x32xbf16>
    %c0_1 = arith.constant 0 : index
    %c0_2 = arith.constant 0 : index
    %2 = vector.load %arg2[%c0_1, %c0_2] : memref<32x64xbf16, #tpu.memory_space<vmem>>, vector<32x64xbf16>
    %cst = arith.constant dense<0.000000e+00> : vector<8x64xf32>
    %3 = tpu.matmul %1, %2, %cst {dimension_numbers = #tpu.dot_dimension_numbers<[1], [0], [0], [1], [0, 0, 1, 1], [], []>} : vector<8x32xbf16>, vector<32x64xbf16>, vector<8x64xf32> -> vector<8x64xf32>
    %c0_3 = arith.constant 0 : index
    %c0_4 = arith.constant 0 : index
    %4 = vector.load %arg3[%c0_3, %c0_4] : memref<1x64xf32, #tpu.memory_space<vmem>>, vector<1x64xf32>
    %5 = vector.broadcast %4 : vector<1x64xf32> to vector<8x64xf32>
    %6 = arith.addf %3, %5 : vector<8x64xf32>
    %cst_5 = arith.constant 0.000000e+00 : f32
    %7 = vector.broadcast %cst_5 : f32 to vector<8x64xf32>
    %8 = arith.maximumf %6, %7 : vector<8x64xf32>
    %9 = arith.truncf %8 : vector<8x64xf32> to vector<8x64xbf16>
    %c0_6 = arith.constant 0 : index
    %c0_7 = arith.constant 0 : index
    %10 = vector.load %arg4[%c0_6, %c0_7] : memref<64x32xbf16, #tpu.memory_space<vmem>>, vector<64x32xbf16>
    %cst_8 = arith.constant dense<0.000000e+00> : vector<8x32xf32>
    %11 = tpu.matmul %9, %10, %cst_8 {dimension_numbers = #tpu.dot_dimension_numbers<[1], [0], [0], [1], [0, 0, 1, 1], [], []>} : vector<8x64xbf16>, vector<64x32xbf16>, vector<8x32xf32> -> vector<8x32xf32>
    %c0_9 = arith.constant 0 : index
    %c0_10 = arith.constant 0 : index
    %12 = vector.load %arg5[%c0_9, %c0_10] : memref<1x32xf32, #tpu.memory_space<vmem>>, vector<1x32xf32>
    %13 = vector.broadcast %12 : vector<1x32xf32> to vector<8x32xf32>
    %14 = arith.addf %11, %13 : vector<8x32xf32>
    %15 = arith.addf %0, %14 : vector<8x32xf32>
    %cst_11 = arith.constant dense<0.000000e+00> : vector<8xf32>
    %16 = vector.multi_reduction <add>, %15, %cst_11 [1] : vector<8x32xf32> to vector<8xf32>
    %17 = vector.shape_cast %16 : vector<8xf32> to vector<8x1xf32>
    %cst_12 = arith.constant 3.200000e+01 : f32
    %18 = vector.broadcast %cst_12 : f32 to vector<8x1xf32>
    %19 = arith.divf %17, %18 : vector<8x1xf32>
    %20 = vector.broadcast %19 : vector<8x1xf32> to vector<8x32xf32>
    %21 = arith.subf %15, %20 : vector<8x32xf32>
    %22 = arith.mulf %21, %21 : vector<8x32xf32>
    %cst_13 = arith.constant dense<0.000000e+00> : vector<8xf32>
    %23 = vector.multi_reduction <add>, %22, %cst_13 [1] : vector<8x32xf32> to vector<8xf32>
    %24 = vector.shape_cast %23 : vector<8xf32> to vector<8x1xf32>
    %cst_14 = arith.constant 3.200000e+01 : f32
    %25 = vector.broadcast %cst_14 : f32 to vector<8x1xf32>
    %26 = arith.divf %24, %25 : vector<8x1xf32>
    %cst_15 = arith.constant 9.99999974E-6 : f32
    %27 = vector.broadcast %cst_15 : f32 to vector<8x1xf32>
    %28 = arith.addf %26, %27 : vector<8x1xf32>
    %29 = math.rsqrt %28 : vector<8x1xf32>
    %30 = vector.broadcast %29 : vector<8x1xf32> to vector<8x32xf32>
    %31 = arith.mulf %21, %30 : vector<8x32xf32>
    %c0_16 = arith.constant 0 : index
    %c0_17 = arith.constant 0 : index
    %32 = vector.load %arg6[%c0_16, %c0_17] : memref<1x32xf32, #tpu.memory_space<vmem>>, vector<1x32xf32>
    %33 = vector.broadcast %32 : vector<1x32xf32> to vector<8x32xf32>
    %34 = arith.mulf %31, %33 : vector<8x32xf32>
    %c0_18 = arith.constant 0 : index
    %c0_19 = arith.constant 0 : index
    %35 = vector.load %arg7[%c0_18, %c0_19] : memref<1x32xf32, #tpu.memory_space<vmem>>, vector<1x32xf32>
    %36 = vector.broadcast %35 : vector<1x32xf32> to vector<8x32xf32>
    %37 = arith.addf %34, %36 : vector<8x32xf32>
    %c0_20 = arith.constant 0 : index
    %c0_21 = arith.constant 0 : index
    %38 = vector.load %arg8[%c0_20, %c0_21] : memref<8x32xf32, #tpu.memory_space<vmem>>, vector<8x32xf32>
    tpu.vector_store %arg8[%c0_20, %c0_21], %37 {strides = array<i32>} : memref<8x32xf32, #tpu.memory_space<vmem>>, vector<8x32xf32>,
    return
  }
  func.func @transform_0(%arg0: i32) -> (i32, i32) {
    %c0_i32 = arith.constant 0 : i32
    %c0_i32_0 = arith.constant 0 : i32
    return %arg0, %c0_i32 : i32, i32
  }
  func.func @transform_1(%arg0: i32) -> (i32, i32) {
    %c0_i32 = arith.constant 0 : i32
    %c0_i32_0 = arith.constant 0 : i32
    %c0_i32_1 = arith.constant 0 : i32
    return %c0_i32, %c0_i32_0 : i32, i32
  }
  func.func @transform_2(%arg0: i32) -> (i32, i32) {
    %c0_i32 = arith.constant 0 : i32
    %c0_i32_0 = arith.constant 0 : i32
    %c0_i32_1 = arith.constant 0 : i32
    return %c0_i32, %c0_i32_0 : i32, i32
  }
  func.func @transform_3(%arg0: i32) -> (i32, i32) {
    %c0_i32 = arith.constant 0 : i32
    %c0_i32_0 = arith.constant 0 : i32
    %c0_i32_1 = arith.constant 0 : i32
    return %c0_i32, %c0_i32_0 : i32, i32
  }
  func.func @transform_4(%arg0: i32) -> (i32, i32) {
    %c0_i32 = arith.constant 0 : i32
    %c0_i32_0 = arith.constant 0 : i32
    %c0_i32_1 = arith.constant 0 : i32
    return %c0_i32, %c0_i32_0 : i32, i32
  }
  func.func @transform_5(%arg0: i32) -> (i32, i32) {
    %c0_i32 = arith.constant 0 : i32
    %c0_i32_0 = arith.constant 0 : i32
    %c0_i32_1 = arith.constant 0 : i32
    return %c0_i32, %c0_i32_0 : i32, i32
  }
  func.func @transform_6(%arg0: i32) -> (i32, i32) {
    %c0_i32 = arith.constant 0 : i32
    %c0_i32_0 = arith.constant 0 : i32
    %c0_i32_1 = arith.constant 0 : i32
    return %c0_i32, %c0_i32_0 : i32, i32
  }
  func.func @transform_7(%arg0: i32) -> (i32, i32) {
    %c0_i32 = arith.constant 0 : i32
    %c0_i32_0 = arith.constant 0 : i32
    return %arg0, %c0_i32 : i32, i32
  }
}

module attributes {stable_mosaic.version = 11 : i64} {
  func.func @_proj_stats_kernel(%arg0: i32, %arg1: i32, %arg2: memref<8x32xf32, #tpu.memory_space<vmem>>, %arg3: memref<32x128xbf16, #tpu.memory_space<vmem>>, %arg4: memref<1x128xf32, #tpu.memory_space<vmem>>, %arg5: memref<8x128xf32, #tpu.memory_space<vmem>>, %arg6: memref<8x1xf32, #tpu.memory_space<vmem>>, %arg7: memref<8x1xf32, #tpu.memory_space<vmem>>) attributes {dimension_semantics = [#tpu.dimension_semantics<parallel>, #tpu.dimension_semantics<arbitrary>], iteration_bounds = array<i64: 2, 1>, scalar_prefetch = 0 : i64, scratch_operands = 0 : i64, tpu.core_type = #tpu.core_type<tc>, window_params = [{transform_indices = @transform_0, window_bounds = array<i64: 8, 32>}, {transform_indices = @transform_1, window_bounds = array<i64: 32, 128>}, {transform_indices = @transform_2, window_bounds = array<i64: 1, 128>}, {transform_indices = @transform_3, window_bounds = array<i64: 8, 128>}, {transform_indices = @transform_4, window_bounds = array<i64: 8, 1>}, {transform_indices = @transform_5, window_bounds = array<i64: 8, 1>}]} {
    %c0 = arith.constant 0 : index
    %c0_0 = arith.constant 0 : index
    %0 = vector.load %arg2[%c0, %c0_0] : memref<8x32xf32, #tpu.memory_space<vmem>>, vector<8x32xf32>
    %1 = arith.truncf %0 : vector<8x32xf32> to vector<8x32xbf16>
    %c0_1 = arith.constant 0 : index
    %c0_2 = arith.constant 0 : index
    %2 = vector.load %arg3[%c0_1, %c0_2] : memref<32x128xbf16, #tpu.memory_space<vmem>>, vector<32x128xbf16>
    %cst = arith.constant dense<0.000000e+00> : vector<8x128xf32>
    %3 = tpu.matmul %1, %2, %cst {dimension_numbers = #tpu.dot_dimension_numbers<[1], [0], [0], [1], [0, 0, 1, 1], [], []>} : vector<8x32xbf16>, vector<32x128xbf16>, vector<8x128xf32> -> vector<8x128xf32>
    %c0_3 = arith.constant 0 : index
    %c0_4 = arith.constant 0 : index
    %4 = vector.load %arg4[%c0_3, %c0_4] : memref<1x128xf32, #tpu.memory_space<vmem>>, vector<1x128xf32>
    %5 = vector.broadcast %4 : vector<1x128xf32> to vector<8x128xf32>
    %6 = arith.addf %3, %5 : vector<8x128xf32>
    %c0_5 = arith.constant 0 : index
    %c0_6 = arith.constant 0 : index
    %7 = vector.load %arg5[%c0_5, %c0_6] : memref<8x128xf32, #tpu.memory_space<vmem>>, vector<8x128xf32>
    tpu.vector_store %arg5[%c0_5, %c0_6], %6 {strides = array<i32>} : memref<8x128xf32, #tpu.memory_space<vmem>>, vector<8x128xf32>,
    %cst_7 = arith.constant dense<0xFF800000> : vector<8xf32>
    %8 = vector.multi_reduction <maximumf>, %6, %cst_7 [1] : vector<8x128xf32> to vector<8xf32>
    %9 = vector.shape_cast %8 : vector<8xf32> to vector<8x1xf32>
    %c0_i32 = arith.constant 0 : i32
    %10 = arith.cmpi eq, %arg1, %c0_i32 : i32
    %11 = arith.extui %10 : i1 to i32
    %c0_i32_8 = arith.constant 0 : i32
    %12 = arith.cmpi ne, %11, %c0_i32_8 : i32
    scf.if %12 {
      %c0_11 = arith.constant 0 : index
      %c0_12 = arith.constant 0 : index
      %16 = vector.load %arg6[%c0_11, %c0_12] : memref<8x1xf32, #tpu.memory_space<vmem>>, vector<8x1xf32>
      tpu.vector_store %arg6[%c0_11, %c0_12], %9 {strides = array<i32>} : memref<8x1xf32, #tpu.memory_space<vmem>>, vector<8x1xf32>,
      %17 = vector.broadcast %9 : vector<8x1xf32> to vector<8x128xf32>
      %18 = arith.subf %6, %17 : vector<8x128xf32>
      %19 = math.exp %18 : vector<8x128xf32>
      %cst_13 = arith.constant dense<0.000000e+00> : vector<8xf32>
      %20 = vector.multi_reduction <add>, %19, %cst_13 [1] : vector<8x128xf32> to vector<8xf32>
      %21 = vector.shape_cast %20 : vector<8xf32> to vector<8x1xf32>
      %c0_14 = arith.constant 0 : index
      %c0_15 = arith.constant 0 : index
      %22 = vector.load %arg7[%c0_14, %c0_15] : memref<8x1xf32, #tpu.memory_space<vmem>>, vector<8x1xf32>
      tpu.vector_store %arg7[%c0_14, %c0_15], %21 {strides = array<i32>} : memref<8x1xf32, #tpu.memory_space<vmem>>, vector<8x1xf32>,
    } else {
    }
    %c0_i32_9 = arith.constant 0 : i32
    %13 = arith.cmpi sgt, %arg1, %c0_i32_9 : i32
    %14 = arith.extui %13 : i1 to i32
    %c0_i32_10 = arith.constant 0 : i32
    %15 = arith.cmpi ne, %14, %c0_i32_10 : i32
    scf.if %15 {
      %c0_11 = arith.constant 0 : index
      %c0_12 = arith.constant 0 : index
      %16 = vector.load %arg6[%c0_11, %c0_12] : memref<8x1xf32, #tpu.memory_space<vmem>>, vector<8x1xf32>
      %17 = arith.maximumf %16, %9 : vector<8x1xf32>
      %c0_13 = arith.constant 0 : index
      %c0_14 = arith.constant 0 : index
      %18 = vector.load %arg7[%c0_13, %c0_14] : memref<8x1xf32, #tpu.memory_space<vmem>>, vector<8x1xf32>
      %19 = arith.subf %16, %17 : vector<8x1xf32>
      %20 = math.exp %19 : vector<8x1xf32>
      %21 = arith.mulf %18, %20 : vector<8x1xf32>
      %22 = vector.broadcast %17 : vector<8x1xf32> to vector<8x128xf32>
      %23 = arith.subf %6, %22 : vector<8x128xf32>
      %24 = math.exp %23 : vector<8x128xf32>
      %cst_15 = arith.constant dense<0.000000e+00> : vector<8xf32>
      %25 = vector.multi_reduction <add>, %24, %cst_15 [1] : vector<8x128xf32> to vector<8xf32>
      %26 = vector.shape_cast %25 : vector<8xf32> to vector<8x1xf32>
      %27 = arith.addf %21, %26 : vector<8x1xf32>
      %c0_16 = arith.constant 0 : index
      %c0_17 = arith.constant 0 : index
      %28 = vector.load %arg7[%c0_16, %c0_17] : memref<8x1xf32, #tpu.memory_space<vmem>>, vector<8x1xf32>
      tpu.vector_store %arg7[%c0_16, %c0_17], %27 {strides = array<i32>} : memref<8x1xf32, #tpu.memory_space<vmem>>, vector<8x1xf32>,
      %c0_18 = arith.constant 0 : index
      %c0_19 = arith.constant 0 : index
      %29 = vector.load %arg6[%c0_18, %c0_19] : memref<8x1xf32, #tpu.memory_space<vmem>>, vector<8x1xf32>
      tpu.vector_store %arg6[%c0_18, %c0_19], %17 {strides = array<i32>} : memref<8x1xf32, #tpu.memory_space<vmem>>, vector<8x1xf32>,
    } else {
    }
    return
  }
  func.func @transform_0(%arg0: i32, %arg1: i32) -> (i32, i32) {
    %c0_i32 = arith.constant 0 : i32
    %c0_i32_0 = arith.constant 0 : i32
    return %arg0, %c0_i32 : i32, i32
  }
  func.func @transform_1(%arg0: i32, %arg1: i32) -> (i32, i32) {
    %c0_i32 = arith.constant 0 : i32
    %c0_i32_0 = arith.constant 0 : i32
    return %c0_i32, %arg1 : i32, i32
  }
  func.func @transform_2(%arg0: i32, %arg1: i32) -> (i32, i32) {
    %c0_i32 = arith.constant 0 : i32
    %c0_i32_0 = arith.constant 0 : i32
    return %c0_i32, %arg1 : i32, i32
  }
  func.func @transform_3(%arg0: i32, %arg1: i32) -> (i32, i32) {
    %c0_i32 = arith.constant 0 : i32
    return %arg0, %arg1 : i32, i32
  }
  func.func @transform_4(%arg0: i32, %arg1: i32) -> (i32, i32) {
    %c0_i32 = arith.constant 0 : i32
    %c0_i32_0 = arith.constant 0 : i32
    return %arg0, %c0_i32 : i32, i32
  }
  func.func @transform_5(%arg0: i32, %arg1: i32) -> (i32, i32) {
    %c0_i32 = arith.constant 0 : i32
    %c0_i32_0 = arith.constant 0 : i32
    return %arg0, %c0_i32 : i32, i32
  }
}

module attributes {stable_mosaic.version = 11 : i64} {
  func.func @_softmax_norm_kernel(%arg0: i32, %arg1: i32, %arg2: memref<8x128xf32, #tpu.memory_space<vmem>>, %arg3: memref<8x1xf32, #tpu.memory_space<vmem>>, %arg4: memref<8x1xf32, #tpu.memory_space<vmem>>, %arg5: memref<8x128xf32, #tpu.memory_space<vmem>>) attributes {dimension_semantics = [#tpu.dimension_semantics<parallel>, #tpu.dimension_semantics<parallel>], iteration_bounds = array<i64: 2, 1>, scalar_prefetch = 0 : i64, scratch_operands = 0 : i64, tpu.core_type = #tpu.core_type<tc>, window_params = [{transform_indices = @transform_0, window_bounds = array<i64: 8, 128>}, {transform_indices = @transform_1, window_bounds = array<i64: 8, 1>}, {transform_indices = @transform_2, window_bounds = array<i64: 8, 1>}, {transform_indices = @transform_3, window_bounds = array<i64: 8, 128>}]} {
    %c0 = arith.constant 0 : index
    %c0_0 = arith.constant 0 : index
    %0 = vector.load %arg2[%c0, %c0_0] : memref<8x128xf32, #tpu.memory_space<vmem>>, vector<8x128xf32>
    %c0_1 = arith.constant 0 : index
    %c0_2 = arith.constant 0 : index
    %1 = vector.load %arg3[%c0_1, %c0_2] : memref<8x1xf32, #tpu.memory_space<vmem>>, vector<8x1xf32>
    %2 = vector.broadcast %1 : vector<8x1xf32> to vector<8x128xf32>
    %3 = arith.subf %0, %2 : vector<8x128xf32>
    %4 = math.exp %3 : vector<8x128xf32>
    %c0_3 = arith.constant 0 : index
    %c0_4 = arith.constant 0 : index
    %5 = vector.load %arg4[%c0_3, %c0_4] : memref<8x1xf32, #tpu.memory_space<vmem>>, vector<8x1xf32>
    %6 = tpu.reciprocal %5 {approx = true} : vector<8x1xf32> -> vector<8x1xf32>
    %7 = vector.broadcast %6 : vector<8x1xf32> to vector<8x128xf32>
    %8 = arith.mulf %4, %7 : vector<8x128xf32>
    %c0_5 = arith.constant 0 : index
    %c0_6 = arith.constant 0 : index
    %9 = vector.load %arg5[%c0_5, %c0_6] : memref<8x128xf32, #tpu.memory_space<vmem>>, vector<8x128xf32>
    tpu.vector_store %arg5[%c0_5, %c0_6], %8 {strides = array<i32>} : memref<8x128xf32, #tpu.memory_space<vmem>>, vector<8x128xf32>,
    return
  }
  func.func @transform_0(%arg0: i32, %arg1: i32) -> (i32, i32) {
    %c0_i32 = arith.constant 0 : i32
    return %arg0, %arg1 : i32, i32
  }
  func.func @transform_1(%arg0: i32, %arg1: i32) -> (i32, i32) {
    %c0_i32 = arith.constant 0 : i32
    %c0_i32_0 = arith.constant 0 : i32
    return %arg0, %c0_i32 : i32, i32
  }
  func.func @transform_2(%arg0: i32, %arg1: i32) -> (i32, i32) {
    %c0_i32 = arith.constant 0 : i32
    %c0_i32_0 = arith.constant 0 : i32
    return %arg0, %c0_i32 : i32, i32
  }
  func.func @transform_3(%arg0: i32, %arg1: i32) -> (i32, i32) {
    %c0_i32 = arith.constant 0 : i32
    return %arg0, %arg1 : i32, i32
  }
}

</mosaic_0001>

<llo_original>
// kernel: _lambda_.18
$region0: #{_lambda_.18}
  #allocation0 [shape = 'u32[]', space=smem, size = 0x4, offset = 0x4, fixed_abs, tag = 'smem constant byte address 0x4 - core index']
  #allocation1 [shape = 'u32[144,128]{1,0:T(1,128)}', space=vmem, size = 0x12000, scoped, tag = 'internal scratch']
  %s0 = inlined_call_operand.vmem [shape: f32[16,32], index: 0, kind: input, shape index: {}]
  %s1 = inlined_call_operand.vmem [shape: f32[1,32], index: 1, kind: input, shape index: {}]
  %s2 = inlined_call_operand.vmem [shape: f32[1,32], index: 2, kind: input, shape index: {}]
  %s3 = inlined_call_operand.vmem [shape: f32[16,32], index: 3, kind: output, shape index: {}]
  %s4 = sld [smem:[#allocation0]]
  $region45: #{_lambda_.18} parent=0
    _
  %s6 = ssub.s32 1, %s4
  %s7 = scalar_select 0, %s6, %s4
  loop: start=0, step=1, limit=4
  $region2: #{_lambda_.18} parent=0 // loop_pre_header
    _
  $region3: #{_lambda_.18} parent=0 // loop_header
    %s9 = sphi 0, %s13
    %p10 = scmp.ge.s32.totalorder %s9, 4
    %s19 = sphi 0, %s21
    %s22 = sphi 0, %s19
    %s23 = sphi 0, %s22
    %s39 = sphi 0, %s23
    %s43 = sphi 0, %s43
    %s45 = sphi 0, %s43
    %s46 = sphi 0, %s45
    %s60 = sphi 0, %s46
    %s64 = sphi 0, %s64
    %s66 = sphi 0, %s64
    %s67 = sphi 0, %s66
    %s81 = sphi 0, %s67
    %s87 = sphi 0, %s89
    %s90 = sphi 0, %s87
    %s91 = sphi 0, %s90
    %s107 = sphi 0, %s91
  $region4: #{_lambda_.18} parent=0 // loop_header_branch
    %12 = sbr.rel (%p10) target = $region8
  $region5: #{_lambda_.18} parent=0 // loop_body
    %s14 = ssub.s32 %s9, 1
    %s15 = ssub.s32 %s9, 2
    %s16 = sadd.s32 %s9, 1
    %s17 = ssub.s32 %s9, %s16
    %p18 = scmp.eq.s32.totalorder %s17, 0
    %s20 = sadd.s32 %s19, 1
    %s21 = scalar_select %p18, %s19, %s20
    %p24 = pneg %p18
    %p25 = scmp.eq.s32.totalorder %s9, 1
    %p26 = por %p24, %p25
    %p27 = scmp.ne.s32.totalorder %s19, %s22
    %p28 = scmp.eq.s32.totalorder %s9, 0
    %p29 = por %p27, %p28
    %p30 = scmp.ne.s32.totalorder %s19, %s22
    %p31 = scmp.eq.s32.totalorder %s14, 1
    %p32 = por %p30, %p31
    %p33 = scmp.ne.s32.totalorder %s22, %s23
    %p34 = scmp.eq.s32.totalorder %s14, 0
    %p35 = por %p33, %p34
    %p36 = scmp.ne.s32.totalorder %s22, %s23
    %p37 = scmp.eq.s32.totalorder %s15, 1
    %p38 = por %p36, %p37
    %p40 = scmp.ne.s32.totalorder %s23, %s39
    %p41 = scmp.eq.s32.totalorder %s15, 0
    %p42 = por %p40, %p41
    %s44 = sadd.s32 %s43, 1
    %p47 = scmp.eq.s32.totalorder %s9, 1
    %p48 = scmp.ne.s32.totalorder %s43, %s45
    %p49 = scmp.eq.s32.totalorder %s9, 0
    %p50 = por %p48, %p49
    %p51 = scmp.ne.s32.totalorder %s43, %s45
    %p52 = scmp.eq.s32.totalorder %s14, 1
    %p53 = por %p51, %p52
    %p54 = scmp.ne.s32.totalorder %s45, %s46
    %p55 = scmp.eq.s32.totalorder %s14, 0
    %p56 = por %p54, %p55
    %p57 = scmp.ne.s32.totalorder %s45, %s46
    %p58 = scmp.eq.s32.totalorder %s15, 1
    %p59 = por %p57, %p58
    %p61 = scmp.ne.s32.totalorder %s46, %s60
    %p62 = scmp.eq.s32.totalorder %s15, 0
    %p63 = por %p61, %p62
    %s65 = sadd.s32 %s64, 1
    %p68 = scmp.eq.s32.totalorder %s9, 1
    %p69 = scmp.ne.s32.totalorder %s64, %s66
    %p70 = scmp.eq.s32.totalorder %s9, 0
    %p71 = por %p69, %p70
    %p72 = scmp.ne.s32.totalorder %s64, %s66
    %p73 = scmp.eq.s32.totalorder %s14, 1
    %p74 = por %p72, %p73
    %p75 = scmp.ne.s32.totalorder %s66, %s67
    %p76 = scmp.eq.s32.totalorder %s14, 0
    %p77 = por %p75, %p76
    %p78 = scmp.ne.s32.totalorder %s66, %s67
    %p79 = scmp.eq.s32.totalorder %s15, 1
    %p80 = por %p78, %p79
    %p82 = scmp.ne.s32.totalorder %s67, %s81
    %p83 = scmp.eq.s32.totalorder %s15, 0
    %p84 = por %p82, %p83
    %s85 = ssub.s32 %s9, %s16
    %p86 = scmp.eq.s32.totalorder %s85, 0
    %s88 = sadd.s32 %s87, 1
    %s89 = scalar_select %p86, %s87, %s88
    %p92 = pneg %p86
    %p93 = scmp.eq.s32.totalorder %s9, 1
    %p94 = por %p92, %p93
    %p95 = scmp.ne.s32.totalorder %s87, %s90
    %p96 = scmp.eq.s32.totalorder %s9, 0
    %p97 = por %p95, %p96
    %p98 = scmp.ne.s32.totalorder %s87, %s90
    %p99 = scmp.eq.s32.totalorder %s14, 1
    %p100 = por %p98, %p99
    %p101 = scmp.ne.s32.totalorder %s90, %s91
    %p102 = scmp.eq.s32.totalorder %s14, 0
    %p103 = por %p101, %p102
    %p104 = scmp.ne.s32.totalorder %s90, %s91
    %p105 = scmp.eq.s32.totalorder %s15, 1
    %p106 = por %p104, %p105
    %p108 = scmp.ne.s32.totalorder %s91, %s107
    %p109 = scmp.eq.s32.totalorder %s15, 0
    %p110 = por %p108, %p109
    %p111 = scmp.le.s32.totalorder 1, %s9
    %p112 = scmp.lt.s32.totalorder %s9, 3
    %p113 = pnand %p111, %p112
    %p114 = pneg %p113
    // Predicated region
    $region9: #{_lambda_.18} parent=5 // pred_check
      _
    $region10: #{_lambda_.18} parent=5 // pred_check_branch
      %116 = sbr.rel (%p113) target = $region12
    $region11: #{_lambda_.18} parent=5 // pred_region
      %s117 = ssub.s32 %s9, 1
      // Predicated region
      $region13: #{_lambda_.18} parent=11 // pred_check
        %p118 = pneg %p56
      $region14: #{_lambda_.18} parent=11 // pred_check_branch
        %120 = sbr.rel (%p118) target = $region16
      $region15: #{_lambda_.18} parent=11 // pred_region
        _
      $region16: #{_lambda_.18} parent=11 // pred_fallthru
        _
      // Predicated region
      $region17: #{_lambda_.18} parent=11 // pred_check
        %p121 = pneg %p77
      $region18: #{_lambda_.18} parent=11 // pred_check_branch
        %123 = sbr.rel (%p121) target = $region20
      $region19: #{_lambda_.18} parent=11 // pred_region
        _
      $region20: #{_lambda_.18} parent=11 // pred_fallthru
        _
    $region12: #{_lambda_.18} parent=5 // pred_fallthru
      _
    %p124 = scmp.lt.s32.totalorder %s9, 2
    // Predicated region
    $region21: #{_lambda_.18} parent=5 // pred_check
      %p125 = pneg %p124
    $region22: #{_lambda_.18} parent=5 // pred_check_branch
      %127 = sbr.rel (%p125) target = $region24
    $region23: #{_lambda_.18} parent=5 // pred_region
      // Predicated region
      $region25: #{_lambda_.18} parent=23 // pred_check
        %p128 = pneg %p29
      $region26: #{_lambda_.18} parent=23 // pred_check_branch
        %130 = sbr.rel (%p128) target = $region28
      $region27: #{_lambda_.18} parent=23 // pred_region
        %p131 = scmp.lt.s32.totalorder %s9, 1
        %s132 = scalar_select %p131, %s9, 1
        %s133 = smul.addr %s132, 8
        %s134 = scalar_lea.vmem %s0, %s133
      $region28: #{_lambda_.18} parent=23 // pred_fallthru
        _
    $region24: #{_lambda_.18} parent=5 // pred_fallthru
      _
    %p135 = scmp.le.s32.totalorder 1, %s9
    %p136 = scmp.lt.s32.totalorder %s9, 3
    %p137 = pnand %p135, %p136
    %p138 = pneg %p137
    // Predicated region
    $region29: #{_lambda_.18} parent=5 // pred_check
      _
    $region30: #{_lambda_.18} parent=5 // pred_check_branch
      %140 = sbr.rel (%p137) target = $region32
    $region31: #{_lambda_.18} parent=5 // pred_region
      %s141 = ssub.s32 %s9, 1
      %p142 = scmp.lt.s32.totalorder %s14, 1
      %s143 = scalar_select %p142, %s14, 1
      %s144 = smul.addr %s143, 8
      %s145 = scalar_lea.vmem %s0, %s144
      %p146 = pneg %p35
      %p147 = pneg %p32
      %p148 = pneg %p56
      %p149 = pneg %p53
      %p150 = pneg %p77
      %p151 = pneg %p74
      %p152 = pneg %p103
      %p153 = pneg %p100
      %p154 = scmp.lt.s32.totalorder %s14, 1
      %s155 = scalar_select %p154, %s14, 1
      %s156 = smul.addr %s155, 8
      %s157 = scalar_lea.vmem %s3, %s156
      %p158 = scmp.lt.s32.totalorder %s14, 1
      %s159 = scalar_select %p158, %s14, 1
      %s160 = smul.addr %s159, 8
      %s161 = scalar_lea.vmem %s0, %s160
      %p162 = scmp.lt.s32.totalorder %s14, 1
      %s163 = scalar_select %p162, %s14, 1
      %s164 = smul.addr %s163, 8
      %s165 = scalar_lea.vmem %s3, %s164
      %v166 = vld [vmem:[%s161] sm:$0xff]
      %vm167 = vcmask 261120
      %v168 = vsel %vm167, %v166, 0.0
      %169 = vadd.xlane.f32.xlu0 %v168
      %v170 = vpop.xlane.xlu0 %169
      %v171 = vrcp.pop 32.0
      %v172 = vmul.f32 %v170, %v171
      %v173 = vsub.f32 %v166, %v172
      %v174 = vmul.f32 %v173, %v173
      %v175 = vsel %vm167, %v174, 0.0
      %176 = vadd.xlane.f32.xlu0 %v175
      %v177 = vpop.xlane.xlu0 %176
      %v178 = vmul.f32 %v177, %v171
      %v179 = vadd.f32 %v178, 1e-05
      %v180 = vrsqrt.pop %v179
      %v181 = vmul.f32 %v173, %v180
      %v182 = vld [vmem:[%s1] sm:$0x1]
      %v184 = vlaneseq
      %v185 = vshrl.u32 %v184, 7
      %v186 = vsub.s32 0, %v185
      %v187 = vrot.slane %v182, %v186
      %v189 = vmul.f32 %v181, %v187
      %v190 = vld [vmem:[%s2] sm:$0x1]
      %v192 = vlaneseq
      %v193 = vshrl.u32 %v192, 7
      %v194 = vsub.s32 0, %v193
      %v195 = vrot.slane %v190, %v194
      %v197 = vadd.f32 %v189, %v195
      %198 = vst.msk [vmem:[%s165] sm:$0xff] %vm167, %v197
      %p199 = scmp.lt.s32.totalorder %s14, 1
      %s200 = scalar_select %p199, %s14, 1
      %s201 = smul.addr %s200, 8
      %s202 = scalar_lea.vmem %s3, %s201
      // Predicated region
      $region33: #{_lambda_.18} parent=31 // pred_check
        %p203 = pneg %p100
      $region34: #{_lambda_.18} parent=31 // pred_check_branch
        %205 = sbr.rel (%p203) target = $region36
      $region35: #{_lambda_.18} parent=31 // pred_region
        _
      $region36: #{_lambda_.18} parent=31 // pred_fallthru
        _
    $region32: #{_lambda_.18} parent=5 // pred_fallthru
      _
    %p206 = scmp.le.s32.totalorder 2, %s9
    // Predicated region
    $region37: #{_lambda_.18} parent=5 // pred_check
      %p207 = pneg %p206
    $region38: #{_lambda_.18} parent=5 // pred_check_branch
      %209 = sbr.rel (%p207) target = $region40
    $region39: #{_lambda_.18} parent=5 // pred_region
      %s210 = ssub.s32 %s9, 2
      // Predicated region
      $region41: #{_lambda_.18} parent=39 // pred_check
        %p211 = pneg %p106
      $region42: #{_lambda_.18} parent=39 // pred_check_branch
        %213 = sbr.rel (%p211) target = $region44
      $region43: #{_lambda_.18} parent=39 // pred_region
        %p214 = scmp.lt.s32.totalorder %s15, 1
        %s215 = scalar_select %p214, %s15, 1
        %s216 = smul.addr %s215, 8
        %s217 = scalar_lea.vmem %s3, %s216
      $region44: #{_lambda_.18} parent=39 // pred_fallthru
        _
    $region40: #{_lambda_.18} parent=5 // pred_fallthru
      _
  $region6: #{_lambda_.18} parent=0 // loop_footer
    %s13 = sadd.s32 1, %s9
  $region7: #{_lambda_.18} parent=0 // loop_footer_branch
    %8 = sbr.rel target = $region3
  $region8: #{_lambda_.18} parent=0 // loop_exit
    _

// kernel: _lambda_.15
$region0: #{_lambda_.15}
  #allocation0 [shape = 'u32[]', space=smem, size = 0x4, offset = 0x4, fixed_abs, tag = 'smem constant byte address 0x4 - core index']
  #allocation1 [shape = 'u32[144,128]{1,0:T(1,128)}', space=vmem, size = 0x12000, scoped, tag = 'internal scratch']
  %s0 = inlined_call_operand.vmem [shape: f32[16,32], index: 0, kind: input, shape index: {}]
  %s1 = inlined_call_operand.vmem [shape: bf16[32,64], index: 1, kind: input, shape index: {}]
  %s2 = inlined_call_operand.vmem [shape: f32[1,64], index: 2, kind: input, shape index: {}]
  %s3 = inlined_call_operand.vmem [shape: bf16[64,32], index: 3, kind: input, shape index: {}]
  %s4 = inlined_call_operand.vmem [shape: f32[1,32], index: 4, kind: input, shape index: {}]
  %s5 = inlined_call_operand.vmem [shape: f32[1,32], index: 5, kind: input, shape index: {}]
  %s6 = inlined_call_operand.vmem [shape: f32[1,32], index: 6, kind: input, shape index: {}]
  %s7 = inlined_call_operand.vmem [shape: f32[16,32], index: 7, kind: output, shape index: {}]
  %s8 = sld [smem:[#allocation0]]
  $region61: #{_lambda_.15} parent=0
    _
  %s10 = ssub.s32 1, %s8
  %s11 = scalar_select 0, %s10, %s8
  loop: start=0, step=1, limit=4
  $region2: #{_lambda_.15} parent=0 // loop_pre_header
    _
  $region3: #{_lambda_.15} parent=0 // loop_header
    %s13 = sphi 0, %s17
    %p14 = scmp.ge.s32.totalorder %s13, 4
    %s23 = sphi 0, %s25
    %s26 = sphi 0, %s23
    %s27 = sphi 0, %s26
    %s43 = sphi 0, %s27
    %s47 = sphi 0, %s47
    %s49 = sphi 0, %s47
    %s50 = sphi 0, %s49
    %s64 = sphi 0, %s50
    %s68 = sphi 0, %s68
    %s70 = sphi 0, %s68
    %s71 = sphi 0, %s70
    %s85 = sphi 0, %s71
    %s89 = sphi 0, %s89
    %s91 = sphi 0, %s89
    %s92 = sphi 0, %s91
    %s106 = sphi 0, %s92
    %s110 = sphi 0, %s110
    %s112 = sphi 0, %s110
    %s113 = sphi 0, %s112
    %s127 = sphi 0, %s113
    %s131 = sphi 0, %s131
    %s133 = sphi 0, %s131
    %s134 = sphi 0, %s133
    %s148 = sphi 0, %s134
    %s152 = sphi 0, %s152
    %s154 = sphi 0, %s152
    %s155 = sphi 0, %s154
    %s169 = sphi 0, %s155
    %s175 = sphi 0, %s177
    %s178 = sphi 0, %s175
    %s179 = sphi 0, %s178
    %s195 = sphi 0, %s179
  $region4: #{_lambda_.15} parent=0 // loop_header_branch
    %16 = sbr.rel (%p14) target = $region8
  $region5: #{_lambda_.15} parent=0 // loop_body
    %s18 = ssub.s32 %s13, 1
    %s19 = ssub.s32 %s13, 2
    %s20 = sadd.s32 %s13, 1
    %s21 = ssub.s32 %s13, %s20
    %p22 = scmp.eq.s32.totalorder %s21, 0
    %s24 = sadd.s32 %s23, 1
    %s25 = scalar_select %p22, %s23, %s24
    %p28 = pneg %p22
    %p29 = scmp.eq.s32.totalorder %s13, 1
    %p30 = por %p28, %p29
    %p31 = scmp.ne.s32.totalorder %s23, %s26
    %p32 = scmp.eq.s32.totalorder %s13, 0
    %p33 = por %p31, %p32
    %p34 = scmp.ne.s32.totalorder %s23, %s26
    %p35 = scmp.eq.s32.totalorder %s18, 1
    %p36 = por %p34, %p35
    %p37 = scmp.ne.s32.totalorder %s26, %s27
    %p38 = scmp.eq.s32.totalorder %s18, 0
    %p39 = por %p37, %p38
    %p40 = scmp.ne.s32.totalorder %s26, %s27
    %p41 = scmp.eq.s32.totalorder %s19, 1
    %p42 = por %p40, %p41
    %p44 = scmp.ne.s32.totalorder %s27, %s43
    %p45 = scmp.eq.s32.totalorder %s19, 0
    %p46 = por %p44, %p45
    %s48 = sadd.s32 %s47, 1
    %p51 = scmp.eq.s32.totalorder %s13, 1
    %p52 = scmp.ne.s32.totalorder %s47, %s49
    %p53 = scmp.eq.s32.totalorder %s13, 0
    %p54 = por %p52, %p53
    %p55 = scmp.ne.s32.totalorder %s47, %s49
    %p56 = scmp.eq.s32.totalorder %s18, 1
    %p57 = por %p55, %p56
    %p58 = scmp.ne.s32.totalorder %s49, %s50
    %p59 = scmp.eq.s32.totalorder %s18, 0
    %p60 = por %p58, %p59
    %p61 = scmp.ne.s32.totalorder %s49, %s50
    %p62 = scmp.eq.s32.totalorder %s19, 1
    %p63 = por %p61, %p62
    %p65 = scmp.ne.s32.totalorder %s50, %s64
    %p66 = scmp.eq.s32.totalorder %s19, 0
    %p67 = por %p65, %p66
    %s69 = sadd.s32 %s68, 1
    %p72 = scmp.eq.s32.totalorder %s13, 1
    %p73 = scmp.ne.s32.totalorder %s68, %s70
    %p74 = scmp.eq.s32.totalorder %s13, 0
    %p75 = por %p73, %p74
    %p76 = scmp.ne.s32.totalorder %s68, %s70
    %p77 = scmp.eq.s32.totalorder %s18, 1
    %p78 = por %p76, %p77
    %p79 = scmp.ne.s32.totalorder %s70, %s71
    %p80 = scmp.eq.s32.totalorder %s18, 0
    %p81 = por %p79, %p80
    %p82 = scmp.ne.s32.totalorder %s70, %s71
    %p83 = scmp.eq.s32.totalorder %s19, 1
    %p84 = por %p82, %p83
    %p86 = scmp.ne.s32.totalorder %s71, %s85
    %p87 = scmp.eq.s32.totalorder %s19, 0
    %p88 = por %p86, %p87
    %s90 = sadd.s32 %s89, 1
    %p93 = scmp.eq.s32.totalorder %s13, 1
    %p94 = scmp.ne.s32.totalorder %s89, %s91
    %p95 = scmp.eq.s32.totalorder %s13, 0
    %p96 = por %p94, %p95
    %p97 = scmp.ne.s32.totalorder %s89, %s91
    %p98 = scmp.eq.s32.totalorder %s18, 1
    %p99 = por %p97, %p98
    %p100 = scmp.ne.s32.totalorder %s91, %s92
    %p101 = scmp.eq.s32.totalorder %s18, 0
    %p102 = por %p100, %p101
    %p103 = scmp.ne.s32.totalorder %s91, %s92
    %p104 = scmp.eq.s32.totalorder %s19, 1
    %p105 = por %p103, %p104
    %p107 = scmp.ne.s32.totalorder %s92, %s106
    %p108 = scmp.eq.s32.totalorder %s19, 0
    %p109 = por %p107, %p108
    %s111 = sadd.s32 %s110, 1
    %p114 = scmp.eq.s32.totalorder %s13, 1
    %p115 = scmp.ne.s32.totalorder %s110, %s112
    %p116 = scmp.eq.s32.totalorder %s13, 0
    %p117 = por %p115, %p116
    %p118 = scmp.ne.s32.totalorder %s110, %s112
    %p119 = scmp.eq.s32.totalorder %s18, 1
    %p120 = por %p118, %p119
    %p121 = scmp.ne.s32.totalorder %s112, %s113
    %p122 = scmp.eq.s32.totalorder %s18, 0
    %p123 = por %p121, %p122
    %p124 = scmp.ne.s32.totalorder %s112, %s113
    %p125 = scmp.eq.s32.totalorder %s19, 1
    %p126 = por %p124, %p125
    %p128 = scmp.ne.s32.totalorder %s113, %s127
    %p129 = scmp.eq.s32.totalorder %s19, 0
    %p130 = por %p128, %p129
    %s132 = sadd.s32 %s131, 1
    %p135 = scmp.eq.s32.totalorder %s13, 1
    %p136 = scmp.ne.s32.totalorder %s131, %s133
    %p137 = scmp.eq.s32.totalorder %s13, 0
    %p138 = por %p136, %p137
    %p139 = scmp.ne.s32.totalorder %s131, %s133
    %p140 = scmp.eq.s32.totalorder %s18, 1
    %p141 = por %p139, %p140
    %p142 = scmp.ne.s32.totalorder %s133, %s134
    %p143 = scmp.eq.s32.totalorder %s18, 0
    %p144 = por %p142, %p143
    %p145 = scmp.ne.s32.totalorder %s133, %s134
    %p146 = scmp.eq.s32.totalorder %s19, 1
    %p147 = por %p145, %p146
    %p149 = scmp.ne.s32.totalorder %s134, %s148
    %p150 = scmp.eq.s32.totalorder %s19, 0
    %p151 = por %p149, %p150
    %s153 = sadd.s32 %s152, 1
    %p156 = scmp.eq.s32.totalorder %s13, 1
    %p157 = scmp.ne.s32.totalorder %s152, %s154
    %p158 = scmp.eq.s32.totalorder %s13, 0
    %p159 = por %p157, %p158
    %p160 = scmp.ne.s32.totalorder %s152, %s154
    %p161 = scmp.eq.s32.totalorder %s18, 1
    %p162 = por %p160, %p161
    %p163 = scmp.ne.s32.totalorder %s154, %s155
    %p164 = scmp.eq.s32.totalorder %s18, 0
    %p165 = por %p163, %p164
    %p166 = scmp.ne.s32.totalorder %s154, %s155
    %p167 = scmp.eq.s32.totalorder %s19, 1
    %p168 = por %p166, %p167
    %p170 = scmp.ne.s32.totalorder %s155, %s169
    %p171 = scmp.eq.s32.totalorder %s19, 0
    %p172 = por %p170, %p171
    %s173 = ssub.s32 %s13, %s20
    %p174 = scmp.eq.s32.totalorder %s173, 0
    %s176 = sadd.s32 %s175, 1
    %s177 = scalar_select %p174, %s175, %s176
    %p180 = pneg %p174
    %p181 = scmp.eq.s32.totalorder %s13, 1
    %p182 = por %p180, %p181
    %p183 = scmp.ne.s32.totalorder %s175, %s178
    %p184 = scmp.eq.s32.totalorder %s13, 0
    %p185 = por %p183, %p184
    %p186 = scmp.ne.s32.totalorder %s175, %s178
    %p187 = scmp.eq.s32.totalorder %s18, 1
    %p188 = por %p186, %p187
    %p189 = scmp.ne.s32.totalorder %s178, %s179
    %p190 = scmp.eq.s32.totalorder %s18, 0
    %p191 = por %p189, %p190
    %p192 = scmp.ne.s32.totalorder %s178, %s179
    %p193 = scmp.eq.s32.totalorder %s19, 1
    %p194 = por %p192, %p193
    %p196 = scmp.ne.s32.totalorder %s179, %s195
    %p197 = scmp.eq.s32.totalorder %s19, 0
    %p198 = por %p196, %p197
    %p199 = scmp.le.s32.totalorder 1, %s13
    %p200 = scmp.lt.s32.totalorder %s13, 3
    %p201 = pnand %p199, %p200
    %p202 = pneg %p201
    // Predicated region
    $region9: #{_lambda_.15} parent=5 // pred_check
      _
    $region10: #{_lambda_.15} parent=5 // pred_check_branch
      %204 = sbr.rel (%p201) target = $region12
    $region11: #{_lambda_.15} parent=5 // pred_region
      %s205 = ssub.s32 %s13, 1
      // Predicated region
      $region13: #{_lambda_.15} parent=11 // pred_check
        %p206 = pneg %p60
      $region14: #{_lambda_.15} parent=11 // pred_check_branch
        %208 = sbr.rel (%p206) target = $region16
      $region15: #{_lambda_.15} parent=11 // pred_region
        _
      $region16: #{_lambda_.15} parent=11 // pred_fallthru
        _
      // Predicated region
      $region17: #{_lambda_.15} parent=11 // pred_check
        %p209 = pneg %p81
      $region18: #{_lambda_.15} parent=11 // pred_check_branch
        %211 = sbr.rel (%p209) target = $region20
      $region19: #{_lambda_.15} parent=11 // pred_region
        _
      $region20: #{_lambda_.15} parent=11 // pred_fallthru
        _
      // Predicated region
      $region21: #{_lambda_.15} parent=11 // pred_check
        %p212 = pneg %p102
      $region22: #{_lambda_.15} parent=11 // pred_check_branch
        %214 = sbr.rel (%p212) target = $region24
      $region23: #{_lambda_.15} parent=11 // pred_region
        _
      $region24: #{_lambda_.15} parent=11 // pred_fallthru
        _
      // Predicated region
      $region25: #{_lambda_.15} parent=11 // pred_check
        %p215 = pneg %p123
      $region26: #{_lambda_.15} parent=11 // pred_check_branch
        %217 = sbr.rel (%p215) target = $region28
      $region27: #{_lambda_.15} parent=11 // pred_region
        _
      $region28: #{_lambda_.15} parent=11 // pred_fallthru
        _
      // Predicated region
      $region29: #{_lambda_.15} parent=11 // pred_check
        %p218 = pneg %p144
      $region30: #{_lambda_.15} parent=11 // pred_check_branch
        %220 = sbr.rel (%p218) target = $region32
      $region31: #{_lambda_.15} parent=11 // pred_region
        _
      $region32: #{_lambda_.15} parent=11 // pred_fallthru
        _
      // Predicated region
      $region33: #{_lambda_.15} parent=11 // pred_check
        %p221 = pneg %p165
      $region34: #{_lambda_.15} parent=11 // pred_check_branch
        %223 = sbr.rel (%p221) target = $region36
      $region35: #{_lambda_.15} parent=11 // pred_region
        _
      $region36: #{_lambda_.15} parent=11 // pred_fallthru
        _
    $region12: #{_lambda_.15} parent=5 // pred_fallthru
      _
    %p224 = scmp.lt.s32.totalorder %s13, 2
    // Predicated region
    $region37: #{_lambda_.15} parent=5 // pred_check
      %p225 = pneg %p224
    $region38: #{_lambda_.15} parent=5 // pred_check_branch
      %227 = sbr.rel (%p225) target = $region40
    $region39: #{_lambda_.15} parent=5 // pred_region
      // Predicated region
      $region41: #{_lambda_.15} parent=39 // pred_check
        %p228 = pneg %p33
      $region42: #{_lambda_.15} parent=39 // pred_check_branch
        %230 = sbr.rel (%p228) target = $region44
      $region43: #{_lambda_.15} parent=39 // pred_region
        %p231 = scmp.lt.s32.totalorder %s13, 1
        %s232 = scalar_select %p231, %s13, 1
        %s233 = smul.addr %s232, 8
        %s234 = scalar_lea.vmem %s0, %s233
      $region44: #{_lambda_.15} parent=39 // pred_fallthru
        _
    $region40: #{_lambda_.15} parent=5 // pred_fallthru
      _
    %p235 = scmp.le.s32.totalorder 1, %s13
    %p236 = scmp.lt.s32.totalorder %s13, 3
    %p237 = pnand %p235, %p236
    %p238 = pneg %p237
    // Predicated region
    $region45: #{_lambda_.15} parent=5 // pred_check
      _
    $region46: #{_lambda_.15} parent=5 // pred_check_branch
      %240 = sbr.rel (%p237) target = $region48
    $region47: #{_lambda_.15} parent=5 // pred_region
      %s241 = ssub.s32 %s13, 1
      %p242 = scmp.lt.s32.totalorder %s18, 1
      %s243 = scalar_select %p242, %s18, 1
      %s244 = smul.addr %s243, 8
      %s245 = scalar_lea.vmem %s0, %s244
      %p246 = pneg %p39
      %p247 = pneg %p36
      %p248 = pneg %p60
      %p249 = pneg %p57
      %p250 = pneg %p81
      %p251 = pneg %p78
      %p252 = pneg %p102
      %p253 = pneg %p99
      %p254 = pneg %p123
      %p255 = pneg %p120
      %p256 = pneg %p144
      %p257 = pneg %p141
      %p258 = pneg %p165
      %p259 = pneg %p162
      %p260 = pneg %p191
      %p261 = pneg %p188
      %p262 = scmp.lt.s32.totalorder %s18, 1
      %s263 = scalar_select %p262, %s18, 1
      %s264 = smul.addr %s263, 8
      %s265 = scalar_lea.vmem %s7, %s264
      %p266 = scmp.lt.s32.totalorder %s18, 1
      %s267 = scalar_select %p266, %s18, 1
      %s268 = smul.addr %s267, 8
      %s269 = scalar_lea.vmem %s0, %s268
      %p270 = scmp.lt.s32.totalorder %s18, 1
      %s271 = scalar_select %p270, %s18, 1
      %s272 = smul.addr %s271, 8
      %s273 = scalar_lea.vmem %s7, %s272
      %v275 = vld [vmem:[%s269] sm:$0xff]
      %v276 = vpack.c.bf16 %v275, %v275
      %v277 = vld [vmem:[%s1] sm:$0xf]
      %v278 = vld [vmem:[%s1 + $0x4] sm:$0xf]
      %v279 = vld [vmem:[%s1 + $0x8] sm:$0xf]
      %v280 = vld [vmem:[%s1 + $0xc] sm:$0xf]
      %v281 = vld [vmem:[%s2] sm:$0x1]
      %v283 = vlaneseq
      %v284 = vshrl.u32 %v283, 7
      %v285 = vsub.s32 0, %v284
      %v286 = vrot.slane %v281, %v285
      %v292 = vunpack.c.l.b16 %v277
      %v293 = vunpack.c.l.b16 %v278
      %v294 = vunpack.c.l.b16 %v279
      %v295 = vunpack.c.l.b16 %v280
      %v296 = vpack.c.b16 %v293, %v292
      %v297 = vpack.c.b16 %v295, %v294
      %vm300 = vcmask 261120
      %v302 = vsel %vm300, %v276, 0
      %304 = vmatprep.subr.bf16.mxu0 0
      %305 = vmatpush1.bf16.msra.mxu0 %v296
      %306 = vmatprep.subr.bf16.mxu0 0
      %307 = vmatpush1.bf16.msra.mxu0 %v297
      %308 = vmatprep.subr.bf16.mxu0 0
      %309 = vmatpush1.bf16.msra.mxu0 0
      %310 = vmatprep.subr.bf16.mxu0 0
      %311 = vmatpush1.bf16.msra.mxu0 0
      %312 = vmatprep.subr.bf16.mxu0 0
      %313 = vmatpush1.bf16.msra.mxu0 0
      %314 = vmatprep.subr.bf16.mxu0 0
      %315 = vmatpush1.bf16.msra.mxu0 0
      %316 = vmatprep.subr.bf16.mxu0 0
      %317 = vmatpush1.bf16.msra.mxu0 0
      %318 = vmatprep.subr.bf16.mxu0 0
      %319 = vmatpush1.bf16.msra.mxu0 0
      %320 = vmatprep.subr.bf16.mxu0 0
      %321 = vmatpush1.bf16.msra.mxu0 0
      %322 = vmatprep.subr.bf16.mxu0 0
      %323 = vmatpush1.bf16.msra.mxu0 0
      %324 = vmatprep.subr.bf16.mxu0 0
      %325 = vmatpush1.bf16.msra.mxu0 0
      %326 = vmatprep.subr.bf16.mxu0 0
      %327 = vmatpush1.bf16.msra.mxu0 0
      %328 = vmatprep.subr.bf16.mxu0 0
      %329 = vmatpush1.bf16.msra.mxu0 0
      %330 = vmatprep.subr.bf16.mxu0 0
      %331 = vmatpush1.bf16.msra.mxu0 0
      %332 = vmatprep.subr.bf16.mxu0 0
      %333 = vmatpush1.bf16.msra.mxu0 0
      %334 = vmatprep.subr.bf16.mxu0 0
      %335 = vmatpush1.bf16.msra.mxu0 0
      %336 = vmatprep.mubr.bf16.mxu0 0
      %337 = vmatmul.mubr.bf16.gmra.mrb[0].mxu0 %v302
      %v338 = vpop.f32.mrb[0].mxu0
      %v339 = vadd.f32 %v286, %v338
      %v340 = vpop.f32.mrb[0].mxu0
      %v341 = vpop.f32.mrb[0].mxu0
      %v342 = vpop.f32.mrb[0].mxu0
      %343 = vdwg.mxu0
      %v344 = vmax.f32 %v339, 0.0
      %v345 = vpack.c.bf16 %v344, %v344
      %v346 = vld [vmem:[%s3] sm:$0xf]
      %v347 = vld [vmem:[%s3 + $0x4] sm:$0xf]
      %v348 = vld [vmem:[%s3 + $0x8] sm:$0xf]
      %v349 = vld [vmem:[%s3 + $0xc] sm:$0xf]
      %v350 = vld [vmem:[%s3 + $0x10] sm:$0xf]
      %v351 = vld [vmem:[%s3 + $0x14] sm:$0xf]
      %v352 = vld [vmem:[%s3 + $0x18] sm:$0xf]
      %v353 = vld [vmem:[%s3 + $0x1c] sm:$0xf]
      %v354 = vld [vmem:[%s4] sm:$0x1]
      %v356 = vlaneseq
      %v357 = vshrl.u32 %v356, 7
      %v358 = vsub.s32 0, %v357
      %v359 = vrot.slane %v354, %v358
      %v369 = vunpack.c.l.b16 %v346
      %v370 = vunpack.c.l.b16 %v347
      %v371 = vunpack.c.l.b16 %v348
      %v372 = vunpack.c.l.b16 %v349
      %v373 = vunpack.c.l.b16 %v350
      %v374 = vunpack.c.l.b16 %v351
      %v375 = vunpack.c.l.b16 %v352
      %v376 = vunpack.c.l.b16 %v353
      %v377 = vpack.c.b16 %v370, %v369
      %v378 = vpack.c.b16 %v372, %v371
      %v379 = vpack.c.b16 %v374, %v373
      %v380 = vpack.c.b16 %v376, %v375
      %vm385 = vcmask 523264
      %v387 = vsel %vm385, %v345, 0
      %389 = vmatprep.subr.bf16.mxu0 0
      %390 = vmatpush1.bf16.msra.mxu0 %v377
      %391 = vmatprep.subr.bf16.mxu0 0
      %392 = vmatpush1.bf16.msra.mxu0 %v378
      %393 = vmatprep.subr.bf16.mxu0 0
      %394 = vmatpush1.bf16.msra.mxu0 %v379
      %395 = vmatprep.subr.bf16.mxu0 0
      %396 = vmatpush1.bf16.msra.mxu0 %v380
      %397 = vmatprep.subr.bf16.mxu0 0
      %398 = vmatpush1.bf16.msra.mxu0 0
      %399 = vmatprep.subr.bf16.mxu0 0
      %400 = vmatpush1.bf16.msra.mxu0 0
      %401 = vmatprep.subr.bf16.mxu0 0
      %402 = vmatpush1.bf16.msra.mxu0 0
      %403 = vmatprep.subr.bf16.mxu0 0
      %404 = vmatpush1.bf16.msra.mxu0 0
      %405 = vmatprep.subr.bf16.mxu0 0
      %406 = vmatpush1.bf16.msra.mxu0 0
      %407 = vmatprep.subr.bf16.mxu0 0
      %408 = vmatpush1.bf16.msra.mxu0 0
      %409 = vmatprep.subr.bf16.mxu0 0
      %410 = vmatpush1.bf16.msra.mxu0 0
      %411 = vmatprep.subr.bf16.mxu0 0
      %412 = vmatpush1.bf16.msra.mxu0 0
      %413 = vmatprep.subr.bf16.mxu0 0
      %414 = vmatpush1.bf16.msra.mxu0 0
      %415 = vmatprep.subr.bf16.mxu0 0
      %416 = vmatpush1.bf16.msra.mxu0 0
      %417 = vmatprep.subr.bf16.mxu0 0
      %418 = vmatpush1.bf16.msra.mxu0 0
      %419 = vmatprep.subr.bf16.mxu0 0
      %420 = vmatpush1.bf16.msra.mxu0 0
      %421 = vmatprep.mubr.bf16.mxu0 0
      %422 = vmatmul.mubr.bf16.gmra.mrb[0].mxu0 %v387
      %v423 = vpop.f32.mrb[0].mxu0
      %v424 = vadd.f32 %v359, %v423
      %v425 = vpop.f32.mrb[0].mxu0
      %v426 = vpop.f32.mrb[0].mxu0
      %v427 = vpop.f32.mrb[0].mxu0
      %428 = vdwg.mxu0
      %v429 = vadd.f32 %v275, %v424
      %v430 = vsel %vm300, %v429, 0.0
      %431 = vadd.xlane.f32.xlu0 %v430
      %v432 = vpop.xlane.xlu0 %431
      %v433 = vrcp.pop 32.0
      %v434 = vmul.f32 %v432, %v433
      %v435 = vsub.f32 %v429, %v434
      %v436 = vmul.f32 %v435, %v435
      %v437 = vsel %vm300, %v436, 0.0
      %438 = vadd.xlane.f32.xlu0 %v437
      %v439 = vpop.xlane.xlu0 %438
      %v440 = vmul.f32 %v439, %v433
      %v441 = vadd.f32 %v440, 1e-05
      %v442 = vrsqrt.pop %v441
      %v443 = vmul.f32 %v435, %v442
      %v444 = vld [vmem:[%s5] sm:$0x1]
      %v446 = vlaneseq
      %v447 = vshrl.u32 %v446, 7
      %v448 = vsub.s32 0, %v447
      %v449 = vrot.slane %v444, %v448
      %v451 = vmul.f32 %v443, %v449
      %v452 = vld [vmem:[%s6] sm:$0x1]
      %v454 = vlaneseq
      %v455 = vshrl.u32 %v454, 7
      %v456 = vsub.s32 0, %v455
      %v457 = vrot.slane %v452, %v456
      %v459 = vadd.f32 %v451, %v457
      %460 = vst.msk [vmem:[%s273] sm:$0xff] %vm300, %v459
      %p461 = scmp.lt.s32.totalorder %s18, 1
      %s462 = scalar_select %p461, %s18, 1
      %s463 = smul.addr %s462, 8
      %s464 = scalar_lea.vmem %s7, %s463
      // Predicated region
      $region49: #{_lambda_.15} parent=47 // pred_check
        %p465 = pneg %p188
      $region50: #{_lambda_.15} parent=47 // pred_check_branch
        %467 = sbr.rel (%p465) target = $region52
      $region51: #{_lambda_.15} parent=47 // pred_region
        _
      $region52: #{_lambda_.15} parent=47 // pred_fallthru
        _
    $region48: #{_lambda_.15} parent=5 // pred_fallthru
      _
    %p468 = scmp.le.s32.totalorder 2, %s13
    // Predicated region
    $region53: #{_lambda_.15} parent=5 // pred_check
      %p469 = pneg %p468
    $region54: #{_lambda_.15} parent=5 // pred_check_branch
      %471 = sbr.rel (%p469) target = $region56
    $region55: #{_lambda_.15} parent=5 // pred_region
      %s472 = ssub.s32 %s13, 2
      // Predicated region
      $region57: #{_lambda_.15} parent=55 // pred_check
        %p473 = pneg %p194
      $region58: #{_lambda_.15} parent=55 // pred_check_branch
        %475 = sbr.rel (%p473) target = $region60
      $region59: #{_lambda_.15} parent=55 // pred_region
        %p476 = scmp.lt.s32.totalorder %s19, 1
        %s477 = scalar_select %p476, %s19, 1
        %s478 = smul.addr %s477, 8
        %s479 = scalar_lea.vmem %s7, %s478
      $region60: #{_lambda_.15} parent=55 // pred_fallthru
        _
    $region56: #{_lambda_.15} parent=5 // pred_fallthru
      _
  $region6: #{_lambda_.15} parent=0 // loop_footer
    %s17 = sadd.s32 1, %s13
  $region7: #{_lambda_.15} parent=0 // loop_footer_branch
    %12 = sbr.rel target = $region3
  $region8: #{_lambda_.15} parent=0 // loop_exit
    _

// kernel: _lambda_.14
$region0: #{_lambda_.14}
  #allocation0 [shape = 'u32[]', space=smem, size = 0x4, offset = 0x4, fixed_abs, tag = 'smem constant byte address 0x4 - core index']
  #allocation1 [shape = 'u32[144,128]{1,0:T(1,128)}', space=vmem, size = 0x12000, scoped, tag = 'internal scratch']
  #allocation2 [shape = 'bf16[8,64]{1,0:T(8,128)(2,1)}', space=vmem, size = 0x800, scoped, tag = 'scratch operand']
  %s0 = inlined_call_operand.vmem [shape: f32[2,8,32], index: 0, kind: input, shape index: {}, may-alias: {0,1}]
  %s1 = inlined_call_operand.vmem [shape: f32[2,8,32], index: 1, kind: input, shape index: {}, may-alias: {0,1}]
  %s2 = inlined_call_operand.vmem [shape: f32[2,1,8], index: 2, kind: input, shape index: {}]
  %s3 = inlined_call_operand.vmem [shape: bf16[32,32], index: 3, kind: input, shape index: {}]
  %s4 = inlined_call_operand.vmem [shape: bf16[32,64], index: 4, kind: input, shape index: {}]
  %s5 = inlined_call_operand.vmem [shape: bf16[32,32], index: 5, kind: input, shape index: {}]
  %s6 = inlined_call_operand.vmem [shape: f32[1,32], index: 6, kind: input, shape index: {}]
  %s7 = inlined_call_operand.vmem [shape: f32[1,32], index: 7, kind: input, shape index: {}]
  %s8 = inlined_call_operand.vmem [shape: f32[2,8,32], index: 8, kind: output, shape index: {}]
  %s9 = sld [smem:[#allocation0]]
  $region69: #{_lambda_.14} parent=0
    _
  %s11 = ssub.s32 1, %s9
  %s12 = scalar_select 0, %s11, %s9
  loop: start=0, step=1, limit=4
  $region2: #{_lambda_.14} parent=0 // loop_pre_header
    _
  $region3: #{_lambda_.14} parent=0 // loop_header
    %s14 = sphi 0, %s18
    %p15 = scmp.ge.s32.totalorder %s14, 4
    %s21 = sphi 0, %s33
    %s22 = sphi 0, %s29
    %s23 = sphi 0, %s21
    %s24 = sphi 0, %s22
    %s25 = sphi 0, %s23
    %s26 = sphi 0, %s24
    %s38 = sphi 0, %s40
    %s41 = sphi 0, %s38
    %s42 = sphi 0, %s41
    %s58 = sphi 0, %s42
    %s64 = sphi 0, %s66
    %s67 = sphi 0, %s64
    %s68 = sphi 0, %s67
    %s84 = sphi 0, %s68
    %s90 = sphi 0, %s92
    %s93 = sphi 0, %s90
    %s94 = sphi 0, %s93
    %s110 = sphi 0, %s94
    %s114 = sphi 0, %s114
    %s116 = sphi 0, %s114
    %s117 = sphi 0, %s116
    %s131 = sphi 0, %s117
    %s135 = sphi 0, %s135
    %s137 = sphi 0, %s135
    %s138 = sphi 0, %s137
    %s152 = sphi 0, %s138
    %s156 = sphi 0, %s156
    %s158 = sphi 0, %s156
    %s159 = sphi 0, %s158
    %s173 = sphi 0, %s159
    %s177 = sphi 0, %s177
    %s179 = sphi 0, %s177
    %s180 = sphi 0, %s179
    %s194 = sphi 0, %s180
    %s198 = sphi 0, %s198
    %s200 = sphi 0, %s198
    %s201 = sphi 0, %s200
    %s215 = sphi 0, %s201
    %s223 = sphi 0, %s225
    %s226 = sphi 0, %s223
    %s227 = sphi 0, %s226
    %s243 = sphi 0, %s227
  $region4: #{_lambda_.14} parent=0 // loop_header_branch
    %17 = sbr.rel (%p15) target = $region8
  $region5: #{_lambda_.14} parent=0 // loop_body
    %s19 = ssub.s32 %s14, 1
    %s20 = ssub.s32 %s14, 2
    %s27 = sadd.s32 1, %s22
    %p28 = scmp.ge.s32.totalorder %s27, 1
    %s29 = scalar_select %p28, 0, %s27
    %s30 = sadd.s32 1, %s21
    %s31 = scalar_select %p28, %s30, %s21
    %p32 = scmp.ge.s32.totalorder %s31, 2
    %s33 = scalar_select %p32, 0, %s31
    %s34 = ssub.s32 %s21, %s33
    %s35 = ssub.s32 %s22, %s29
    %s36 = sor.u32 %s34, %s35
    %p37 = scmp.eq.s32.totalorder %s36, 0
    %s39 = sadd.s32 %s38, 1
    %s40 = scalar_select %p37, %s38, %s39
    %p43 = pneg %p37
    %p44 = scmp.eq.s32.totalorder %s14, 1
    %p45 = por %p43, %p44
    %p46 = scmp.ne.s32.totalorder %s38, %s41
    %p47 = scmp.eq.s32.totalorder %s14, 0
    %p48 = por %p46, %p47
    %p49 = scmp.ne.s32.totalorder %s38, %s41
    %p50 = scmp.eq.s32.totalorder %s19, 1
    %p51 = por %p49, %p50
    %p52 = scmp.ne.s32.totalorder %s41, %s42
    %p53 = scmp.eq.s32.totalorder %s19, 0
    %p54 = por %p52, %p53
    %p55 = scmp.ne.s32.totalorder %s41, %s42
    %p56 = scmp.eq.s32.totalorder %s20, 1
    %p57 = por %p55, %p56
    %p59 = scmp.ne.s32.totalorder %s42, %s58
    %p60 = scmp.eq.s32.totalorder %s20, 0
    %p61 = por %p59, %p60
    %s62 = ssub.s32 %s21, %s33
    %p63 = scmp.eq.s32.totalorder %s62, 0
    %s65 = sadd.s32 %s64, 1
    %s66 = scalar_select %p63, %s64, %s65
    %p69 = pneg %p63
    %p70 = scmp.eq.s32.totalorder %s14, 1
    %p71 = por %p69, %p70
    %p72 = scmp.ne.s32.totalorder %s64, %s67
    %p73 = scmp.eq.s32.totalorder %s14, 0
    %p74 = por %p72, %p73
    %p75 = scmp.ne.s32.totalorder %s64, %s67
    %p76 = scmp.eq.s32.totalorder %s19, 1
    %p77 = por %p75, %p76
    %p78 = scmp.ne.s32.totalorder %s67, %s68
    %p79 = scmp.eq.s32.totalorder %s19, 0
    %p80 = por %p78, %p79
    %p81 = scmp.ne.s32.totalorder %s67, %s68
    %p82 = scmp.eq.s32.totalorder %s20, 1
    %p83 = por %p81, %p82
    %p85 = scmp.ne.s32.totalorder %s68, %s84
    %p86 = scmp.eq.s32.totalorder %s20, 0
    %p87 = por %p85, %p86
    %s88 = ssub.s32 %s21, %s33
    %p89 = scmp.eq.s32.totalorder %s88, 0
    %s91 = sadd.s32 %s90, 1
    %s92 = scalar_select %p89, %s90, %s91
    %p95 = pneg %p89
    %p96 = scmp.eq.s32.totalorder %s14, 1
    %p97 = por %p95, %p96
    %p98 = scmp.ne.s32.totalorder %s90, %s93
    %p99 = scmp.eq.s32.totalorder %s14, 0
    %p100 = por %p98, %p99
    %p101 = scmp.ne.s32.totalorder %s90, %s93
    %p102 = scmp.eq.s32.totalorder %s19, 1
    %p103 = por %p101, %p102
    %p104 = scmp.ne.s32.totalorder %s93, %s94
    %p105 = scmp.eq.s32.totalorder %s19, 0
    %p106 = por %p104, %p105
    %p107 = scmp.ne.s32.totalorder %s93, %s94
    %p108 = scmp.eq.s32.totalorder %s20, 1
    %p109 = por %p107, %p108
    %p111 = scmp.ne.s32.totalorder %s94, %s110
    %p112 = scmp.eq.s32.totalorder %s20, 0
    %p113 = por %p111, %p112
    %s115 = sadd.s32 %s114, 1
    %p118 = scmp.eq.s32.totalorder %s14, 1
    %p119 = scmp.ne.s32.totalorder %s114, %s116
    %p120 = scmp.eq.s32.totalorder %s14, 0
    %p121 = por %p119, %p120
    %p122 = scmp.ne.s32.totalorder %s114, %s116
    %p123 = scmp.eq.s32.totalorder %s19, 1
    %p124 = por %p122, %p123
    %p125 = scmp.ne.s32.totalorder %s116, %s117
    %p126 = scmp.eq.s32.totalorder %s19, 0
    %p127 = por %p125, %p126
    %p128 = scmp.ne.s32.totalorder %s116, %s117
    %p129 = scmp.eq.s32.totalorder %s20, 1
    %p130 = por %p128, %p129
    %p132 = scmp.ne.s32.totalorder %s117, %s131
    %p133 = scmp.eq.s32.totalorder %s20, 0
    %p134 = por %p132, %p133
    %s136 = sadd.s32 %s135, 1
    %p139 = scmp.eq.s32.totalorder %s14, 1
    %p140 = scmp.ne.s32.totalorder %s135, %s137
    %p141 = scmp.eq.s32.totalorder %s14, 0
    %p142 = por %p140, %p141
    %p143 = scmp.ne.s32.totalorder %s135, %s137
    %p144 = scmp.eq.s32.totalorder %s19, 1
    %p145 = por %p143, %p144
    %p146 = scmp.ne.s32.totalorder %s137, %s138
    %p147 = scmp.eq.s32.totalorder %s19, 0
    %p148 = por %p146, %p147
    %p149 = scmp.ne.s32.totalorder %s137, %s138
    %p150 = scmp.eq.s32.totalorder %s20, 1
    %p151 = por %p149, %p150
    %p153 = scmp.ne.s32.totalorder %s138, %s152
    %p154 = scmp.eq.s32.totalorder %s20, 0
    %p155 = por %p153, %p154
    %s157 = sadd.s32 %s156, 1
    %p160 = scmp.eq.s32.totalorder %s14, 1
    %p161 = scmp.ne.s32.totalorder %s156, %s158
    %p162 = scmp.eq.s32.totalorder %s14, 0
    %p163 = por %p161, %p162
    %p164 = scmp.ne.s32.totalorder %s156, %s158
    %p165 = scmp.eq.s32.totalorder %s19, 1
    %p166 = por %p164, %p165
    %p167 = scmp.ne.s32.totalorder %s158, %s159
    %p168 = scmp.eq.s32.totalorder %s19, 0
    %p169 = por %p167, %p168
    %p170 = scmp.ne.s32.totalorder %s158, %s159
    %p171 = scmp.eq.s32.totalorder %s20, 1
    %p172 = por %p170, %p171
    %p174 = scmp.ne.s32.totalorder %s159, %s173
    %p175 = scmp.eq.s32.totalorder %s20, 0
    %p176 = por %p174, %p175
    %s178 = sadd.s32 %s177, 1
    %p181 = scmp.eq.s32.totalorder %s14, 1
    %p182 = scmp.ne.s32.totalorder %s177, %s179
    %p183 = scmp.eq.s32.totalorder %s14, 0
    %p184 = por %p182, %p183
    %p185 = scmp.ne.s32.totalorder %s177, %s179
    %p186 = scmp.eq.s32.totalorder %s19, 1
    %p187 = por %p185, %p186
    %p188 = scmp.ne.s32.totalorder %s179, %s180
    %p189 = scmp.eq.s32.totalorder %s19, 0
    %p190 = por %p188, %p189
    %p191 = scmp.ne.s32.totalorder %s179, %s180
    %p192 = scmp.eq.s32.totalorder %s20, 1
    %p193 = por %p191, %p192
    %p195 = scmp.ne.s32.totalorder %s180, %s194
    %p196 = scmp.eq.s32.totalorder %s20, 0
    %p197 = por %p195, %p196
    %s199 = sadd.s32 %s198, 1
    %p202 = scmp.eq.s32.totalorder %s14, 1
    %p203 = scmp.ne.s32.totalorder %s198, %s200
    %p204 = scmp.eq.s32.totalorder %s14, 0
    %p205 = por %p203, %p204
    %p206 = scmp.ne.s32.totalorder %s198, %s200
    %p207 = scmp.eq.s32.totalorder %s19, 1
    %p208 = por %p206, %p207
    %p209 = scmp.ne.s32.totalorder %s200, %s201
    %p210 = scmp.eq.s32.totalorder %s19, 0
    %p211 = por %p209, %p210
    %p212 = scmp.ne.s32.totalorder %s200, %s201
    %p213 = scmp.eq.s32.totalorder %s20, 1
    %p214 = por %p212, %p213
    %p216 = scmp.ne.s32.totalorder %s201, %s215
    %p217 = scmp.eq.s32.totalorder %s20, 0
    %p218 = por %p216, %p217
    %s219 = ssub.s32 %s21, %s33
    %s220 = ssub.s32 %s22, %s29
    %s221 = sor.u32 %s219, %s220
    %p222 = scmp.eq.s32.totalorder %s221, 0
    %s224 = sadd.s32 %s223, 1
    %s225 = scalar_select %p222, %s223, %s224
    %p228 = pneg %p222
    %p229 = scmp.eq.s32.totalorder %s14, 1
    %p230 = por %p228, %p229
    %p231 = scmp.ne.s32.totalorder %s223, %s226
    %p232 = scmp.eq.s32.totalorder %s14, 0
    %p233 = por %p231, %p232
    %p234 = scmp.ne.s32.totalorder %s223, %s226
    %p235 = scmp.eq.s32.totalorder %s19, 1
    %p236 = por %p234, %p235
    %p237 = scmp.ne.s32.totalorder %s226, %s227
    %p238 = scmp.eq.s32.totalorder %s19, 0
    %p239 = por %p237, %p238
    %p240 = scmp.ne.s32.totalorder %s226, %s227
    %p241 = scmp.eq.s32.totalorder %s20, 1
    %p242 = por %p240, %p241
    %p244 = scmp.ne.s32.totalorder %s227, %s243
    %p245 = scmp.eq.s32.totalorder %s20, 0
    %p246 = por %p244, %p245
    %p247 = scmp.le.s32.totalorder 1, %s14
    %p248 = scmp.lt.s32.totalorder %s14, 3
    %p249 = pnand %p247, %p248
    %p250 = pneg %p249
    // Predicated region
    $region9: #{_lambda_.14} parent=5 // pred_check
      _
    $region10: #{_lambda_.14} parent=5 // pred_check_branch
      %252 = sbr.rel (%p249) target = $region12
    $region11: #{_lambda_.14} parent=5 // pred_region
      %s253 = ssub.s32 %s14, 1
      // Predicated region
      $region13: #{_lambda_.14} parent=11 // pred_check
        %p254 = pneg %p127
      $region14: #{_lambda_.14} parent=11 // pred_check_branch
        %256 = sbr.rel (%p254) target = $region16
      $region15: #{_lambda_.14} parent=11 // pred_region
        _
      $region16: #{_lambda_.14} parent=11 // pred_fallthru
        _
      // Predicated region
      $region17: #{_lambda_.14} parent=11 // pred_check
        %p257 = pneg %p148
      $region18: #{_lambda_.14} parent=11 // pred_check_branch
        %259 = sbr.rel (%p257) target = $region20
      $region19: #{_lambda_.14} parent=11 // pred_region
        _
      $region20: #{_lambda_.14} parent=11 // pred_fallthru
        _
      // Predicated region
      $region21: #{_lambda_.14} parent=11 // pred_check
        %p260 = pneg %p169
      $region22: #{_lambda_.14} parent=11 // pred_check_branch
        %262 = sbr.rel (%p260) target = $region24
      $region23: #{_lambda_.14} parent=11 // pred_region
        _
      $region24: #{_lambda_.14} parent=11 // pred_fallthru
        _
      // Predicated region
      $region25: #{_lambda_.14} parent=11 // pred_check
        %p263 = pneg %p190
      $region26: #{_lambda_.14} parent=11 // pred_check_branch
        %265 = sbr.rel (%p263) target = $region28
      $region27: #{_lambda_.14} parent=11 // pred_region
        _
      $region28: #{_lambda_.14} parent=11 // pred_fallthru
        _
      // Predicated region
      $region29: #{_lambda_.14} parent=11 // pred_check
        %p266 = pneg %p211
      $region30: #{_lambda_.14} parent=11 // pred_check_branch
        %268 = sbr.rel (%p266) target = $region32
      $region31: #{_lambda_.14} parent=11 // pred_region
        _
      $region32: #{_lambda_.14} parent=11 // pred_fallthru
        _
    $region12: #{_lambda_.14} parent=5 // pred_fallthru
      _
    %p269 = scmp.lt.s32.totalorder %s14, 2
    // Predicated region
    $region33: #{_lambda_.14} parent=5 // pred_check
      %p270 = pneg %p269
    $region34: #{_lambda_.14} parent=5 // pred_check_branch
      %272 = sbr.rel (%p270) target = $region36
    $region35: #{_lambda_.14} parent=5 // pred_region
      // Predicated region
      $region37: #{_lambda_.14} parent=35 // pred_check
        %p273 = pneg %p48
      $region38: #{_lambda_.14} parent=35 // pred_check_branch
        %275 = sbr.rel (%p273) target = $region40
      $region39: #{_lambda_.14} parent=35 // pred_region
        %p276 = scmp.lt.s32.totalorder %s21, 1
        %s277 = scalar_select %p276, %s21, 1
        %p278 = scmp.lt.s32.totalorder %s22, 0
        %s279 = scalar_select %p278, %s22, 0
        %s280 = sadd.s32 %s279, %s277
        %s281 = smul.addr %s280, 8
        %s282 = scalar_lea.vmem %s0, %s281
      $region40: #{_lambda_.14} parent=35 // pred_fallthru
        _
      // Predicated region
      $region41: #{_lambda_.14} parent=35 // pred_check
        %p283 = pneg %p74
      $region42: #{_lambda_.14} parent=35 // pred_check_branch
        %285 = sbr.rel (%p283) target = $region44
      $region43: #{_lambda_.14} parent=35 // pred_region
        %p286 = scmp.lt.s32.totalorder %s21, 1
        %s287 = scalar_select %p286, %s21, 1
        %s288 = smul.addr %s287, 8
        %s289 = scalar_lea.vmem %s1, %s288
      $region44: #{_lambda_.14} parent=35 // pred_fallthru
        _
      // Predicated region
      $region45: #{_lambda_.14} parent=35 // pred_check
        %p290 = pneg %p100
      $region46: #{_lambda_.14} parent=35 // pred_check_branch
        %292 = sbr.rel (%p290) target = $region48
      $region47: #{_lambda_.14} parent=35 // pred_region
        %p293 = scmp.lt.s32.totalorder %s21, 1
        %s294 = scalar_select %p293, %s21, 1
        %s295 = scalar_lea.vmem %s2, %s294
      $region48: #{_lambda_.14} parent=35 // pred_fallthru
        _
    $region36: #{_lambda_.14} parent=5 // pred_fallthru
      _
    %p296 = scmp.le.s32.totalorder 1, %s14
    %p297 = scmp.lt.s32.totalorder %s14, 3
    %p298 = pnand %p296, %p297
    %p299 = pneg %p298
    // Predicated region
    $region49: #{_lambda_.14} parent=5 // pred_check
      _
    $region50: #{_lambda_.14} parent=5 // pred_check_branch
      %301 = sbr.rel (%p298) target = $region52
    $region51: #{_lambda_.14} parent=5 // pred_region
      %s302 = ssub.s32 %s14, 1
      %p303 = scmp.lt.s32.totalorder %s23, 1
      %s304 = scalar_select %p303, %s23, 1
      %p305 = scmp.lt.s32.totalorder %s24, 0
      %s306 = scalar_select %p305, %s24, 0
      %s307 = sadd.s32 %s306, %s304
      %s308 = smul.addr %s307, 8
      %s309 = scalar_lea.vmem %s0, %s308
      %p310 = pneg %p54
      %p311 = pneg %p51
      %p312 = scmp.lt.s32.totalorder %s23, 1
      %s313 = scalar_select %p312, %s23, 1
      %s314 = smul.addr %s313, 8
      %s315 = scalar_lea.vmem %s1, %s314
      %p316 = pneg %p80
      %p317 = pneg %p77
      %p318 = scmp.lt.s32.totalorder %s23, 1
      %s319 = scalar_select %p318, %s23, 1
      %s320 = scalar_lea.vmem %s2, %s319
      %p321 = pneg %p106
      %p322 = pneg %p103
      %p323 = pneg %p127
      %p324 = pneg %p124
      %p325 = pneg %p148
      %p326 = pneg %p145
      %p327 = pneg %p169
      %p328 = pneg %p166
      %p329 = pneg %p190
      %p330 = pneg %p187
      %p331 = pneg %p211
      %p332 = pneg %p208
      %p333 = pneg %p239
      %p334 = pneg %p236
      %p335 = scmp.lt.s32.totalorder %s23, 1
      %s336 = scalar_select %p335, %s23, 1
      %p337 = scmp.lt.s32.totalorder %s24, 0
      %s338 = scalar_select %p337, %s24, 0
      %s339 = sadd.s32 %s338, %s336
      %s340 = smul.addr %s339, 8
      %s341 = scalar_lea.vmem %s8, %s340
      %p342 = scmp.lt.s32.totalorder %s23, 1
      %s343 = scalar_select %p342, %s23, 1
      %p344 = scmp.lt.s32.totalorder %s24, 0
      %s345 = scalar_select %p344, %s24, 0
      %s346 = sadd.s32 %s345, %s343
      %s347 = smul.addr %s346, 8
      %s348 = scalar_lea.vmem %s0, %s347
      %p349 = scmp.lt.s32.totalorder %s23, 1
      %s350 = scalar_select %p349, %s23, 1
      %s351 = smul.addr %s350, 8
      %s352 = scalar_lea.vmem %s1, %s351
      %p353 = scmp.lt.s32.totalorder %s23, 1
      %s354 = scalar_select %p353, %s23, 1
      %s355 = scalar_lea.vmem %s2, %s354
      %p356 = scmp.lt.s32.totalorder %s23, 1
      %s357 = scalar_select %p356, %s23, 1
      %p358 = scmp.lt.s32.totalorder %s24, 0
      %s359 = scalar_select %p358, %s24, 0
      %s360 = sadd.s32 %s359, %s357
      %s361 = smul.addr %s360, 8
      %s362 = scalar_lea.vmem %s8, %s361
      %p364 = scmp.eq.s32.totalorder %s24, 0
      // Predicated region
      $region53: #{_lambda_.14} parent=51 // pred_check
        %p365 = pneg %p364
      $region54: #{_lambda_.14} parent=51 // pred_check_branch
        %367 = sbr.rel (%p365) target = $region56
      $region55: #{_lambda_.14} parent=51 // pred_region
        %v368 = vld [vmem:[%s352] sm:$0xff]
        %v369 = vpack.c.bf16 %v368, %v368
        %v370 = vld [vmem:[%s4] sm:$0xf]
        %v371 = vld [vmem:[%s4 + $0x4] sm:$0xf]
        %v372 = vld [vmem:[%s4 + $0x8] sm:$0xf]
        %v373 = vld [vmem:[%s4 + $0xc] sm:$0xf]
        %v378 = vunpack.c.l.b16 %v370
        %v379 = vunpack.c.l.b16 %v371
        %v380 = vunpack.c.l.b16 %v372
        %v381 = vunpack.c.l.b16 %v373
        %v382 = vpack.c.b16 %v379, %v378
        %v383 = vpack.c.b16 %v381, %v380
        %vm386 = vcmask 261120
        %v388 = vsel %vm386, %v369, 0
        %390 = vmatprep.subr.bf16.mxu0 0
        %391 = vmatpush1.bf16.msra.mxu0 %v382
        %392 = vmatprep.subr.bf16.mxu0 0
        %393 = vmatpush1.bf16.msra.mxu0 %v383
        %394 = vmatprep.subr.bf16.mxu0 0
        %395 = vmatpush1.bf16.msra.mxu0 0
        %396 = vmatprep.subr.bf16.mxu0 0
        %397 = vmatpush1.bf16.msra.mxu0 0
        %398 = vmatprep.subr.bf16.mxu0 0
        %399 = vmatpush1.bf16.msra.mxu0 0
        %400 = vmatprep.subr.bf16.mxu0 0
        %401 = vmatpush1.bf16.msra.mxu0 0
        %402 = vmatprep.subr.bf16.mxu0 0
        %403 = vmatpush1.bf16.msra.mxu0 0
        %404 = vmatprep.subr.bf16.mxu0 0
        %405 = vmatpush1.bf16.msra.mxu0 0
        %406 = vmatprep.subr.bf16.mxu0 0
        %407 = vmatpush1.bf16.msra.mxu0 0
        %408 = vmatprep.subr.bf16.mxu0 0
        %409 = vmatpush1.bf16.msra.mxu0 0
        %410 = vmatprep.subr.bf16.mxu0 0
        %411 = vmatpush1.bf16.msra.mxu0 0
        %412 = vmatprep.subr.bf16.mxu0 0
        %413 = vmatpush1.bf16.msra.mxu0 0
        %414 = vmatprep.subr.bf16.mxu0 0
        %415 = vmatpush1.bf16.msra.mxu0 0
        %416 = vmatprep.subr.bf16.mxu0 0
        %417 = vmatpush1.bf16.msra.mxu0 0
        %418 = vmatprep.subr.bf16.mxu0 0
        %419 = vmatpush1.bf16.msra.mxu0 0
        %420 = vmatprep.subr.bf16.mxu0 0
        %421 = vmatpush1.bf16.msra.mxu0 0
        %422 = vmatprep.mubr.bf16.mxu0 0
        %423 = vmatmul.mubr.bf16.gmra.mrb[0].mxu0 %v388
        %v424 = vpop.f32.mrb[0].mxu0
        %v425 = vadd.f32 0.0, %v424
        %v426 = vpop.f32.mrb[0].mxu0
        %v427 = vpop.f32.mrb[0].mxu0
        %v428 = vpop.f32.mrb[0].mxu0
        %429 = vdwg.mxu0
        %v430 = vpack.c.bf16 %v425, %v425
        %vm431 = vcmask 519168
        %432 = vst.msk [vmem:[#allocation2] sm:$0xf] %vm431, %v430
      $region56: #{_lambda_.14} parent=51 // pred_fallthru
        _
      %v433 = vld [vmem:[%s348] sm:$0xff]
      %v434 = vpack.c.bf16 %v433, %v433
      %v435 = vld [vmem:[%s3] sm:$0xf]
      %v436 = vld [vmem:[%s3 + $0x4] sm:$0xf]
      %v437 = vld [vmem:[%s3 + $0x8] sm:$0xf]
      %v438 = vld [vmem:[%s3 + $0xc] sm:$0xf]
      %v443 = vunpack.c.l.b16 %v435
      %v444 = vunpack.c.l.b16 %v436
      %v445 = vunpack.c.l.b16 %v437
      %v446 = vunpack.c.l.b16 %v438
      %v447 = vpack.c.b16 %v444, %v443
      %v448 = vpack.c.b16 %v446, %v445
      %vm451 = vcmask 261120
      %v453 = vsel %vm451, %v434, 0
      %455 = vmatprep.subr.bf16.mxu0 0
      %456 = vmatpush1.bf16.msra.mxu0 %v447
      %457 = vmatprep.subr.bf16.mxu0 0
      %458 = vmatpush1.bf16.msra.mxu0 %v448
      %459 = vmatprep.subr.bf16.mxu0 0
      %460 = vmatpush1.bf16.msra.mxu0 0
      %461 = vmatprep.subr.bf16.mxu0 0
      %462 = vmatpush1.bf16.msra.mxu0 0
      %463 = vmatprep.subr.bf16.mxu0 0
      %464 = vmatpush1.bf16.msra.mxu0 0
      %465 = vmatprep.subr.bf16.mxu0 0
      %466 = vmatpush1.bf16.msra.mxu0 0
      %467 = vmatprep.subr.bf16.mxu0 0
      %468 = vmatpush1.bf16.msra.mxu0 0
      %469 = vmatprep.subr.bf16.mxu0 0
      %470 = vmatpush1.bf16.msra.mxu0 0
      %471 = vmatprep.subr.bf16.mxu0 0
      %472 = vmatpush1.bf16.msra.mxu0 0
      %473 = vmatprep.subr.bf16.mxu0 0
      %474 = vmatpush1.bf16.msra.mxu0 0
      %475 = vmatprep.subr.bf16.mxu0 0
      %476 = vmatpush1.bf16.msra.mxu0 0
      %477 = vmatprep.subr.bf16.mxu0 0
      %478 = vmatpush1.bf16.msra.mxu0 0
      %479 = vmatprep.subr.bf16.mxu0 0
      %480 = vmatpush1.bf16.msra.mxu0 0
      %481 = vmatprep.subr.bf16.mxu0 0
      %482 = vmatpush1.bf16.msra.mxu0 0
      %483 = vmatprep.subr.bf16.mxu0 0
      %484 = vmatpush1.bf16.msra.mxu0 0
      %485 = vmatprep.subr.bf16.mxu0 0
      %486 = vmatpush1.bf16.msra.mxu0 0
      %487 = vmatprep.mubr.bf16.mxu0 0
      %488 = vmatmul.mubr.bf16.gmra.mrb[0].mxu0 %v453
      %v489 = vpop.f32.mrb[0].mxu0
      %v490 = vadd.f32 0.0, %v489
      %v491 = vpop.f32.mrb[0].mxu0
      %v492 = vpop.f32.mrb[0].mxu0
      %v493 = vpop.f32.mrb[0].mxu0
      %494 = vdwg.mxu0
      %v495 = vpack.c.bf16 %v490, %v490
      %v496 = vld [vmem:[#allocation2] sm:$0xf]
      %v497 = vld [vmem:[%s355] sm:$0x1]
      %v499 = vlaneseq
      %v500 = vshrl.u32 %v499, 7
      %v501 = vsub.s32 0, %v500
      %v502 = vrot.slane %v497, %v501
      %vm504 = vcmask 64512
      %v506 = vsel %vm504, %v495, 0
      %v509 = vsel %vm504, %v496, 0
      %511 = vmatprep.subr.bf16.mxu0 0
      %512 = vmatpush1.bf16.xpose.msra.mxu0 %v509
      %513 = vmatprep.subr.bf16.mxu0 0
      %514 = vmatpush1.bf16.xpose.msra.mxu0 0
      %515 = vmatprep.subr.bf16.mxu0 0
      %516 = vmatpush1.bf16.xpose.msra.mxu0 0
      %517 = vmatprep.subr.bf16.mxu0 0
      %518 = vmatpush1.bf16.xpose.msra.mxu0 0
      %519 = vmatprep.subr.bf16.mxu0 0
      %520 = vmatpush1.bf16.xpose.msra.mxu0 0
      %521 = vmatprep.subr.bf16.mxu0 0
      %522 = vmatpush1.bf16.xpose.msra.mxu0 0
      %523 = vmatprep.subr.bf16.mxu0 0
      %524 = vmatpush1.bf16.xpose.msra.mxu0 0
      %525 = vmatprep.subr.bf16.mxu0 0
      %526 = vmatpush1.bf16.xpose.msra.mxu0 0
      %527 = vmatprep.subr.bf16.mxu0 0
      %528 = vmatpush1.bf16.xpose.msra.mxu0 0
      %529 = vmatprep.subr.bf16.mxu0 0
      %530 = vmatpush1.bf16.xpose.msra.mxu0 0
      %531 = vmatprep.subr.bf16.mxu0 0
      %532 = vmatpush1.bf16.xpose.msra.mxu0 0
      %533 = vmatprep.subr.bf16.mxu0 0
      %534 = vmatpush1.bf16.xpose.msra.mxu0 0
      %535 = vmatprep.subr.bf16.mxu0 0
      %536 = vmatpush1.bf16.xpose.msra.mxu0 0
      %537 = vmatprep.subr.bf16.mxu0 0
      %538 = vmatpush1.bf16.xpose.msra.mxu0 0
      %539 = vmatprep.subr.bf16.mxu0 0
      %540 = vmatpush1.bf16.xpose.msra.mxu0 0
      %541 = vmatprep.subr.bf16.mxu0 0
      %542 = vmatpush1.bf16.xpose.msra.mxu0 0
      %543 = vmatprep.mubr.bf16.mxu0 0
      %544 = vmatmul.mubr.bf16.gmra.mrb[0].mxu0 %v506
      %v545 = vpop.f32.mrb[0].mxu0
      %v546 = vadd.f32 %v502, %v545
      %v547 = vpop.f32.mrb[0].mxu0
      %v548 = vpop.f32.mrb[0].mxu0
      %v549 = vpop.f32.mrb[0].mxu0
      %550 = vdwg.mxu0
      %v551 = vsel %vm504, %v546, -inf
      %552 = vmax.xlane.f32.xlu0 %v551
      %v553 = vpop.xlane.xlu0 %552
      %v554 = vsub.f32 %v546, %v553
      %v555 = vmul.f32 %v554, 1.442695
      %v556 = vpow.pop %v555
      %v557 = vsel %vm504, %v556, 0.0
      %558 = vadd.xlane.f32.xlu0 %v557
      %v559 = vpop.xlane.xlu0 %558
      %v560 = vrcp.pop %v559
      %v561 = vmul.f32 %v556, %v560
      %v562 = vpack.c.bf16 %v561, %v561
      %v564 = vunpack.c.l.b16 %v496
      %v565 = vpack.c.b16 %v564, %v564
      %566 = vrot.lane.b32.xlu0 %v565, 96
      %v567 = vpop.permute.xlu0 %566
      %v569 = vsel %vm504, %v562, 0
      %vm571 = vcmask 1043456
      %v573 = vsel %vm571, %v567, 0
      %575 = vmatprep.subr.bf16.mxu0 0
      %576 = vmatpush1.bf16.msra.mxu0 %v573
      %577 = vmatprep.subr.bf16.mxu0 0
      %578 = vmatpush1.bf16.msra.mxu0 0
      %579 = vmatprep.subr.bf16.mxu0 0
      %580 = vmatpush1.bf16.msra.mxu0 0
      %581 = vmatprep.subr.bf16.mxu0 0
      %582 = vmatpush1.bf16.msra.mxu0 0
      %583 = vmatprep.subr.bf16.mxu0 0
      %584 = vmatpush1.bf16.msra.mxu0 0
      %585 = vmatprep.subr.bf16.mxu0 0
      %586 = vmatpush1.bf16.msra.mxu0 0
      %587 = vmatprep.subr.bf16.mxu0 0
      %588 = vmatpush1.bf16.msra.mxu0 0
      %589 = vmatprep.subr.bf16.mxu0 0
      %590 = vmatpush1.bf16.msra.mxu0 0
      %591 = vmatprep.subr.bf16.mxu0 0
      %592 = vmatpush1.bf16.msra.mxu0 0
      %593 = vmatprep.subr.bf16.mxu0 0
      %594 = vmatpush1.bf16.msra.mxu0 0
      %595 = vmatprep.subr.bf16.mxu0 0
      %596 = vmatpush1.bf16.msra.mxu0 0
      %597 = vmatprep.subr.bf16.mxu0 0
      %598 = vmatpush1.bf16.msra.mxu0 0
      %599 = vmatprep.subr.bf16.mxu0 0
      %600 = vmatpush1.bf16.msra.mxu0 0
      %601 = vmatprep.subr.bf16.mxu0 0
      %602 = vmatpush1.bf16.msra.mxu0 0
      %603 = vmatprep.subr.bf16.mxu0 0
      %604 = vmatpush1.bf16.msra.mxu0 0
      %605 = vmatprep.subr.bf16.mxu0 0
      %606 = vmatpush1.bf16.msra.mxu0 0
      %607 = vmatprep.mubr.bf16.mxu0 0
      %608 = vmatmul.mubr.bf16.gmra.mrb[0].mxu0 %v569
      %v609 = vpop.f32.mrb[0].mxu0
      %v610 = vadd.f32 0.0, %v609
      %v611 = vpop.f32.mrb[0].mxu0
      %v612 = vpop.f32.mrb[0].mxu0
      %v613 = vpop.f32.mrb[0].mxu0
      %614 = vdwg.mxu0
      %616 = vrot.lane.b32.xlu0 %v495, 120
      %v617 = vpop.permute.xlu0 %616
      %618 = vrot.lane.b32.xlu0 %v565, 120
      %v619 = vpop.permute.xlu0 %618
      %v621 = vsel %vm504, %v617, 0
      %v624 = vsel %vm504, %v619, 0
      %626 = vmatprep.subr.bf16.mxu0 0
      %627 = vmatpush1.bf16.xpose.msra.mxu0 %v624
      %628 = vmatprep.subr.bf16.mxu0 0
      %629 = vmatpush1.bf16.xpose.msra.mxu0 0
      %630 = vmatprep.subr.bf16.mxu0 0
      %631 = vmatpush1.bf16.xpose.msra.mxu0 0
      %632 = vmatprep.subr.bf16.mxu0 0
      %633 = vmatpush1.bf16.xpose.msra.mxu0 0
      %634 = vmatprep.subr.bf16.mxu0 0
      %635 = vmatpush1.bf16.xpose.msra.mxu0 0
      %636 = vmatprep.subr.bf16.mxu0 0
      %637 = vmatpush1.bf16.xpose.msra.mxu0 0
      %638 = vmatprep.subr.bf16.mxu0 0
      %639 = vmatpush1.bf16.xpose.msra.mxu0 0
      %640 = vmatprep.subr.bf16.mxu0 0
      %641 = vmatpush1.bf16.xpose.msra.mxu0 0
      %642 = vmatprep.subr.bf16.mxu0 0
      %643 = vmatpush1.bf16.xpose.msra.mxu0 0
      %644 = vmatprep.subr.bf16.mxu0 0
      %645 = vmatpush1.bf16.xpose.msra.mxu0 0
      %646 = vmatprep.subr.bf16.mxu0 0
      %647 = vmatpush1.bf16.xpose.msra.mxu0 0
      %648 = vmatprep.subr.bf16.mxu0 0
      %649 = vmatpush1.bf16.xpose.msra.mxu0 0
      %650 = vmatprep.subr.bf16.mxu0 0
      %651 = vmatpush1.bf16.xpose.msra.mxu0 0
      %652 = vmatprep.subr.bf16.mxu0 0
      %653 = vmatpush1.bf16.xpose.msra.mxu0 0
      %654 = vmatprep.subr.bf16.mxu0 0
      %655 = vmatpush1.bf16.xpose.msra.mxu0 0
      %656 = vmatprep.subr.bf16.mxu0 0
      %657 = vmatpush1.bf16.xpose.msra.mxu0 0
      %658 = vmatprep.mubr.bf16.mxu0 0
      %659 = vmatmul.mubr.bf16.gmra.mrb[0].mxu0 %v621
      %v660 = vpop.f32.mrb[0].mxu0
      %v661 = vadd.f32 %v502, %v660
      %v662 = vpop.f32.mrb[0].mxu0
      %v663 = vpop.f32.mrb[0].mxu0
      %v664 = vpop.f32.mrb[0].mxu0
      %665 = vdwg.mxu0
      %v666 = vsel %vm504, %v661, -inf
      %667 = vmax.xlane.f32.xlu0 %v666
      %v668 = vpop.xlane.xlu0 %667
      %v669 = vsub.f32 %v661, %v668
      %v670 = vmul.f32 %v669, 1.442695
      %v671 = vpow.pop %v670
      %v672 = vsel %vm504, %v671, 0.0
      %673 = vadd.xlane.f32.xlu0 %v672
      %v674 = vpop.xlane.xlu0 %673
      %v675 = vrcp.pop %v674
      %v676 = vmul.f32 %v671, %v675
      %v677 = vpack.c.bf16 %v676, %v676
      %678 = vrot.lane.b32.xlu0 %v565, 88
      %v679 = vpop.permute.xlu0 %678
      %v681 = vsel %vm504, %v677, 0
      %v684 = vsel %vm571, %v679, 0
      %686 = vmatprep.subr.bf16.mxu0 0
      %687 = vmatpush1.bf16.msra.mxu0 %v684
      %688 = vmatprep.subr.bf16.mxu0 0
      %689 = vmatpush1.bf16.msra.mxu0 0
      %690 = vmatprep.subr.bf16.mxu0 0
      %691 = vmatpush1.bf16.msra.mxu0 0
      %692 = vmatprep.subr.bf16.mxu0 0
      %693 = vmatpush1.bf16.msra.mxu0 0
      %694 = vmatprep.subr.bf16.mxu0 0
      %695 = vmatpush1.bf16.msra.mxu0 0
      %696 = vmatprep.subr.bf16.mxu0 0
      %697 = vmatpush1.bf16.msra.mxu0 0
      %698 = vmatprep.subr.bf16.mxu0 0
      %699 = vmatpush1.bf16.msra.mxu0 0
      %700 = vmatprep.subr.bf16.mxu0 0
      %701 = vmatpush1.bf16.msra.mxu0 0
      %702 = vmatprep.subr.bf16.mxu0 0
      %703 = vmatpush1.bf16.msra.mxu0 0
      %704 = vmatprep.subr.bf16.mxu0 0
      %705 = vmatpush1.bf16.msra.mxu0 0
      %706 = vmatprep.subr.bf16.mxu0 0
      %707 = vmatpush1.bf16.msra.mxu0 0
      %708 = vmatprep.subr.bf16.mxu0 0
      %709 = vmatpush1.bf16.msra.mxu0 0
      %710 = vmatprep.subr.bf16.mxu0 0
      %711 = vmatpush1.bf16.msra.mxu0 0
      %712 = vmatprep.subr.bf16.mxu0 0
      %713 = vmatpush1.bf16.msra.mxu0 0
      %714 = vmatprep.subr.bf16.mxu0 0
      %715 = vmatpush1.bf16.msra.mxu0 0
      %716 = vmatprep.subr.bf16.mxu0 0
      %717 = vmatpush1.bf16.msra.mxu0 0
      %718 = vmatprep.mubr.bf16.mxu0 0
      %719 = vmatmul.mubr.bf16.gmra.mrb[0].mxu0 %v681
      %v720 = vpop.f32.mrb[0].mxu0
      %v721 = vadd.f32 0.0, %v720
      %v722 = vpop.f32.mrb[0].mxu0
      %v723 = vpop.f32.mrb[0].mxu0
      %v724 = vpop.f32.mrb[0].mxu0
      %725 = vdwg.mxu0
      %726 = vrot.lane.b32.xlu0 %v495, 112
      %v727 = vpop.permute.xlu0 %726
      %728 = vrot.lane.b32.xlu0 %v565, 112
      %v729 = vpop.permute.xlu0 %728
      %v731 = vsel %vm504, %v727, 0
      %v734 = vsel %vm504, %v729, 0
      %736 = vmatprep.subr.bf16.mxu0 0
      %737 = vmatpush1.bf16.xpose.msra.mxu0 %v734
      %738 = vmatprep.subr.bf16.mxu0 0
      %739 = vmatpush1.bf16.xpose.msra.mxu0 0
      %740 = vmatprep.subr.bf16.mxu0 0
      %741 = vmatpush1.bf16.xpose.msra.mxu0 0
      %742 = vmatprep.subr.bf16.mxu0 0
      %743 = vmatpush1.bf16.xpose.msra.mxu0 0
      %744 = vmatprep.subr.bf16.mxu0 0
      %745 = vmatpush1.bf16.xpose.msra.mxu0 0
      %746 = vmatprep.subr.bf16.mxu0 0
      %747 = vmatpush1.bf16.xpose.msra.mxu0 0
      %748 = vmatprep.subr.bf16.mxu0 0
      %749 = vmatpush1.bf16.xpose.msra.mxu0 0
      %750 = vmatprep.subr.bf16.mxu0 0
      %751 = vmatpush1.bf16.xpose.msra.mxu0 0
      %752 = vmatprep.subr.bf16.mxu0 0
      %753 = vmatpush1.bf16.xpose.msra.mxu0 0
      %754 = vmatprep.subr.bf16.mxu0 0
      %755 = vmatpush1.bf16.xpose.msra.mxu0 0
      %756 = vmatprep.subr.bf16.mxu0 0
      %757 = vmatpush1.bf16.xpose.msra.mxu0 0
      %758 = vmatprep.subr.bf16.mxu0 0
      %759 = vmatpush1.bf16.xpose.msra.mxu0 0
      %760 = vmatprep.subr.bf16.mxu0 0
      %761 = vmatpush1.bf16.xpose.msra.mxu0 0
      %762 = vmatprep.subr.bf16.mxu0 0
      %763 = vmatpush1.bf16.xpose.msra.mxu0 0
      %764 = vmatprep.subr.bf16.mxu0 0
      %765 = vmatpush1.bf16.xpose.msra.mxu0 0
      %766 = vmatprep.subr.bf16.mxu0 0
      %767 = vmatpush1.bf16.xpose.msra.mxu0 0
      %768 = vmatprep.mubr.bf16.mxu0 0
      %769 = vmatmul.mubr.bf16.gmra.mrb[0].mxu0 %v731
      %v770 = vpop.f32.mrb[0].mxu0
      %v771 = vadd.f32 %v502, %v770
      %v772 = vpop.f32.mrb[0].mxu0
      %v773 = vpop.f32.mrb[0].mxu0
      %v774 = vpop.f32.mrb[0].mxu0
      %775 = vdwg.mxu0
      %v776 = vsel %vm504, %v771, -inf
      %777 = vmax.xlane.f32.xlu0 %v776
      %v778 = vpop.xlane.xlu0 %777
      %v779 = vsub.f32 %v771, %v778
      %v780 = vmul.f32 %v779, 1.442695
      %v781 = vpow.pop %v780
      %v782 = vsel %vm504, %v781, 0.0
      %783 = vadd.xlane.f32.xlu0 %v782
      %v784 = vpop.xlane.xlu0 %783
      %v785 = vrcp.pop %v784
      %v786 = vmul.f32 %v781, %v785
      %v787 = vpack.c.bf16 %v786, %v786
      %788 = vrot.lane.b32.xlu0 %v565, 80
      %v789 = vpop.permute.xlu0 %788
      %v791 = vsel %vm504, %v787, 0
      %v794 = vsel %vm571, %v789, 0
      %796 = vmatprep.subr.bf16.mxu0 0
      %797 = vmatpush1.bf16.msra.mxu0 %v794
      %798 = vmatprep.subr.bf16.mxu0 0
      %799 = vmatpush1.bf16.msra.mxu0 0
      %800 = vmatprep.subr.bf16.mxu0 0
      %801 = vmatpush1.bf16.msra.mxu0 0
      %802 = vmatprep.subr.bf16.mxu0 0
      %803 = vmatpush1.bf16.msra.mxu0 0
      %804 = vmatprep.subr.bf16.mxu0 0
      %805 = vmatpush1.bf16.msra.mxu0 0
      %806 = vmatprep.subr.bf16.mxu0 0
      %807 = vmatpush1.bf16.msra.mxu0 0
      %808 = vmatprep.subr.bf16.mxu0 0
      %809 = vmatpush1.bf16.msra.mxu0 0
      %810 = vmatprep.subr.bf16.mxu0 0
      %811 = vmatpush1.bf16.msra.mxu0 0
      %812 = vmatprep.subr.bf16.mxu0 0
      %813 = vmatpush1.bf16.msra.mxu0 0
      %814 = vmatprep.subr.bf16.mxu0 0
      %815 = vmatpush1.bf16.msra.mxu0 0
      %816 = vmatprep.subr.bf16.mxu0 0
      %817 = vmatpush1.bf16.msra.mxu0 0
      %818 = vmatprep.subr.bf16.mxu0 0
      %819 = vmatpush1.bf16.msra.mxu0 0
      %820 = vmatprep.subr.bf16.mxu0 0
      %821 = vmatpush1.bf16.msra.mxu0 0
      %822 = vmatprep.subr.bf16.mxu0 0
      %823 = vmatpush1.bf16.msra.mxu0 0
      %824 = vmatprep.subr.bf16.mxu0 0
      %825 = vmatpush1.bf16.msra.mxu0 0
      %826 = vmatprep.subr.bf16.mxu0 0
      %827 = vmatpush1.bf16.msra.mxu0 0
      %828 = vmatprep.mubr.bf16.mxu0 0
      %829 = vmatmul.mubr.bf16.gmra.mrb[0].mxu0 %v791
      %v830 = vpop.f32.mrb[0].mxu0
      %v831 = vadd.f32 0.0, %v830
      %v832 = vpop.f32.mrb[0].mxu0
      %v833 = vpop.f32.mrb[0].mxu0
      %v834 = vpop.f32.mrb[0].mxu0
      %835 = vdwg.mxu0
      %836 = vrot.lane.b32.xlu0 %v495, 104
      %v837 = vpop.permute.xlu0 %836
      %838 = vrot.lane.b32.xlu0 %v565, 104
      %v839 = vpop.permute.xlu0 %838
      %v841 = vsel %vm504, %v837, 0
      %v844 = vsel %vm504, %v839, 0
      %846 = vmatprep.subr.bf16.mxu0 0
      %847 = vmatpush1.bf16.xpose.msra.mxu0 %v844
      %848 = vmatprep.subr.bf16.mxu0 0
      %849 = vmatpush1.bf16.xpose.msra.mxu0 0
      %850 = vmatprep.subr.bf16.mxu0 0
      %851 = vmatpush1.bf16.xpose.msra.mxu0 0
      %852 = vmatprep.subr.bf16.mxu0 0
      %853 = vmatpush1.bf16.xpose.msra.mxu0 0
      %854 = vmatprep.subr.bf16.mxu0 0
      %855 = vmatpush1.bf16.xpose.msra.mxu0 0
      %856 = vmatprep.subr.bf16.mxu0 0
      %857 = vmatpush1.bf16.xpose.msra.mxu0 0
      %858 = vmatprep.subr.bf16.mxu0 0
      %859 = vmatpush1.bf16.xpose.msra.mxu0 0
      %860 = vmatprep.subr.bf16.mxu0 0
      %861 = vmatpush1.bf16.xpose.msra.mxu0 0
      %862 = vmatprep.subr.bf16.mxu0 0
      %863 = vmatpush1.bf16.xpose.msra.mxu0 0
      %864 = vmatprep.subr.bf16.mxu0 0
      %865 = vmatpush1.bf16.xpose.msra.mxu0 0
      %866 = vmatprep.subr.bf16.mxu0 0
      %867 = vmatpush1.bf16.xpose.msra.mxu0 0
      %868 = vmatprep.subr.bf16.mxu0 0
      %869 = vmatpush1.bf16.xpose.msra.mxu0 0
      %870 = vmatprep.subr.bf16.mxu0 0
      %871 = vmatpush1.bf16.xpose.msra.mxu0 0
      %872 = vmatprep.subr.bf16.mxu0 0
      %873 = vmatpush1.bf16.xpose.msra.mxu0 0
      %874 = vmatprep.subr.bf16.mxu0 0
      %875 = vmatpush1.bf16.xpose.msra.mxu0 0
      %876 = vmatprep.subr.bf16.mxu0 0
      %877 = vmatpush1.bf16.xpose.msra.mxu0 0
      %878 = vmatprep.mubr.bf16.mxu0 0
      %879 = vmatmul.mubr.bf16.gmra.mrb[0].mxu0 %v841
      %v880 = vpop.f32.mrb[0].mxu0
      %v881 = vadd.f32 %v502, %v880
      %v882 = vpop.f32.mrb[0].mxu0
      %v883 = vpop.f32.mrb[0].mxu0
      %v884 = vpop.f32.mrb[0].mxu0
      %885 = vdwg.mxu0
      %v886 = vsel %vm504, %v881, -inf
      %887 = vmax.xlane.f32.xlu0 %v886
      %v888 = vpop.xlane.xlu0 %887
      %v889 = vsub.f32 %v881, %v888
      %v890 = vmul.f32 %v889, 1.442695
      %v891 = vpow.pop %v890
      %v892 = vsel %vm504, %v891, 0.0
      %893 = vadd.xlane.f32.xlu0 %v892
      %v894 = vpop.xlane.xlu0 %893
      %v895 = vrcp.pop %v894
      %v896 = vmul.f32 %v891, %v895
      %v897 = vpack.c.bf16 %v896, %v896
      %898 = vrot.lane.b32.xlu0 %v565, 72
      %v899 = vpop.permute.xlu0 %898
      %v901 = vsel %vm504, %v897, 0
      %v904 = vsel %vm571, %v899, 0
      %906 = vmatprep.subr.bf16.mxu0 0
      %907 = vmatpush1.bf16.msra.mxu0 %v904
      %908 = vmatprep.subr.bf16.mxu0 0
      %909 = vmatpush1.bf16.msra.mxu0 0
      %910 = vmatprep.subr.bf16.mxu0 0
      %911 = vmatpush1.bf16.msra.mxu0 0
      %912 = vmatprep.subr.bf16.mxu0 0
      %913 = vmatpush1.bf16.msra.mxu0 0
      %914 = vmatprep.subr.bf16.mxu0 0
      %915 = vmatpush1.bf16.msra.mxu0 0
      %916 = vmatprep.subr.bf16.mxu0 0
      %917 = vmatpush1.bf16.msra.mxu0 0
      %918 = vmatprep.subr.bf16.mxu0 0
      %919 = vmatpush1.bf16.msra.mxu0 0
      %920 = vmatprep.subr.bf16.mxu0 0
      %921 = vmatpush1.bf16.msra.mxu0 0
      %922 = vmatprep.subr.bf16.mxu0 0
      %923 = vmatpush1.bf16.msra.mxu0 0
      %924 = vmatprep.subr.bf16.mxu0 0
      %925 = vmatpush1.bf16.msra.mxu0 0
      %926 = vmatprep.subr.bf16.mxu0 0
      %927 = vmatpush1.bf16.msra.mxu0 0
      %928 = vmatprep.subr.bf16.mxu0 0
      %929 = vmatpush1.bf16.msra.mxu0 0
      %930 = vmatprep.subr.bf16.mxu0 0
      %931 = vmatpush1.bf16.msra.mxu0 0
      %932 = vmatprep.subr.bf16.mxu0 0
      %933 = vmatpush1.bf16.msra.mxu0 0
      %934 = vmatprep.subr.bf16.mxu0 0
      %935 = vmatpush1.bf16.msra.mxu0 0
      %936 = vmatprep.subr.bf16.mxu0 0
      %937 = vmatpush1.bf16.msra.mxu0 0
      %938 = vmatprep.mubr.bf16.mxu0 0
      %939 = vmatmul.mubr.bf16.gmra.mrb[0].mxu0 %v901
      %v940 = vpop.f32.mrb[0].mxu0
      %v941 = vadd.f32 0.0, %v940
      %v942 = vpop.f32.mrb[0].mxu0
      %v943 = vpop.f32.mrb[0].mxu0
      %v944 = vpop.f32.mrb[0].mxu0
      %945 = vdwg.mxu0
      %947 = vrot.lane.b32.xlu0 %v721, 8
      %v948 = vpop.permute.xlu0 %947
      %951 = vrot.lane.b32.xlu0 %v831, 16
      %v952 = vpop.permute.xlu0 %951
      %955 = vrot.lane.b32.xlu0 %v941, 24
      %v956 = vpop.permute.xlu0 %955
      %v958 = vsel %vm504, %v610, %v948
      %vm959 = vcmask 130048
      %v960 = vsel %vm959, %v958, %v952
      %vm961 = vcmask 195584
      %v962 = vsel %vm961, %v960, %v956
      %v963 = vpack.c.bf16 %v962, %v962
      %v964 = vld [vmem:[%s5] sm:$0xf]
      %v965 = vld [vmem:[%s5 + $0x4] sm:$0xf]
      %v966 = vld [vmem:[%s5 + $0x8] sm:$0xf]
      %v967 = vld [vmem:[%s5 + $0xc] sm:$0xf]
      %v972 = vunpack.c.l.b16 %v964
      %v973 = vunpack.c.l.b16 %v965
      %v974 = vunpack.c.l.b16 %v966
      %v975 = vunpack.c.l.b16 %v967
      %v976 = vpack.c.b16 %v973, %v972
      %v977 = vpack.c.b16 %v975, %v974
      %v981 = vsel %vm451, %v963, 0
      %983 = vmatprep.subr.bf16.mxu0 0
      %984 = vmatpush1.bf16.msra.mxu0 %v976
      %985 = vmatprep.subr.bf16.mxu0 0
      %986 = vmatpush1.bf16.msra.mxu0 %v977
      %987 = vmatprep.subr.bf16.mxu0 0
      %988 = vmatpush1.bf16.msra.mxu0 0
      %989 = vmatprep.subr.bf16.mxu0 0
      %990 = vmatpush1.bf16.msra.mxu0 0
      %991 = vmatprep.subr.bf16.mxu0 0
      %992 = vmatpush1.bf16.msra.mxu0 0
      %993 = vmatprep.subr.bf16.mxu0 0
      %994 = vmatpush1.bf16.msra.mxu0 0
      %995 = vmatprep.subr.bf16.mxu0 0
      %996 = vmatpush1.bf16.msra.mxu0 0
      %997 = vmatprep.subr.bf16.mxu0 0
      %998 = vmatpush1.bf16.msra.mxu0 0
      %999 = vmatprep.subr.bf16.mxu0 0
      %1000 = vmatpush1.bf16.msra.mxu0 0
      %1001 = vmatprep.subr.bf16.mxu0 0
      %1002 = vmatpush1.bf16.msra.mxu0 0
      %1003 = vmatprep.subr.bf16.mxu0 0
      %1004 = vmatpush1.bf16.msra.mxu0 0
      %1005 = vmatprep.subr.bf16.mxu0 0
      %1006 = vmatpush1.bf16.msra.mxu0 0
      %1007 = vmatprep.subr.bf16.mxu0 0
      %1008 = vmatpush1.bf16.msra.mxu0 0
      %1009 = vmatprep.subr.bf16.mxu0 0
      %1010 = vmatpush1.bf16.msra.mxu0 0
      %1011 = vmatprep.subr.bf16.mxu0 0
      %1012 = vmatpush1.bf16.msra.mxu0 0
      %1013 = vmatprep.subr.bf16.mxu0 0
      %1014 = vmatpush1.bf16.msra.mxu0 0
      %1015 = vmatprep.mubr.bf16.mxu0 0
      %1016 = vmatmul.mubr.bf16.gmra.mrb[0].mxu0 %v981
      %v1017 = vpop.f32.mrb[0].mxu0
      %v1018 = vadd.f32 0.0, %v1017
      %v1019 = vpop.f32.mrb[0].mxu0
      %v1020 = vpop.f32.mrb[0].mxu0
      %v1021 = vpop.f32.mrb[0].mxu0
      %1022 = vdwg.mxu0
      %v1023 = vadd.f32 %v433, %v1018
      %v1024 = vsel %vm451, %v1023, 0.0
      %1025 = vadd.xlane.f32.xlu0 %v1024
      %v1026 = vpop.xlane.xlu0 %1025
      %v1027 = vrcp.pop 32.0
      %v1028 = vmul.f32 %v1026, %v1027
      %v1029 = vsub.f32 %v1023, %v1028
      %v1030 = vmul.f32 %v1029, %v1029
      %v1031 = vsel %vm451, %v1030, 0.0
      %1032 = vadd.xlane.f32.xlu0 %v1031
      %v1033 = vpop.xlane.xlu0 %1032
      %v1034 = vmul.f32 %v1033, %v1027
      %v1035 = vadd.f32 %v1034, 1e-05
      %v1036 = vrsqrt.pop %v1035
      %v1037 = vmul.f32 %v1029, %v1036
      %v1038 = vld [vmem:[%s6] sm:$0x1]
      %v1040 = vlaneseq
      %v1041 = vshrl.u32 %v1040, 7
      %v1042 = vsub.s32 0, %v1041
      %v1043 = vrot.slane %v1038, %v1042
      %v1045 = vmul.f32 %v1037, %v1043
      %v1046 = vld [vmem:[%s7] sm:$0x1]
      %v1048 = vlaneseq
      %v1049 = vshrl.u32 %v1048, 7
      %v1050 = vsub.s32 0, %v1049
      %v1051 = vrot.slane %v1046, %v1050
      %v1053 = vadd.f32 %v1045, %v1051
      %1054 = vst.msk [vmem:[%s362] sm:$0xff] %vm451, %v1053
      %p1055 = scmp.lt.s32.totalorder %s23, 1
      %s1056 = scalar_select %p1055, %s23, 1
      %p1057 = scmp.lt.s32.totalorder %s24, 0
      %s1058 = scalar_select %p1057, %s24, 0
      %s1059 = sadd.s32 %s1058, %s1056
      %s1060 = smul.addr %s1059, 8
      %s1061 = scalar_lea.vmem %s8, %s1060
      // Predicated region
      $region57: #{_lambda_.14} parent=51 // pred_check
        %p1062 = pneg %p236
      $region58: #{_lambda_.14} parent=51 // pred_check_branch
        %1064 = sbr.rel (%p1062) target = $region60
      $region59: #{_lambda_.14} parent=51 // pred_region
        _
      $region60: #{_lambda_.14} parent=51 // pred_fallthru
        _
    $region52: #{_lambda_.14} parent=5 // pred_fallthru
      _
    %p1065 = scmp.le.s32.totalorder 2, %s14
    // Predicated region
    $region61: #{_lambda_.14} parent=5 // pred_check
      %p1066 = pneg %p1065
    $region62: #{_lambda_.14} parent=5 // pred_check_branch
      %1068 = sbr.rel (%p1066) target = $region64
    $region63: #{_lambda_.14} parent=5 // pred_region
      %s1069 = ssub.s32 %s14, 2
      // Predicated region
      $region65: #{_lambda_.14} parent=63 // pred_check
        %p1070 = pneg %p242
      $region66: #{_lambda_.14} parent=63 // pred_check_branch
        %1072 = sbr.rel (%p1070) target = $region68
      $region67: #{_lambda_.14} parent=63 // pred_region
        %p1073 = scmp.lt.s32.totalorder %s25, 1
        %s1074 = scalar_select %p1073, %s25, 1
        %p1075 = scmp.lt.s32.totalorder %s26, 0
        %s1076 = scalar_select %p1075, %s26, 0
        %s1077 = sadd.s32 %s1076, %s1074
        %s1078 = smul.addr %s1077, 8
        %s1079 = scalar_lea.vmem %s8, %s1078
      $region68: #{_lambda_.14} parent=63 // pred_fallthru
        _
    $region64: #{_lambda_.14} parent=5 // pred_fallthru
      _
  $region6: #{_lambda_.14} parent=0 // loop_footer
    %s18 = sadd.s32 1, %s14
  $region7: #{_lambda_.14} parent=0 // loop_footer_branch
    %13 = sbr.rel target = $region3
  $region8: #{_lambda_.14} parent=0 // loop_exit
    _

// kernel: _lambda_.19
$region0: #{_lambda_.19}
  #allocation0 [shape = 'u32[]', space=smem, size = 0x4, offset = 0x4, fixed_abs, tag = 'smem constant byte address 0x4 - core index']
  #allocation1 [shape = 'u32[144,128]{1,0:T(1,128)}', space=vmem, size = 0x12000, scoped, tag = 'internal scratch']
  #allocation2 [shape = 'bf16[8,64]{1,0:T(8,128)(2,1)}', space=vmem, size = 0x800, scoped, tag = 'scratch operand']
  %s0 = inlined_call_operand.vmem [shape: f32[2,8,32], index: 0, kind: input, shape index: {}, may-alias: {0,1}]
  %s1 = inlined_call_operand.vmem [shape: f32[2,8,32], index: 1, kind: input, shape index: {}, may-alias: {0,1}]
  %s2 = inlined_call_operand.vmem [shape: f32[2,1,8], index: 2, kind: input, shape index: {}]
  %s3 = inlined_call_operand.vmem [shape: bf16[32,32], index: 3, kind: input, shape index: {}]
  %s4 = inlined_call_operand.vmem [shape: bf16[32,64], index: 4, kind: input, shape index: {}]
  %s5 = inlined_call_operand.vmem [shape: bf16[32,32], index: 5, kind: input, shape index: {}]
  %s6 = inlined_call_operand.vmem [shape: f32[1,32], index: 6, kind: input, shape index: {}]
  %s7 = inlined_call_operand.vmem [shape: f32[1,32], index: 7, kind: input, shape index: {}]
  %s8 = inlined_call_operand.vmem [shape: f32[2,8,32], index: 8, kind: output, shape index: {}]
  %s9 = sld [smem:[#allocation0]]
  $region69: #{_lambda_.19} parent=0
    _
  %s11 = ssub.s32 1, %s9
  %s12 = scalar_select 0, %s11, %s9
  loop: start=0, step=1, limit=4
  $region2: #{_lambda_.19} parent=0 // loop_pre_header
    _
  $region3: #{_lambda_.19} parent=0 // loop_header
    %s14 = sphi 0, %s18
    %p15 = scmp.ge.s32.totalorder %s14, 4
    %s21 = sphi 0, %s33
    %s22 = sphi 0, %s29
    %s23 = sphi 0, %s21
    %s24 = sphi 0, %s22
    %s25 = sphi 0, %s23
    %s26 = sphi 0, %s24
    %s38 = sphi 0, %s40
    %s41 = sphi 0, %s38
    %s42 = sphi 0, %s41
    %s58 = sphi 0, %s42
    %s64 = sphi 0, %s66
    %s67 = sphi 0, %s64
    %s68 = sphi 0, %s67
    %s84 = sphi 0, %s68
    %s90 = sphi 0, %s92
    %s93 = sphi 0, %s90
    %s94 = sphi 0, %s93
    %s110 = sphi 0, %s94
    %s114 = sphi 0, %s114
    %s116 = sphi 0, %s114
    %s117 = sphi 0, %s116
    %s131 = sphi 0, %s117
    %s135 = sphi 0, %s135
    %s137 = sphi 0, %s135
    %s138 = sphi 0, %s137
    %s152 = sphi 0, %s138
    %s156 = sphi 0, %s156
    %s158 = sphi 0, %s156
    %s159 = sphi 0, %s158
    %s173 = sphi 0, %s159
    %s177 = sphi 0, %s177
    %s179 = sphi 0, %s177
    %s180 = sphi 0, %s179
    %s194 = sphi 0, %s180
    %s198 = sphi 0, %s198
    %s200 = sphi 0, %s198
    %s201 = sphi 0, %s200
    %s215 = sphi 0, %s201
    %s223 = sphi 0, %s225
    %s226 = sphi 0, %s223
    %s227 = sphi 0, %s226
    %s243 = sphi 0, %s227
  $region4: #{_lambda_.19} parent=0 // loop_header_branch
    %17 = sbr.rel (%p15) target = $region8
  $region5: #{_lambda_.19} parent=0 // loop_body
    %s19 = ssub.s32 %s14, 1
    %s20 = ssub.s32 %s14, 2
    %s27 = sadd.s32 1, %s22
    %p28 = scmp.ge.s32.totalorder %s27, 1
    %s29 = scalar_select %p28, 0, %s27
    %s30 = sadd.s32 1, %s21
    %s31 = scalar_select %p28, %s30, %s21
    %p32 = scmp.ge.s32.totalorder %s31, 2
    %s33 = scalar_select %p32, 0, %s31
    %s34 = ssub.s32 %s21, %s33
    %s35 = ssub.s32 %s22, %s29
    %s36 = sor.u32 %s34, %s35
    %p37 = scmp.eq.s32.totalorder %s36, 0
    %s39 = sadd.s32 %s38, 1
    %s40 = scalar_select %p37, %s38, %s39
    %p43 = pneg %p37
    %p44 = scmp.eq.s32.totalorder %s14, 1
    %p45 = por %p43, %p44
    %p46 = scmp.ne.s32.totalorder %s38, %s41
    %p47 = scmp.eq.s32.totalorder %s14, 0
    %p48 = por %p46, %p47
    %p49 = scmp.ne.s32.totalorder %s38, %s41
    %p50 = scmp.eq.s32.totalorder %s19, 1
    %p51 = por %p49, %p50
    %p52 = scmp.ne.s32.totalorder %s41, %s42
    %p53 = scmp.eq.s32.totalorder %s19, 0
    %p54 = por %p52, %p53
    %p55 = scmp.ne.s32.totalorder %s41, %s42
    %p56 = scmp.eq.s32.totalorder %s20, 1
    %p57 = por %p55, %p56
    %p59 = scmp.ne.s32.totalorder %s42, %s58
    %p60 = scmp.eq.s32.totalorder %s20, 0
    %p61 = por %p59, %p60
    %s62 = ssub.s32 %s21, %s33
    %p63 = scmp.eq.s32.totalorder %s62, 0
    %s65 = sadd.s32 %s64, 1
    %s66 = scalar_select %p63, %s64, %s65
    %p69 = pneg %p63
    %p70 = scmp.eq.s32.totalorder %s14, 1
    %p71 = por %p69, %p70
    %p72 = scmp.ne.s32.totalorder %s64, %s67
    %p73 = scmp.eq.s32.totalorder %s14, 0
    %p74 = por %p72, %p73
    %p75 = scmp.ne.s32.totalorder %s64, %s67
    %p76 = scmp.eq.s32.totalorder %s19, 1
    %p77 = por %p75, %p76
    %p78 = scmp.ne.s32.totalorder %s67, %s68
    %p79 = scmp.eq.s32.totalorder %s19, 0
    %p80 = por %p78, %p79
    %p81 = scmp.ne.s32.totalorder %s67, %s68
    %p82 = scmp.eq.s32.totalorder %s20, 1
    %p83 = por %p81, %p82
    %p85 = scmp.ne.s32.totalorder %s68, %s84
    %p86 = scmp.eq.s32.totalorder %s20, 0
    %p87 = por %p85, %p86
    %s88 = ssub.s32 %s21, %s33
    %p89 = scmp.eq.s32.totalorder %s88, 0
    %s91 = sadd.s32 %s90, 1
    %s92 = scalar_select %p89, %s90, %s91
    %p95 = pneg %p89
    %p96 = scmp.eq.s32.totalorder %s14, 1
    %p97 = por %p95, %p96
    %p98 = scmp.ne.s32.totalorder %s90, %s93
    %p99 = scmp.eq.s32.totalorder %s14, 0
    %p100 = por %p98, %p99
    %p101 = scmp.ne.s32.totalorder %s90, %s93
    %p102 = scmp.eq.s32.totalorder %s19, 1
    %p103 = por %p101, %p102
    %p104 = scmp.ne.s32.totalorder %s93, %s94
    %p105 = scmp.eq.s32.totalorder %s19, 0
    %p106 = por %p104, %p105
    %p107 = scmp.ne.s32.totalorder %s93, %s94
    %p108 = scmp.eq.s32.totalorder %s20, 1
    %p109 = por %p107, %p108
    %p111 = scmp.ne.s32.totalorder %s94, %s110
    %p112 = scmp.eq.s32.totalorder %s20, 0
    %p113 = por %p111, %p112
    %s115 = sadd.s32 %s114, 1
    %p118 = scmp.eq.s32.totalorder %s14, 1
    %p119 = scmp.ne.s32.totalorder %s114, %s116
    %p120 = scmp.eq.s32.totalorder %s14, 0
    %p121 = por %p119, %p120
    %p122 = scmp.ne.s32.totalorder %s114, %s116
    %p123 = scmp.eq.s32.totalorder %s19, 1
    %p124 = por %p122, %p123
    %p125 = scmp.ne.s32.totalorder %s116, %s117
    %p126 = scmp.eq.s32.totalorder %s19, 0
    %p127 = por %p125, %p126
    %p128 = scmp.ne.s32.totalorder %s116, %s117
    %p129 = scmp.eq.s32.totalorder %s20, 1
    %p130 = por %p128, %p129
    %p132 = scmp.ne.s32.totalorder %s117, %s131
    %p133 = scmp.eq.s32.totalorder %s20, 0
    %p134 = por %p132, %p133
    %s136 = sadd.s32 %s135, 1
    %p139 = scmp.eq.s32.totalorder %s14, 1
    %p140 = scmp.ne.s32.totalorder %s135, %s137
    %p141 = scmp.eq.s32.totalorder %s14, 0
    %p142 = por %p140, %p141
    %p143 = scmp.ne.s32.totalorder %s135, %s137
    %p144 = scmp.eq.s32.totalorder %s19, 1
    %p145 = por %p143, %p144
    %p146 = scmp.ne.s32.totalorder %s137, %s138
    %p147 = scmp.eq.s32.totalorder %s19, 0
    %p148 = por %p146, %p147
    %p149 = scmp.ne.s32.totalorder %s137, %s138
    %p150 = scmp.eq.s32.totalorder %s20, 1
    %p151 = por %p149, %p150
    %p153 = scmp.ne.s32.totalorder %s138, %s152
    %p154 = scmp.eq.s32.totalorder %s20, 0
    %p155 = por %p153, %p154
    %s157 = sadd.s32 %s156, 1
    %p160 = scmp.eq.s32.totalorder %s14, 1
    %p161 = scmp.ne.s32.totalorder %s156, %s158
    %p162 = scmp.eq.s32.totalorder %s14, 0
    %p163 = por %p161, %p162
    %p164 = scmp.ne.s32.totalorder %s156, %s158
    %p165 = scmp.eq.s32.totalorder %s19, 1
    %p166 = por %p164, %p165
    %p167 = scmp.ne.s32.totalorder %s158, %s159
    %p168 = scmp.eq.s32.totalorder %s19, 0
    %p169 = por %p167, %p168
    %p170 = scmp.ne.s32.totalorder %s158, %s159
    %p171 = scmp.eq.s32.totalorder %s20, 1
    %p172 = por %p170, %p171
    %p174 = scmp.ne.s32.totalorder %s159, %s173
    %p175 = scmp.eq.s32.totalorder %s20, 0
    %p176 = por %p174, %p175
    %s178 = sadd.s32 %s177, 1
    %p181 = scmp.eq.s32.totalorder %s14, 1
    %p182 = scmp.ne.s32.totalorder %s177, %s179
    %p183 = scmp.eq.s32.totalorder %s14, 0
    %p184 = por %p182, %p183
    %p185 = scmp.ne.s32.totalorder %s177, %s179
    %p186 = scmp.eq.s32.totalorder %s19, 1
    %p187 = por %p185, %p186
    %p188 = scmp.ne.s32.totalorder %s179, %s180
    %p189 = scmp.eq.s32.totalorder %s19, 0
    %p190 = por %p188, %p189
    %p191 = scmp.ne.s32.totalorder %s179, %s180
    %p192 = scmp.eq.s32.totalorder %s20, 1
    %p193 = por %p191, %p192
    %p195 = scmp.ne.s32.totalorder %s180, %s194
    %p196 = scmp.eq.s32.totalorder %s20, 0
    %p197 = por %p195, %p196
    %s199 = sadd.s32 %s198, 1
    %p202 = scmp.eq.s32.totalorder %s14, 1
    %p203 = scmp.ne.s32.totalorder %s198, %s200
    %p204 = scmp.eq.s32.totalorder %s14, 0
    %p205 = por %p203, %p204
    %p206 = scmp.ne.s32.totalorder %s198, %s200
    %p207 = scmp.eq.s32.totalorder %s19, 1
    %p208 = por %p206, %p207
    %p209 = scmp.ne.s32.totalorder %s200, %s201
    %p210 = scmp.eq.s32.totalorder %s19, 0
    %p211 = por %p209, %p210
    %p212 = scmp.ne.s32.totalorder %s200, %s201
    %p213 = scmp.eq.s32.totalorder %s20, 1
    %p214 = por %p212, %p213
    %p216 = scmp.ne.s32.totalorder %s201, %s215
    %p217 = scmp.eq.s32.totalorder %s20, 0
    %p218 = por %p216, %p217
    %s219 = ssub.s32 %s21, %s33
    %s220 = ssub.s32 %s22, %s29
    %s221 = sor.u32 %s219, %s220
    %p222 = scmp.eq.s32.totalorder %s221, 0
    %s224 = sadd.s32 %s223, 1
    %s225 = scalar_select %p222, %s223, %s224
    %p228 = pneg %p222
    %p229 = scmp.eq.s32.totalorder %s14, 1
    %p230 = por %p228, %p229
    %p231 = scmp.ne.s32.totalorder %s223, %s226
    %p232 = scmp.eq.s32.totalorder %s14, 0
    %p233 = por %p231, %p232
    %p234 = scmp.ne.s32.totalorder %s223, %s226
    %p235 = scmp.eq.s32.totalorder %s19, 1
    %p236 = por %p234, %p235
    %p237 = scmp.ne.s32.totalorder %s226, %s227
    %p238 = scmp.eq.s32.totalorder %s19, 0
    %p239 = por %p237, %p238
    %p240 = scmp.ne.s32.totalorder %s226, %s227
    %p241 = scmp.eq.s32.totalorder %s20, 1
    %p242 = por %p240, %p241
    %p244 = scmp.ne.s32.totalorder %s227, %s243
    %p245 = scmp.eq.s32.totalorder %s20, 0
    %p246 = por %p244, %p245
    %p247 = scmp.le.s32.totalorder 1, %s14
    %p248 = scmp.lt.s32.totalorder %s14, 3
    %p249 = pnand %p247, %p248
    %p250 = pneg %p249
    // Predicated region
    $region9: #{_lambda_.19} parent=5 // pred_check
      _
    $region10: #{_lambda_.19} parent=5 // pred_check_branch
      %252 = sbr.rel (%p249) target = $region12
    $region11: #{_lambda_.19} parent=5 // pred_region
      %s253 = ssub.s32 %s14, 1
      // Predicated region
      $region13: #{_lambda_.19} parent=11 // pred_check
        %p254 = pneg %p127
      $region14: #{_lambda_.19} parent=11 // pred_check_branch
        %256 = sbr.rel (%p254) target = $region16
      $region15: #{_lambda_.19} parent=11 // pred_region
        _
      $region16: #{_lambda_.19} parent=11 // pred_fallthru
        _
      // Predicated region
      $region17: #{_lambda_.19} parent=11 // pred_check
        %p257 = pneg %p148
      $region18: #{_lambda_.19} parent=11 // pred_check_branch
        %259 = sbr.rel (%p257) target = $region20
      $region19: #{_lambda_.19} parent=11 // pred_region
        _
      $region20: #{_lambda_.19} parent=11 // pred_fallthru
        _
      // Predicated region
      $region21: #{_lambda_.19} parent=11 // pred_check
        %p260 = pneg %p169
      $region22: #{_lambda_.19} parent=11 // pred_check_branch
        %262 = sbr.rel (%p260) target = $region24
      $region23: #{_lambda_.19} parent=11 // pred_region
        _
      $region24: #{_lambda_.19} parent=11 // pred_fallthru
        _
      // Predicated region
      $region25: #{_lambda_.19} parent=11 // pred_check
        %p263 = pneg %p190
      $region26: #{_lambda_.19} parent=11 // pred_check_branch
        %265 = sbr.rel (%p263) target = $region28
      $region27: #{_lambda_.19} parent=11 // pred_region
        _
      $region28: #{_lambda_.19} parent=11 // pred_fallthru
        _
      // Predicated region
      $region29: #{_lambda_.19} parent=11 // pred_check
        %p266 = pneg %p211
      $region30: #{_lambda_.19} parent=11 // pred_check_branch
        %268 = sbr.rel (%p266) target = $region32
      $region31: #{_lambda_.19} parent=11 // pred_region
        _
      $region32: #{_lambda_.19} parent=11 // pred_fallthru
        _
    $region12: #{_lambda_.19} parent=5 // pred_fallthru
      _
    %p269 = scmp.lt.s32.totalorder %s14, 2
    // Predicated region
    $region33: #{_lambda_.19} parent=5 // pred_check
      %p270 = pneg %p269
    $region34: #{_lambda_.19} parent=5 // pred_check_branch
      %272 = sbr.rel (%p270) target = $region36
    $region35: #{_lambda_.19} parent=5 // pred_region
      // Predicated region
      $region37: #{_lambda_.19} parent=35 // pred_check
        %p273 = pneg %p48
      $region38: #{_lambda_.19} parent=35 // pred_check_branch
        %275 = sbr.rel (%p273) target = $region40
      $region39: #{_lambda_.19} parent=35 // pred_region
        %p276 = scmp.lt.s32.totalorder %s21, 1
        %s277 = scalar_select %p276, %s21, 1
        %p278 = scmp.lt.s32.totalorder %s22, 0
        %s279 = scalar_select %p278, %s22, 0
        %s280 = sadd.s32 %s279, %s277
        %s281 = smul.addr %s280, 8
        %s282 = scalar_lea.vmem %s0, %s281
      $region40: #{_lambda_.19} parent=35 // pred_fallthru
        _
      // Predicated region
      $region41: #{_lambda_.19} parent=35 // pred_check
        %p283 = pneg %p74
      $region42: #{_lambda_.19} parent=35 // pred_check_branch
        %285 = sbr.rel (%p283) target = $region44
      $region43: #{_lambda_.19} parent=35 // pred_region
        %p286 = scmp.lt.s32.totalorder %s21, 1
        %s287 = scalar_select %p286, %s21, 1
        %s288 = smul.addr %s287, 8
        %s289 = scalar_lea.vmem %s1, %s288
      $region44: #{_lambda_.19} parent=35 // pred_fallthru
        _
      // Predicated region
      $region45: #{_lambda_.19} parent=35 // pred_check
        %p290 = pneg %p100
      $region46: #{_lambda_.19} parent=35 // pred_check_branch
        %292 = sbr.rel (%p290) target = $region48
      $region47: #{_lambda_.19} parent=35 // pred_region
        %p293 = scmp.lt.s32.totalorder %s21, 1
        %s294 = scalar_select %p293, %s21, 1
        %s295 = scalar_lea.vmem %s2, %s294
      $region48: #{_lambda_.19} parent=35 // pred_fallthru
        _
    $region36: #{_lambda_.19} parent=5 // pred_fallthru
      _
    %p296 = scmp.le.s32.totalorder 1, %s14
    %p297 = scmp.lt.s32.totalorder %s14, 3
    %p298 = pnand %p296, %p297
    %p299 = pneg %p298
    // Predicated region
    $region49: #{_lambda_.19} parent=5 // pred_check
      _
    $region50: #{_lambda_.19} parent=5 // pred_check_branch
      %301 = sbr.rel (%p298) target = $region52
    $region51: #{_lambda_.19} parent=5 // pred_region
      %s302 = ssub.s32 %s14, 1
      %p303 = scmp.lt.s32.totalorder %s23, 1
      %s304 = scalar_select %p303, %s23, 1
      %p305 = scmp.lt.s32.totalorder %s24, 0
      %s306 = scalar_select %p305, %s24, 0
      %s307 = sadd.s32 %s306, %s304
      %s308 = smul.addr %s307, 8
      %s309 = scalar_lea.vmem %s0, %s308
      %p310 = pneg %p54
      %p311 = pneg %p51
      %p312 = scmp.lt.s32.totalorder %s23, 1
      %s313 = scalar_select %p312, %s23, 1
      %s314 = smul.addr %s313, 8
      %s315 = scalar_lea.vmem %s1, %s314
      %p316 = pneg %p80
      %p317 = pneg %p77
      %p318 = scmp.lt.s32.totalorder %s23, 1
      %s319 = scalar_select %p318, %s23, 1
      %s320 = scalar_lea.vmem %s2, %s319
      %p321 = pneg %p106
      %p322 = pneg %p103
      %p323 = pneg %p127
      %p324 = pneg %p124
      %p325 = pneg %p148
      %p326 = pneg %p145
      %p327 = pneg %p169
      %p328 = pneg %p166
      %p329 = pneg %p190
      %p330 = pneg %p187
      %p331 = pneg %p211
      %p332 = pneg %p208
      %p333 = pneg %p239
      %p334 = pneg %p236
      %p335 = scmp.lt.s32.totalorder %s23, 1
      %s336 = scalar_select %p335, %s23, 1
      %p337 = scmp.lt.s32.totalorder %s24, 0
      %s338 = scalar_select %p337, %s24, 0
      %s339 = sadd.s32 %s338, %s336
      %s340 = smul.addr %s339, 8
      %s341 = scalar_lea.vmem %s8, %s340
      %p342 = scmp.lt.s32.totalorder %s23, 1
      %s343 = scalar_select %p342, %s23, 1
      %p344 = scmp.lt.s32.totalorder %s24, 0
      %s345 = scalar_select %p344, %s24, 0
      %s346 = sadd.s32 %s345, %s343
      %s347 = smul.addr %s346, 8
      %s348 = scalar_lea.vmem %s0, %s347
      %p349 = scmp.lt.s32.totalorder %s23, 1
      %s350 = scalar_select %p349, %s23, 1
      %s351 = smul.addr %s350, 8
      %s352 = scalar_lea.vmem %s1, %s351
      %p353 = scmp.lt.s32.totalorder %s23, 1
      %s354 = scalar_select %p353, %s23, 1
      %s355 = scalar_lea.vmem %s2, %s354
      %p356 = scmp.lt.s32.totalorder %s23, 1
      %s357 = scalar_select %p356, %s23, 1
      %p358 = scmp.lt.s32.totalorder %s24, 0
      %s359 = scalar_select %p358, %s24, 0
      %s360 = sadd.s32 %s359, %s357
      %s361 = smul.addr %s360, 8
      %s362 = scalar_lea.vmem %s8, %s361
      %p364 = scmp.eq.s32.totalorder %s24, 0
      // Predicated region
      $region53: #{_lambda_.19} parent=51 // pred_check
        %p365 = pneg %p364
      $region54: #{_lambda_.19} parent=51 // pred_check_branch
        %367 = sbr.rel (%p365) target = $region56
      $region55: #{_lambda_.19} parent=51 // pred_region
        %v368 = vld [vmem:[%s352] sm:$0xff]
        %v369 = vpack.c.bf16 %v368, %v368
        %v370 = vld [vmem:[%s4] sm:$0xf]
        %v371 = vld [vmem:[%s4 + $0x4] sm:$0xf]
        %v372 = vld [vmem:[%s4 + $0x8] sm:$0xf]
        %v373 = vld [vmem:[%s4 + $0xc] sm:$0xf]
        %v378 = vunpack.c.l.b16 %v370
        %v379 = vunpack.c.l.b16 %v371
        %v380 = vunpack.c.l.b16 %v372
        %v381 = vunpack.c.l.b16 %v373
        %v382 = vpack.c.b16 %v379, %v378
        %v383 = vpack.c.b16 %v381, %v380
        %vm386 = vcmask 261120
        %v388 = vsel %vm386, %v369, 0
        %390 = vmatprep.subr.bf16.mxu0 0
        %391 = vmatpush1.bf16.msra.mxu0 %v382
        %392 = vmatprep.subr.bf16.mxu0 0
        %393 = vmatpush1.bf16.msra.mxu0 %v383
        %394 = vmatprep.subr.bf16.mxu0 0
        %395 = vmatpush1.bf16.msra.mxu0 0
        %396 = vmatprep.subr.bf16.mxu0 0
        %397 = vmatpush1.bf16.msra.mxu0 0
        %398 = vmatprep.subr.bf16.mxu0 0
        %399 = vmatpush1.bf16.msra.mxu0 0
        %400 = vmatprep.subr.bf16.mxu0 0
        %401 = vmatpush1.bf16.msra.mxu0 0
        %402 = vmatprep.subr.bf16.mxu0 0
        %403 = vmatpush1.bf16.msra.mxu0 0
        %404 = vmatprep.subr.bf16.mxu0 0
        %405 = vmatpush1.bf16.msra.mxu0 0
        %406 = vmatprep.subr.bf16.mxu0 0
        %407 = vmatpush1.bf16.msra.mxu0 0
        %408 = vmatprep.subr.bf16.mxu0 0
        %409 = vmatpush1.bf16.msra.mxu0 0
        %410 = vmatprep.subr.bf16.mxu0 0
        %411 = vmatpush1.bf16.msra.mxu0 0
        %412 = vmatprep.subr.bf16.mxu0 0
        %413 = vmatpush1.bf16.msra.mxu0 0
        %414 = vmatprep.subr.bf16.mxu0 0
        %415 = vmatpush1.bf16.msra.mxu0 0
        %416 = vmatprep.subr.bf16.mxu0 0
        %417 = vmatpush1.bf16.msra.mxu0 0
        %418 = vmatprep.subr.bf16.mxu0 0
        %419 = vmatpush1.bf16.msra.mxu0 0
        %420 = vmatprep.subr.bf16.mxu0 0
        %421 = vmatpush1.bf16.msra.mxu0 0
        %422 = vmatprep.mubr.bf16.mxu0 0
        %423 = vmatmul.mubr.bf16.gmra.mrb[0].mxu0 %v388
        %v424 = vpop.f32.mrb[0].mxu0
        %v425 = vadd.f32 0.0, %v424
        %v426 = vpop.f32.mrb[0].mxu0
        %v427 = vpop.f32.mrb[0].mxu0
        %v428 = vpop.f32.mrb[0].mxu0
        %429 = vdwg.mxu0
        %v430 = vpack.c.bf16 %v425, %v425
        %vm431 = vcmask 519168
        %432 = vst.msk [vmem:[#allocation2] sm:$0xf] %vm431, %v430
      $region56: #{_lambda_.19} parent=51 // pred_fallthru
        _
      %v433 = vld [vmem:[%s348] sm:$0xff]
      %v434 = vpack.c.bf16 %v433, %v433
      %v435 = vld [vmem:[%s3] sm:$0xf]
      %v436 = vld [vmem:[%s3 + $0x4] sm:$0xf]
      %v437 = vld [vmem:[%s3 + $0x8] sm:$0xf]
      %v438 = vld [vmem:[%s3 + $0xc] sm:$0xf]
      %v443 = vunpack.c.l.b16 %v435
      %v444 = vunpack.c.l.b16 %v436
      %v445 = vunpack.c.l.b16 %v437
      %v446 = vunpack.c.l.b16 %v438
      %v447 = vpack.c.b16 %v444, %v443
      %v448 = vpack.c.b16 %v446, %v445
      %vm451 = vcmask 261120
      %v453 = vsel %vm451, %v434, 0
      %455 = vmatprep.subr.bf16.mxu0 0
      %456 = vmatpush1.bf16.msra.mxu0 %v447
      %457 = vmatprep.subr.bf16.mxu0 0
      %458 = vmatpush1.bf16.msra.mxu0 %v448
      %459 = vmatprep.subr.bf16.mxu0 0
      %460 = vmatpush1.bf16.msra.mxu0 0
      %461 = vmatprep.subr.bf16.mxu0 0
      %462 = vmatpush1.bf16.msra.mxu0 0
      %463 = vmatprep.subr.bf16.mxu0 0
      %464 = vmatpush1.bf16.msra.mxu0 0
      %465 = vmatprep.subr.bf16.mxu0 0
      %466 = vmatpush1.bf16.msra.mxu0 0
      %467 = vmatprep.subr.bf16.mxu0 0
      %468 = vmatpush1.bf16.msra.mxu0 0
      %469 = vmatprep.subr.bf16.mxu0 0
      %470 = vmatpush1.bf16.msra.mxu0 0
      %471 = vmatprep.subr.bf16.mxu0 0
      %472 = vmatpush1.bf16.msra.mxu0 0
      %473 = vmatprep.subr.bf16.mxu0 0
      %474 = vmatpush1.bf16.msra.mxu0 0
      %475 = vmatprep.subr.bf16.mxu0 0
      %476 = vmatpush1.bf16.msra.mxu0 0
      %477 = vmatprep.subr.bf16.mxu0 0
      %478 = vmatpush1.bf16.msra.mxu0 0
      %479 = vmatprep.subr.bf16.mxu0 0
      %480 = vmatpush1.bf16.msra.mxu0 0
      %481 = vmatprep.subr.bf16.mxu0 0
      %482 = vmatpush1.bf16.msra.mxu0 0
      %483 = vmatprep.subr.bf16.mxu0 0
      %484 = vmatpush1.bf16.msra.mxu0 0
      %485 = vmatprep.subr.bf16.mxu0 0
      %486 = vmatpush1.bf16.msra.mxu0 0
      %487 = vmatprep.mubr.bf16.mxu0 0
      %488 = vmatmul.mubr.bf16.gmra.mrb[0].mxu0 %v453
      %v489 = vpop.f32.mrb[0].mxu0
      %v490 = vadd.f32 0.0, %v489
      %v491 = vpop.f32.mrb[0].mxu0
      %v492 = vpop.f32.mrb[0].mxu0
      %v493 = vpop.f32.mrb[0].mxu0
      %494 = vdwg.mxu0
      %v495 = vpack.c.bf16 %v490, %v490
      %v496 = vld [vmem:[#allocation2] sm:$0xf]
      %v497 = vld [vmem:[%s355] sm:$0x1]
      %s498 = smul.u32 %s24, 8
      %v499 = vlaneseq
      %v500 = vshrl.u32 %v499, 7
      %v501 = vstv %s498
      %v502 = vadd.s32 %v501, %v500
      %v503 = vlaneseq
      %v504 = vand.u32 %v503, 127
      %vm505 = vcmp.gt.s32.totalorder %v504, %v502
      %v506 = vsel %vm505, -1e+30, 0.0
      %v508 = vlaneseq
      %v509 = vshrl.u32 %v508, 7
      %v510 = vsub.s32 0, %v509
      %v511 = vrot.slane %v497, %v510
      %v513 = vadd.f32 %v511, %v506
      %vm514 = vcmask 64512
      %v516 = vsel %vm514, %v495, 0
      %v519 = vsel %vm514, %v496, 0
      %521 = vmatprep.subr.bf16.mxu0 0
      %522 = vmatpush1.bf16.xpose.msra.mxu0 %v519
      %523 = vmatprep.subr.bf16.mxu0 0
      %524 = vmatpush1.bf16.xpose.msra.mxu0 0
      %525 = vmatprep.subr.bf16.mxu0 0
      %526 = vmatpush1.bf16.xpose.msra.mxu0 0
      %527 = vmatprep.subr.bf16.mxu0 0
      %528 = vmatpush1.bf16.xpose.msra.mxu0 0
      %529 = vmatprep.subr.bf16.mxu0 0
      %530 = vmatpush1.bf16.xpose.msra.mxu0 0
      %531 = vmatprep.subr.bf16.mxu0 0
      %532 = vmatpush1.bf16.xpose.msra.mxu0 0
      %533 = vmatprep.subr.bf16.mxu0 0
      %534 = vmatpush1.bf16.xpose.msra.mxu0 0
      %535 = vmatprep.subr.bf16.mxu0 0
      %536 = vmatpush1.bf16.xpose.msra.mxu0 0
      %537 = vmatprep.subr.bf16.mxu0 0
      %538 = vmatpush1.bf16.xpose.msra.mxu0 0
      %539 = vmatprep.subr.bf16.mxu0 0
      %540 = vmatpush1.bf16.xpose.msra.mxu0 0
      %541 = vmatprep.subr.bf16.mxu0 0
      %542 = vmatpush1.bf16.xpose.msra.mxu0 0
      %543 = vmatprep.subr.bf16.mxu0 0
      %544 = vmatpush1.bf16.xpose.msra.mxu0 0
      %545 = vmatprep.subr.bf16.mxu0 0
      %546 = vmatpush1.bf16.xpose.msra.mxu0 0
      %547 = vmatprep.subr.bf16.mxu0 0
      %548 = vmatpush1.bf16.xpose.msra.mxu0 0
      %549 = vmatprep.subr.bf16.mxu0 0
      %550 = vmatpush1.bf16.xpose.msra.mxu0 0
      %551 = vmatprep.subr.bf16.mxu0 0
      %552 = vmatpush1.bf16.xpose.msra.mxu0 0
      %553 = vmatprep.mubr.bf16.mxu0 0
      %554 = vmatmul.mubr.bf16.gmra.mrb[0].mxu0 %v516
      %v555 = vpop.f32.mrb[0].mxu0
      %v556 = vadd.f32 %v513, %v555
      %v557 = vpop.f32.mrb[0].mxu0
      %v558 = vpop.f32.mrb[0].mxu0
      %v559 = vpop.f32.mrb[0].mxu0
      %560 = vdwg.mxu0
      %v561 = vsel %vm514, %v556, -inf
      %562 = vmax.xlane.f32.xlu0 %v561
      %v563 = vpop.xlane.xlu0 %562
      %v564 = vsub.f32 %v556, %v563
      %v565 = vmul.f32 %v564, 1.442695
      %v566 = vpow.pop %v565
      %v567 = vsel %vm514, %v566, 0.0
      %568 = vadd.xlane.f32.xlu0 %v567
      %v569 = vpop.xlane.xlu0 %568
      %v570 = vrcp.pop %v569
      %v571 = vmul.f32 %v566, %v570
      %v572 = vpack.c.bf16 %v571, %v571
      %v574 = vunpack.c.l.b16 %v496
      %v575 = vpack.c.b16 %v574, %v574
      %576 = vrot.lane.b32.xlu0 %v575, 96
      %v577 = vpop.permute.xlu0 %576
      %v579 = vsel %vm514, %v572, 0
      %vm581 = vcmask 1043456
      %v583 = vsel %vm581, %v577, 0
      %585 = vmatprep.subr.bf16.mxu0 0
      %586 = vmatpush1.bf16.msra.mxu0 %v583
      %587 = vmatprep.subr.bf16.mxu0 0
      %588 = vmatpush1.bf16.msra.mxu0 0
      %589 = vmatprep.subr.bf16.mxu0 0
      %590 = vmatpush1.bf16.msra.mxu0 0
      %591 = vmatprep.subr.bf16.mxu0 0
      %592 = vmatpush1.bf16.msra.mxu0 0
      %593 = vmatprep.subr.bf16.mxu0 0
      %594 = vmatpush1.bf16.msra.mxu0 0
      %595 = vmatprep.subr.bf16.mxu0 0
      %596 = vmatpush1.bf16.msra.mxu0 0
      %597 = vmatprep.subr.bf16.mxu0 0
      %598 = vmatpush1.bf16.msra.mxu0 0
      %599 = vmatprep.subr.bf16.mxu0 0
      %600 = vmatpush1.bf16.msra.mxu0 0
      %601 = vmatprep.subr.bf16.mxu0 0
      %602 = vmatpush1.bf16.msra.mxu0 0
      %603 = vmatprep.subr.bf16.mxu0 0
      %604 = vmatpush1.bf16.msra.mxu0 0
      %605 = vmatprep.subr.bf16.mxu0 0
      %606 = vmatpush1.bf16.msra.mxu0 0
      %607 = vmatprep.subr.bf16.mxu0 0
      %608 = vmatpush1.bf16.msra.mxu0 0
      %609 = vmatprep.subr.bf16.mxu0 0
      %610 = vmatpush1.bf16.msra.mxu0 0
      %611 = vmatprep.subr.bf16.mxu0 0
      %612 = vmatpush1.bf16.msra.mxu0 0
      %613 = vmatprep.subr.bf16.mxu0 0
      %614 = vmatpush1.bf16.msra.mxu0 0
      %615 = vmatprep.subr.bf16.mxu0 0
      %616 = vmatpush1.bf16.msra.mxu0 0
      %617 = vmatprep.mubr.bf16.mxu0 0
      %618 = vmatmul.mubr.bf16.gmra.mrb[0].mxu0 %v579
      %v619 = vpop.f32.mrb[0].mxu0
      %v620 = vadd.f32 0.0, %v619
      %v621 = vpop.f32.mrb[0].mxu0
      %v622 = vpop.f32.mrb[0].mxu0
      %v623 = vpop.f32.mrb[0].mxu0
      %624 = vdwg.mxu0
      %626 = vrot.lane.b32.xlu0 %v495, 120
      %v627 = vpop.permute.xlu0 %626
      %628 = vrot.lane.b32.xlu0 %v575, 120
      %v629 = vpop.permute.xlu0 %628
      %v631 = vsel %vm514, %v627, 0
      %v634 = vsel %vm514, %v629, 0
      %636 = vmatprep.subr.bf16.mxu0 0
      %637 = vmatpush1.bf16.xpose.msra.mxu0 %v634
      %638 = vmatprep.subr.bf16.mxu0 0
      %639 = vmatpush1.bf16.xpose.msra.mxu0 0
      %640 = vmatprep.subr.bf16.mxu0 0
      %641 = vmatpush1.bf16.xpose.msra.mxu0 0
      %642 = vmatprep.subr.bf16.mxu0 0
      %643 = vmatpush1.bf16.xpose.msra.mxu0 0
      %644 = vmatprep.subr.bf16.mxu0 0
      %645 = vmatpush1.bf16.xpose.msra.mxu0 0
      %646 = vmatprep.subr.bf16.mxu0 0
      %647 = vmatpush1.bf16.xpose.msra.mxu0 0
      %648 = vmatprep.subr.bf16.mxu0 0
      %649 = vmatpush1.bf16.xpose.msra.mxu0 0
      %650 = vmatprep.subr.bf16.mxu0 0
      %651 = vmatpush1.bf16.xpose.msra.mxu0 0
      %652 = vmatprep.subr.bf16.mxu0 0
      %653 = vmatpush1.bf16.xpose.msra.mxu0 0
      %654 = vmatprep.subr.bf16.mxu0 0
      %655 = vmatpush1.bf16.xpose.msra.mxu0 0
      %656 = vmatprep.subr.bf16.mxu0 0
      %657 = vmatpush1.bf16.xpose.msra.mxu0 0
      %658 = vmatprep.subr.bf16.mxu0 0
      %659 = vmatpush1.bf16.xpose.msra.mxu0 0
      %660 = vmatprep.subr.bf16.mxu0 0
      %661 = vmatpush1.bf16.xpose.msra.mxu0 0
      %662 = vmatprep.subr.bf16.mxu0 0
      %663 = vmatpush1.bf16.xpose.msra.mxu0 0
      %664 = vmatprep.subr.bf16.mxu0 0
      %665 = vmatpush1.bf16.xpose.msra.mxu0 0
      %666 = vmatprep.subr.bf16.mxu0 0
      %667 = vmatpush1.bf16.xpose.msra.mxu0 0
      %668 = vmatprep.mubr.bf16.mxu0 0
      %669 = vmatmul.mubr.bf16.gmra.mrb[0].mxu0 %v631
      %v670 = vpop.f32.mrb[0].mxu0
      %v671 = vadd.f32 %v513, %v670
      %v672 = vpop.f32.mrb[0].mxu0
      %v673 = vpop.f32.mrb[0].mxu0
      %v674 = vpop.f32.mrb[0].mxu0
      %675 = vdwg.mxu0
      %v676 = vsel %vm514, %v671, -inf
      %677 = vmax.xlane.f32.xlu0 %v676
      %v678 = vpop.xlane.xlu0 %677
      %v679 = vsub.f32 %v671, %v678
      %v680 = vmul.f32 %v679, 1.442695
      %v681 = vpow.pop %v680
      %v682 = vsel %vm514, %v681, 0.0
      %683 = vadd.xlane.f32.xlu0 %v682
      %v684 = vpop.xlane.xlu0 %683
      %v685 = vrcp.pop %v684
      %v686 = vmul.f32 %v681, %v685
      %v687 = vpack.c.bf16 %v686, %v686
      %688 = vrot.lane.b32.xlu0 %v575, 88
      %v689 = vpop.permute.xlu0 %688
      %v691 = vsel %vm514, %v687, 0
      %v694 = vsel %vm581, %v689, 0
      %696 = vmatprep.subr.bf16.mxu0 0
      %697 = vmatpush1.bf16.msra.mxu0 %v694
      %698 = vmatprep.subr.bf16.mxu0 0
      %699 = vmatpush1.bf16.msra.mxu0 0
      %700 = vmatprep.subr.bf16.mxu0 0
      %701 = vmatpush1.bf16.msra.mxu0 0
      %702 = vmatprep.subr.bf16.mxu0 0
      %703 = vmatpush1.bf16.msra.mxu0 0
      %704 = vmatprep.subr.bf16.mxu0 0
      %705 = vmatpush1.bf16.msra.mxu0 0
      %706 = vmatprep.subr.bf16.mxu0 0
      %707 = vmatpush1.bf16.msra.mxu0 0
      %708 = vmatprep.subr.bf16.mxu0 0
      %709 = vmatpush1.bf16.msra.mxu0 0
      %710 = vmatprep.subr.bf16.mxu0 0
      %711 = vmatpush1.bf16.msra.mxu0 0
      %712 = vmatprep.subr.bf16.mxu0 0
      %713 = vmatpush1.bf16.msra.mxu0 0
      %714 = vmatprep.subr.bf16.mxu0 0
      %715 = vmatpush1.bf16.msra.mxu0 0
      %716 = vmatprep.subr.bf16.mxu0 0
      %717 = vmatpush1.bf16.msra.mxu0 0
      %718 = vmatprep.subr.bf16.mxu0 0
      %719 = vmatpush1.bf16.msra.mxu0 0
      %720 = vmatprep.subr.bf16.mxu0 0
      %721 = vmatpush1.bf16.msra.mxu0 0
      %722 = vmatprep.subr.bf16.mxu0 0
      %723 = vmatpush1.bf16.msra.mxu0 0
      %724 = vmatprep.subr.bf16.mxu0 0
      %725 = vmatpush1.bf16.msra.mxu0 0
      %726 = vmatprep.subr.bf16.mxu0 0
      %727 = vmatpush1.bf16.msra.mxu0 0
      %728 = vmatprep.mubr.bf16.mxu0 0
      %729 = vmatmul.mubr.bf16.gmra.mrb[0].mxu0 %v691
      %v730 = vpop.f32.mrb[0].mxu0
      %v731 = vadd.f32 0.0, %v730
      %v732 = vpop.f32.mrb[0].mxu0
      %v733 = vpop.f32.mrb[0].mxu0
      %v734 = vpop.f32.mrb[0].mxu0
      %735 = vdwg.mxu0
      %736 = vrot.lane.b32.xlu0 %v495, 112
      %v737 = vpop.permute.xlu0 %736
      %738 = vrot.lane.b32.xlu0 %v575, 112
      %v739 = vpop.permute.xlu0 %738
      %v741 = vsel %vm514, %v737, 0
      %v744 = vsel %vm514, %v739, 0
      %746 = vmatprep.subr.bf16.mxu0 0
      %747 = vmatpush1.bf16.xpose.msra.mxu0 %v744
      %748 = vmatprep.subr.bf16.mxu0 0
      %749 = vmatpush1.bf16.xpose.msra.mxu0 0
      %750 = vmatprep.subr.bf16.mxu0 0
      %751 = vmatpush1.bf16.xpose.msra.mxu0 0
      %752 = vmatprep.subr.bf16.mxu0 0
      %753 = vmatpush1.bf16.xpose.msra.mxu0 0
      %754 = vmatprep.subr.bf16.mxu0 0
      %755 = vmatpush1.bf16.xpose.msra.mxu0 0
      %756 = vmatprep.subr.bf16.mxu0 0
      %757 = vmatpush1.bf16.xpose.msra.mxu0 0
      %758 = vmatprep.subr.bf16.mxu0 0
      %759 = vmatpush1.bf16.xpose.msra.mxu0 0
      %760 = vmatprep.subr.bf16.mxu0 0
      %761 = vmatpush1.bf16.xpose.msra.mxu0 0
      %762 = vmatprep.subr.bf16.mxu0 0
      %763 = vmatpush1.bf16.xpose.msra.mxu0 0
      %764 = vmatprep.subr.bf16.mxu0 0
      %765 = vmatpush1.bf16.xpose.msra.mxu0 0
      %766 = vmatprep.subr.bf16.mxu0 0
      %767 = vmatpush1.bf16.xpose.msra.mxu0 0
      %768 = vmatprep.subr.bf16.mxu0 0
      %769 = vmatpush1.bf16.xpose.msra.mxu0 0
      %770 = vmatprep.subr.bf16.mxu0 0
      %771 = vmatpush1.bf16.xpose.msra.mxu0 0
      %772 = vmatprep.subr.bf16.mxu0 0
      %773 = vmatpush1.bf16.xpose.msra.mxu0 0
      %774 = vmatprep.subr.bf16.mxu0 0
      %775 = vmatpush1.bf16.xpose.msra.mxu0 0
      %776 = vmatprep.subr.bf16.mxu0 0
      %777 = vmatpush1.bf16.xpose.msra.mxu0 0
      %778 = vmatprep.mubr.bf16.mxu0 0
      %779 = vmatmul.mubr.bf16.gmra.mrb[0].mxu0 %v741
      %v780 = vpop.f32.mrb[0].mxu0
      %v781 = vadd.f32 %v513, %v780
      %v782 = vpop.f32.mrb[0].mxu0
      %v783 = vpop.f32.mrb[0].mxu0
      %v784 = vpop.f32.mrb[0].mxu0
      %785 = vdwg.mxu0
      %v786 = vsel %vm514, %v781, -inf
      %787 = vmax.xlane.f32.xlu0 %v786
      %v788 = vpop.xlane.xlu0 %787
      %v789 = vsub.f32 %v781, %v788
      %v790 = vmul.f32 %v789, 1.442695
      %v791 = vpow.pop %v790
      %v792 = vsel %vm514, %v791, 0.0
      %793 = vadd.xlane.f32.xlu0 %v792
      %v794 = vpop.xlane.xlu0 %793
      %v795 = vrcp.pop %v794
      %v796 = vmul.f32 %v791, %v795
      %v797 = vpack.c.bf16 %v796, %v796
      %798 = vrot.lane.b32.xlu0 %v575, 80
      %v799 = vpop.permute.xlu0 %798
      %v801 = vsel %vm514, %v797, 0
      %v804 = vsel %vm581, %v799, 0
      %806 = vmatprep.subr.bf16.mxu0 0
      %807 = vmatpush1.bf16.msra.mxu0 %v804
      %808 = vmatprep.subr.bf16.mxu0 0
      %809 = vmatpush1.bf16.msra.mxu0 0
      %810 = vmatprep.subr.bf16.mxu0 0
      %811 = vmatpush1.bf16.msra.mxu0 0
      %812 = vmatprep.subr.bf16.mxu0 0
      %813 = vmatpush1.bf16.msra.mxu0 0
      %814 = vmatprep.subr.bf16.mxu0 0
      %815 = vmatpush1.bf16.msra.mxu0 0
      %816 = vmatprep.subr.bf16.mxu0 0
      %817 = vmatpush1.bf16.msra.mxu0 0
      %818 = vmatprep.subr.bf16.mxu0 0
      %819 = vmatpush1.bf16.msra.mxu0 0
      %820 = vmatprep.subr.bf16.mxu0 0
      %821 = vmatpush1.bf16.msra.mxu0 0
      %822 = vmatprep.subr.bf16.mxu0 0
      %823 = vmatpush1.bf16.msra.mxu0 0
      %824 = vmatprep.subr.bf16.mxu0 0
      %825 = vmatpush1.bf16.msra.mxu0 0
      %826 = vmatprep.subr.bf16.mxu0 0
      %827 = vmatpush1.bf16.msra.mxu0 0
      %828 = vmatprep.subr.bf16.mxu0 0
      %829 = vmatpush1.bf16.msra.mxu0 0
      %830 = vmatprep.subr.bf16.mxu0 0
      %831 = vmatpush1.bf16.msra.mxu0 0
      %832 = vmatprep.subr.bf16.mxu0 0
      %833 = vmatpush1.bf16.msra.mxu0 0
      %834 = vmatprep.subr.bf16.mxu0 0
      %835 = vmatpush1.bf16.msra.mxu0 0
      %836 = vmatprep.subr.bf16.mxu0 0
      %837 = vmatpush1.bf16.msra.mxu0 0
      %838 = vmatprep.mubr.bf16.mxu0 0
      %839 = vmatmul.mubr.bf16.gmra.mrb[0].mxu0 %v801
      %v840 = vpop.f32.mrb[0].mxu0
      %v841 = vadd.f32 0.0, %v840
      %v842 = vpop.f32.mrb[0].mxu0
      %v843 = vpop.f32.mrb[0].mxu0
      %v844 = vpop.f32.mrb[0].mxu0
      %845 = vdwg.mxu0
      %846 = vrot.lane.b32.xlu0 %v495, 104
      %v847 = vpop.permute.xlu0 %846
      %848 = vrot.lane.b32.xlu0 %v575, 104
      %v849 = vpop.permute.xlu0 %848
      %v851 = vsel %vm514, %v847, 0
      %v854 = vsel %vm514, %v849, 0
      %856 = vmatprep.subr.bf16.mxu0 0
      %857 = vmatpush1.bf16.xpose.msra.mxu0 %v854
      %858 = vmatprep.subr.bf16.mxu0 0
      %859 = vmatpush1.bf16.xpose.msra.mxu0 0
      %860 = vmatprep.subr.bf16.mxu0 0
      %861 = vmatpush1.bf16.xpose.msra.mxu0 0
      %862 = vmatprep.subr.bf16.mxu0 0
      %863 = vmatpush1.bf16.xpose.msra.mxu0 0
      %864 = vmatprep.subr.bf16.mxu0 0
      %865 = vmatpush1.bf16.xpose.msra.mxu0 0
      %866 = vmatprep.subr.bf16.mxu0 0
      %867 = vmatpush1.bf16.xpose.msra.mxu0 0
      %868 = vmatprep.subr.bf16.mxu0 0
      %869 = vmatpush1.bf16.xpose.msra.mxu0 0
      %870 = vmatprep.subr.bf16.mxu0 0
      %871 = vmatpush1.bf16.xpose.msra.mxu0 0
      %872 = vmatprep.subr.bf16.mxu0 0
      %873 = vmatpush1.bf16.xpose.msra.mxu0 0
      %874 = vmatprep.subr.bf16.mxu0 0
      %875 = vmatpush1.bf16.xpose.msra.mxu0 0
      %876 = vmatprep.subr.bf16.mxu0 0
      %877 = vmatpush1.bf16.xpose.msra.mxu0 0
      %878 = vmatprep.subr.bf16.mxu0 0
      %879 = vmatpush1.bf16.xpose.msra.mxu0 0
      %880 = vmatprep.subr.bf16.mxu0 0
      %881 = vmatpush1.bf16.xpose.msra.mxu0 0
      %882 = vmatprep.subr.bf16.mxu0 0
      %883 = vmatpush1.bf16.xpose.msra.mxu0 0
      %884 = vmatprep.subr.bf16.mxu0 0
      %885 = vmatpush1.bf16.xpose.msra.mxu0 0
      %886 = vmatprep.subr.bf16.mxu0 0
      %887 = vmatpush1.bf16.xpose.msra.mxu0 0
      %888 = vmatprep.mubr.bf16.mxu0 0
      %889 = vmatmul.mubr.bf16.gmra.mrb[0].mxu0 %v851
      %v890 = vpop.f32.mrb[0].mxu0
      %v891 = vadd.f32 %v513, %v890
      %v892 = vpop.f32.mrb[0].mxu0
      %v893 = vpop.f32.mrb[0].mxu0
      %v894 = vpop.f32.mrb[0].mxu0
      %895 = vdwg.mxu0
      %v896 = vsel %vm514, %v891, -inf
      %897 = vmax.xlane.f32.xlu0 %v896
      %v898 = vpop.xlane.xlu0 %897
      %v899 = vsub.f32 %v891, %v898
      %v900 = vmul.f32 %v899, 1.442695
      %v901 = vpow.pop %v900
      %v902 = vsel %vm514, %v901, 0.0
      %903 = vadd.xlane.f32.xlu0 %v902
      %v904 = vpop.xlane.xlu0 %903
      %v905 = vrcp.pop %v904
      %v906 = vmul.f32 %v901, %v905
      %v907 = vpack.c.bf16 %v906, %v906
      %908 = vrot.lane.b32.xlu0 %v575, 72
      %v909 = vpop.permute.xlu0 %908
      %v911 = vsel %vm514, %v907, 0
      %v914 = vsel %vm581, %v909, 0
      %916 = vmatprep.subr.bf16.mxu0 0
      %917 = vmatpush1.bf16.msra.mxu0 %v914
      %918 = vmatprep.subr.bf16.mxu0 0
      %919 = vmatpush1.bf16.msra.mxu0 0
      %920 = vmatprep.subr.bf16.mxu0 0
      %921 = vmatpush1.bf16.msra.mxu0 0
      %922 = vmatprep.subr.bf16.mxu0 0
      %923 = vmatpush1.bf16.msra.mxu0 0
      %924 = vmatprep.subr.bf16.mxu0 0
      %925 = vmatpush1.bf16.msra.mxu0 0
      %926 = vmatprep.subr.bf16.mxu0 0
      %927 = vmatpush1.bf16.msra.mxu0 0
      %928 = vmatprep.subr.bf16.mxu0 0
      %929 = vmatpush1.bf16.msra.mxu0 0
      %930 = vmatprep.subr.bf16.mxu0 0
      %931 = vmatpush1.bf16.msra.mxu0 0
      %932 = vmatprep.subr.bf16.mxu0 0
      %933 = vmatpush1.bf16.msra.mxu0 0
      %934 = vmatprep.subr.bf16.mxu0 0
      %935 = vmatpush1.bf16.msra.mxu0 0
      %936 = vmatprep.subr.bf16.mxu0 0
      %937 = vmatpush1.bf16.msra.mxu0 0
      %938 = vmatprep.subr.bf16.mxu0 0
      %939 = vmatpush1.bf16.msra.mxu0 0
      %940 = vmatprep.subr.bf16.mxu0 0
      %941 = vmatpush1.bf16.msra.mxu0 0
      %942 = vmatprep.subr.bf16.mxu0 0
      %943 = vmatpush1.bf16.msra.mxu0 0
      %944 = vmatprep.subr.bf16.mxu0 0
      %945 = vmatpush1.bf16.msra.mxu0 0
      %946 = vmatprep.subr.bf16.mxu0 0
      %947 = vmatpush1.bf16.msra.mxu0 0
      %948 = vmatprep.mubr.bf16.mxu0 0
      %949 = vmatmul.mubr.bf16.gmra.mrb[0].mxu0 %v911
      %v950 = vpop.f32.mrb[0].mxu0
      %v951 = vadd.f32 0.0, %v950
      %v952 = vpop.f32.mrb[0].mxu0
      %v953 = vpop.f32.mrb[0].mxu0
      %v954 = vpop.f32.mrb[0].mxu0
      %955 = vdwg.mxu0
      %957 = vrot.lane.b32.xlu0 %v731, 8
      %v958 = vpop.permute.xlu0 %957
      %961 = vrot.lane.b32.xlu0 %v841, 16
      %v962 = vpop.permute.xlu0 %961
      %965 = vrot.lane.b32.xlu0 %v951, 24
      %v966 = vpop.permute.xlu0 %965
      %v968 = vsel %vm514, %v620, %v958
      %vm969 = vcmask 130048
      %v970 = vsel %vm969, %v968, %v962
      %vm971 = vcmask 195584
      %v972 = vsel %vm971, %v970, %v966
      %v973 = vpack.c.bf16 %v972, %v972
      %v974 = vld [vmem:[%s5] sm:$0xf]
      %v975 = vld [vmem:[%s5 + $0x4] sm:$0xf]
      %v976 = vld [vmem:[%s5 + $0x8] sm:$0xf]
      %v977 = vld [vmem:[%s5 + $0xc] sm:$0xf]
      %v982 = vunpack.c.l.b16 %v974
      %v983 = vunpack.c.l.b16 %v975
      %v984 = vunpack.c.l.b16 %v976
      %v985 = vunpack.c.l.b16 %v977
      %v986 = vpack.c.b16 %v983, %v982
      %v987 = vpack.c.b16 %v985, %v984
      %v991 = vsel %vm451, %v973, 0
      %993 = vmatprep.subr.bf16.mxu0 0
      %994 = vmatpush1.bf16.msra.mxu0 %v986
      %995 = vmatprep.subr.bf16.mxu0 0
      %996 = vmatpush1.bf16.msra.mxu0 %v987
      %997 = vmatprep.subr.bf16.mxu0 0
      %998 = vmatpush1.bf16.msra.mxu0 0
      %999 = vmatprep.subr.bf16.mxu0 0
      %1000 = vmatpush1.bf16.msra.mxu0 0
      %1001 = vmatprep.subr.bf16.mxu0 0
      %1002 = vmatpush1.bf16.msra.mxu0 0
      %1003 = vmatprep.subr.bf16.mxu0 0
      %1004 = vmatpush1.bf16.msra.mxu0 0
      %1005 = vmatprep.subr.bf16.mxu0 0
      %1006 = vmatpush1.bf16.msra.mxu0 0
      %1007 = vmatprep.subr.bf16.mxu0 0
      %1008 = vmatpush1.bf16.msra.mxu0 0
      %1009 = vmatprep.subr.bf16.mxu0 0
      %1010 = vmatpush1.bf16.msra.mxu0 0
      %1011 = vmatprep.subr.bf16.mxu0 0
      %1012 = vmatpush1.bf16.msra.mxu0 0
      %1013 = vmatprep.subr.bf16.mxu0 0
      %1014 = vmatpush1.bf16.msra.mxu0 0
      %1015 = vmatprep.subr.bf16.mxu0 0
      %1016 = vmatpush1.bf16.msra.mxu0 0
      %1017 = vmatprep.subr.bf16.mxu0 0
      %1018 = vmatpush1.bf16.msra.mxu0 0
      %1019 = vmatprep.subr.bf16.mxu0 0
      %1020 = vmatpush1.bf16.msra.mxu0 0
      %1021 = vmatprep.subr.bf16.mxu0 0
      %1022 = vmatpush1.bf16.msra.mxu0 0
      %1023 = vmatprep.subr.bf16.mxu0 0
      %1024 = vmatpush1.bf16.msra.mxu0 0
      %1025 = vmatprep.mubr.bf16.mxu0 0
      %1026 = vmatmul.mubr.bf16.gmra.mrb[0].mxu0 %v991
      %v1027 = vpop.f32.mrb[0].mxu0
      %v1028 = vadd.f32 0.0, %v1027
      %v1029 = vpop.f32.mrb[0].mxu0
      %v1030 = vpop.f32.mrb[0].mxu0
      %v1031 = vpop.f32.mrb[0].mxu0
      %1032 = vdwg.mxu0
      %v1033 = vadd.f32 %v433, %v1028
      %v1034 = vsel %vm451, %v1033, 0.0
      %1035 = vadd.xlane.f32.xlu0 %v1034
      %v1036 = vpop.xlane.xlu0 %1035
      %v1037 = vrcp.pop 32.0
      %v1038 = vmul.f32 %v1036, %v1037
      %v1039 = vsub.f32 %v1033, %v1038
      %v1040 = vmul.f32 %v1039, %v1039
      %v1041 = vsel %vm451, %v1040, 0.0
      %1042 = vadd.xlane.f32.xlu0 %v1041
      %v1043 = vpop.xlane.xlu0 %1042
      %v1044 = vmul.f32 %v1043, %v1037
      %v1045 = vadd.f32 %v1044, 1e-05
      %v1046 = vrsqrt.pop %v1045
      %v1047 = vmul.f32 %v1039, %v1046
      %v1048 = vld [vmem:[%s6] sm:$0x1]
      %v1050 = vlaneseq
      %v1051 = vshrl.u32 %v1050, 7
      %v1052 = vsub.s32 0, %v1051
      %v1053 = vrot.slane %v1048, %v1052
      %v1055 = vmul.f32 %v1047, %v1053
      %v1056 = vld [vmem:[%s7] sm:$0x1]
      %v1058 = vlaneseq
      %v1059 = vshrl.u32 %v1058, 7
      %v1060 = vsub.s32 0, %v1059
      %v1061 = vrot.slane %v1056, %v1060
      %v1063 = vadd.f32 %v1055, %v1061
      %1064 = vst.msk [vmem:[%s362] sm:$0xff] %vm451, %v1063
      %p1065 = scmp.lt.s32.totalorder %s23, 1
      %s1066 = scalar_select %p1065, %s23, 1
      %p1067 = scmp.lt.s32.totalorder %s24, 0
      %s1068 = scalar_select %p1067, %s24, 0
      %s1069 = sadd.s32 %s1068, %s1066
      %s1070 = smul.addr %s1069, 8
      %s1071 = scalar_lea.vmem %s8, %s1070
      // Predicated region
      $region57: #{_lambda_.19} parent=51 // pred_check
        %p1072 = pneg %p236
      $region58: #{_lambda_.19} parent=51 // pred_check_branch
        %1074 = sbr.rel (%p1072) target = $region60
      $region59: #{_lambda_.19} parent=51 // pred_region
        _
      $region60: #{_lambda_.19} parent=51 // pred_fallthru
        _
    $region52: #{_lambda_.19} parent=5 // pred_fallthru
      _
    %p1075 = scmp.le.s32.totalorder 2, %s14
    // Predicated region
    $region61: #{_lambda_.19} parent=5 // pred_check
      %p1076 = pneg %p1075
    $region62: #{_lambda_.19} parent=5 // pred_check_branch
      %1078 = sbr.rel (%p1076) target = $region64
    $region63: #{_lambda_.19} parent=5 // pred_region
      %s1079 = ssub.s32 %s14, 2
      // Predicated region
      $region65: #{_lambda_.19} parent=63 // pred_check
        %p1080 = pneg %p242
      $region66: #{_lambda_.19} parent=63 // pred_check_branch
        %1082 = sbr.rel (%p1080) target = $region68
      $region67: #{_lambda_.19} parent=63 // pred_region
        %p1083 = scmp.lt.s32.totalorder %s25, 1
        %s1084 = scalar_select %p1083, %s25, 1
        %p1085 = scmp.lt.s32.totalorder %s26, 0
        %s1086 = scalar_select %p1085, %s26, 0
        %s1087 = sadd.s32 %s1086, %s1084
        %s1088 = smul.addr %s1087, 8
        %s1089 = scalar_lea.vmem %s8, %s1088
      $region68: #{_lambda_.19} parent=63 // pred_fallthru
        _
    $region64: #{_lambda_.19} parent=5 // pred_fallthru
      _
  $region6: #{_lambda_.19} parent=0 // loop_footer
    %s18 = sadd.s32 1, %s14
  $region7: #{_lambda_.19} parent=0 // loop_footer_branch
    %13 = sbr.rel target = $region3
  $region8: #{_lambda_.19} parent=0 // loop_exit
    _

// kernel: _lambda_.26
$region0: #{_lambda_.26}
  #allocation0 [shape = 'u32[]', space=smem, size = 0x4, offset = 0x4, fixed_abs, tag = 'smem constant byte address 0x4 - core index']
  #allocation1 [shape = 'u32[144,128]{1,0:T(1,128)}', space=vmem, size = 0x12000, scoped, tag = 'internal scratch']
  %s0 = inlined_call_operand.vmem [shape: f32[16,32], index: 0, kind: input, shape index: {}]
  %s1 = inlined_call_operand.vmem [shape: bf16[32,128], index: 1, kind: input, shape index: {}]
  %s2 = inlined_call_operand.vmem [shape: f32[1,128], index: 2, kind: input, shape index: {}]
  %s3 = inlined_call_operand.vmem [shape: f32[16,128], index: 3, kind: output, shape index: {0}]
  %s4 = inlined_call_operand.vmem [shape: f32[16,1], index: 4, kind: output, shape index: {1}]
  %s5 = inlined_call_operand.vmem [shape: f32[16,1], index: 5, kind: output, shape index: {2}]
  %6 = xla_tuple %s3, %s4, %s5
  %s7 = sld [smem:[#allocation0]]
  $region69: #{_lambda_.26} parent=0
    _
  %s9 = ssub.s32 1, %s7
  %s10 = scalar_select 0, %s9, %s7
  loop: start=0, step=1, limit=4
  $region2: #{_lambda_.26} parent=0 // loop_pre_header
    _
  $region3: #{_lambda_.26} parent=0 // loop_header
    %s12 = sphi 0, %s16
    %p13 = scmp.ge.s32.totalorder %s12, 4
    %s19 = sphi 0, %s31
    %s20 = sphi 0, %s27
    %s21 = sphi 0, %s19
    %s22 = sphi 0, %s20
    %s23 = sphi 0, %s21
    %s24 = sphi 0, %s22
    %s34 = sphi 0, %s36
    %s37 = sphi 0, %s34
    %s38 = sphi 0, %s37
    %s54 = sphi 0, %s38
    %s60 = sphi 0, %s62
    %s63 = sphi 0, %s60
    %s64 = sphi 0, %s63
    %s80 = sphi 0, %s64
    %s86 = sphi 0, %s88
    %s89 = sphi 0, %s86
    %s90 = sphi 0, %s89
    %s106 = sphi 0, %s90
    %s114 = sphi 0, %s116
    %s117 = sphi 0, %s114
    %s118 = sphi 0, %s117
    %s134 = sphi 0, %s118
    %s140 = sphi 0, %s142
    %s143 = sphi 0, %s140
    %s144 = sphi 0, %s143
    %s160 = sphi 0, %s144
    %s166 = sphi 0, %s168
    %s169 = sphi 0, %s166
    %s170 = sphi 0, %s169
    %s186 = sphi 0, %s170
  $region4: #{_lambda_.26} parent=0 // loop_header_branch
    %15 = sbr.rel (%p13) target = $region8
  $region5: #{_lambda_.26} parent=0 // loop_body
    %s17 = ssub.s32 %s12, 1
    %s18 = ssub.s32 %s12, 2
    %s25 = sadd.s32 1, %s20
    %p26 = scmp.ge.s32.totalorder %s25, 1
    %s27 = scalar_select %p26, 0, %s25
    %s28 = sadd.s32 1, %s19
    %s29 = scalar_select %p26, %s28, %s19
    %p30 = scmp.ge.s32.totalorder %s29, 2
    %s31 = scalar_select %p30, 0, %s29
    %s32 = ssub.s32 %s19, %s31
    %p33 = scmp.eq.s32.totalorder %s32, 0
    %s35 = sadd.s32 %s34, 1
    %s36 = scalar_select %p33, %s34, %s35
    %p39 = pneg %p33
    %p40 = scmp.eq.s32.totalorder %s12, 1
    %p41 = por %p39, %p40
    %p42 = scmp.ne.s32.totalorder %s34, %s37
    %p43 = scmp.eq.s32.totalorder %s12, 0
    %p44 = por %p42, %p43
    %p45 = scmp.ne.s32.totalorder %s34, %s37
    %p46 = scmp.eq.s32.totalorder %s17, 1
    %p47 = por %p45, %p46
    %p48 = scmp.ne.s32.totalorder %s37, %s38
    %p49 = scmp.eq.s32.totalorder %s17, 0
    %p50 = por %p48, %p49
    %p51 = scmp.ne.s32.totalorder %s37, %s38
    %p52 = scmp.eq.s32.totalorder %s18, 1
    %p53 = por %p51, %p52
    %p55 = scmp.ne.s32.totalorder %s38, %s54
    %p56 = scmp.eq.s32.totalorder %s18, 0
    %p57 = por %p55, %p56
    %s58 = ssub.s32 %s20, %s27
    %p59 = scmp.eq.s32.totalorder %s58, 0
    %s61 = sadd.s32 %s60, 1
    %s62 = scalar_select %p59, %s60, %s61
    %p65 = pneg %p59
    %p66 = scmp.eq.s32.totalorder %s12, 1
    %p67 = por %p65, %p66
    %p68 = scmp.ne.s32.totalorder %s60, %s63
    %p69 = scmp.eq.s32.totalorder %s12, 0
    %p70 = por %p68, %p69
    %p71 = scmp.ne.s32.totalorder %s60, %s63
    %p72 = scmp.eq.s32.totalorder %s17, 1
    %p73 = por %p71, %p72
    %p74 = scmp.ne.s32.totalorder %s63, %s64
    %p75 = scmp.eq.s32.totalorder %s17, 0
    %p76 = por %p74, %p75
    %p77 = scmp.ne.s32.totalorder %s63, %s64
    %p78 = scmp.eq.s32.totalorder %s18, 1
    %p79 = por %p77, %p78
    %p81 = scmp.ne.s32.totalorder %s64, %s80
    %p82 = scmp.eq.s32.totalorder %s18, 0
    %p83 = por %p81, %p82
    %s84 = ssub.s32 %s20, %s27
    %p85 = scmp.eq.s32.totalorder %s84, 0
    %s87 = sadd.s32 %s86, 1
    %s88 = scalar_select %p85, %s86, %s87
    %p91 = pneg %p85
    %p92 = scmp.eq.s32.totalorder %s12, 1
    %p93 = por %p91, %p92
    %p94 = scmp.ne.s32.totalorder %s86, %s89
    %p95 = scmp.eq.s32.totalorder %s12, 0
    %p96 = por %p94, %p95
    %p97 = scmp.ne.s32.totalorder %s86, %s89
    %p98 = scmp.eq.s32.totalorder %s17, 1
    %p99 = por %p97, %p98
    %p100 = scmp.ne.s32.totalorder %s89, %s90
    %p101 = scmp.eq.s32.totalorder %s17, 0
    %p102 = por %p100, %p101
    %p103 = scmp.ne.s32.totalorder %s89, %s90
    %p104 = scmp.eq.s32.totalorder %s18, 1
    %p105 = por %p103, %p104
    %p107 = scmp.ne.s32.totalorder %s90, %s106
    %p108 = scmp.eq.s32.totalorder %s18, 0
    %p109 = por %p107, %p108
    %s110 = ssub.s32 %s19, %s31
    %s111 = ssub.s32 %s20, %s27
    %s112 = sor.u32 %s110, %s111
    %p113 = scmp.eq.s32.totalorder %s112, 0
    %s115 = sadd.s32 %s114, 1
    %s116 = scalar_select %p113, %s114, %s115
    %p119 = pneg %p113
    %p120 = scmp.eq.s32.totalorder %s12, 1
    %p121 = por %p119, %p120
    %p122 = scmp.ne.s32.totalorder %s114, %s117
    %p123 = scmp.eq.s32.totalorder %s12, 0
    %p124 = por %p122, %p123
    %p125 = scmp.ne.s32.totalorder %s114, %s117
    %p126 = scmp.eq.s32.totalorder %s17, 1
    %p127 = por %p125, %p126
    %p128 = scmp.ne.s32.totalorder %s117, %s118
    %p129 = scmp.eq.s32.totalorder %s17, 0
    %p130 = por %p128, %p129
    %p131 = scmp.ne.s32.totalorder %s117, %s118
    %p132 = scmp.eq.s32.totalorder %s18, 1
    %p133 = por %p131, %p132
    %p135 = scmp.ne.s32.totalorder %s118, %s134
    %p136 = scmp.eq.s32.totalorder %s18, 0
    %p137 = por %p135, %p136
    %s138 = ssub.s32 %s19, %s31
    %p139 = scmp.eq.s32.totalorder %s138, 0
    %s141 = sadd.s32 %s140, 1
    %s142 = scalar_select %p139, %s140, %s141
    %p145 = pneg %p139
    %p146 = scmp.eq.s32.totalorder %s12, 1
    %p147 = por %p145, %p146
    %p148 = scmp.ne.s32.totalorder %s140, %s143
    %p149 = scmp.eq.s32.totalorder %s12, 0
    %p150 = por %p148, %p149
    %p151 = scmp.ne.s32.totalorder %s140, %s143
    %p152 = scmp.eq.s32.totalorder %s17, 1
    %p153 = por %p151, %p152
    %p154 = scmp.ne.s32.totalorder %s143, %s144
    %p155 = scmp.eq.s32.totalorder %s17, 0
    %p156 = por %p154, %p155
    %p157 = scmp.ne.s32.totalorder %s143, %s144
    %p158 = scmp.eq.s32.totalorder %s18, 1
    %p159 = por %p157, %p158
    %p161 = scmp.ne.s32.totalorder %s144, %s160
    %p162 = scmp.eq.s32.totalorder %s18, 0
    %p163 = por %p161, %p162
    %s164 = ssub.s32 %s19, %s31
    %p165 = scmp.eq.s32.totalorder %s164, 0
    %s167 = sadd.s32 %s166, 1
    %s168 = scalar_select %p165, %s166, %s167
    %p171 = pneg %p165
    %p172 = scmp.eq.s32.totalorder %s12, 1
    %p173 = por %p171, %p172
    %p174 = scmp.ne.s32.totalorder %s166, %s169
    %p175 = scmp.eq.s32.totalorder %s12, 0
    %p176 = por %p174, %p175
    %p177 = scmp.ne.s32.totalorder %s166, %s169
    %p178 = scmp.eq.s32.totalorder %s17, 1
    %p179 = por %p177, %p178
    %p180 = scmp.ne.s32.totalorder %s169, %s170
    %p181 = scmp.eq.s32.totalorder %s17, 0
    %p182 = por %p180, %p181
    %p183 = scmp.ne.s32.totalorder %s169, %s170
    %p184 = scmp.eq.s32.totalorder %s18, 1
    %p185 = por %p183, %p184
    %p187 = scmp.ne.s32.totalorder %s170, %s186
    %p188 = scmp.eq.s32.totalorder %s18, 0
    %p189 = por %p187, %p188
    %p190 = scmp.le.s32.totalorder 1, %s12
    %p191 = scmp.lt.s32.totalorder %s12, 3
    %p192 = pnand %p190, %p191
    %p193 = pneg %p192
    // Predicated region
    $region9: #{_lambda_.26} parent=5 // pred_check
      _
    $region10: #{_lambda_.26} parent=5 // pred_check_branch
      %195 = sbr.rel (%p192) target = $region12
    $region11: #{_lambda_.26} parent=5 // pred_region
      %s196 = ssub.s32 %s12, 1
      // Predicated region
      $region13: #{_lambda_.26} parent=11 // pred_check
        %p197 = pneg %p76
      $region14: #{_lambda_.26} parent=11 // pred_check_branch
        %199 = sbr.rel (%p197) target = $region16
      $region15: #{_lambda_.26} parent=11 // pred_region
        %p200 = scmp.lt.s32.totalorder %s22, 0
        %s201 = scalar_select %p200, %s22, 0
        %s202 = smul.addr %s201, 4
        %s203 = scalar_lea.vmem %s1, %s202
      $region16: #{_lambda_.26} parent=11 // pred_fallthru
        _
      // Predicated region
      $region17: #{_lambda_.26} parent=11 // pred_check
        %p204 = pneg %p102
      $region18: #{_lambda_.26} parent=11 // pred_check_branch
        %206 = sbr.rel (%p204) target = $region20
      $region19: #{_lambda_.26} parent=11 // pred_region
        %p207 = scmp.lt.s32.totalorder %s22, 0
        %s208 = scalar_select %p207, %s22, 0
        %s209 = scalar_lea.vmem %s2, %s208
      $region20: #{_lambda_.26} parent=11 // pred_fallthru
        _
    $region12: #{_lambda_.26} parent=5 // pred_fallthru
      _
    %p210 = scmp.lt.s32.totalorder %s12, 2
    // Predicated region
    $region21: #{_lambda_.26} parent=5 // pred_check
      %p211 = pneg %p210
    $region22: #{_lambda_.26} parent=5 // pred_check_branch
      %213 = sbr.rel (%p211) target = $region24
    $region23: #{_lambda_.26} parent=5 // pred_region
      // Predicated region
      $region25: #{_lambda_.26} parent=23 // pred_check
        %p214 = pneg %p44
      $region26: #{_lambda_.26} parent=23 // pred_check_branch
        %216 = sbr.rel (%p214) target = $region28
      $region27: #{_lambda_.26} parent=23 // pred_region
        %p217 = scmp.lt.s32.totalorder %s19, 1
        %s218 = scalar_select %p217, %s19, 1
        %s219 = smul.addr %s218, 8
        %s220 = scalar_lea.vmem %s0, %s219
      $region28: #{_lambda_.26} parent=23 // pred_fallthru
        _
    $region24: #{_lambda_.26} parent=5 // pred_fallthru
      _
    %p221 = scmp.le.s32.totalorder 1, %s12
    %p222 = scmp.lt.s32.totalorder %s12, 3
    %p223 = pnand %p221, %p222
    %p224 = pneg %p223
    // Predicated region
    $region29: #{_lambda_.26} parent=5 // pred_check
      _
    $region30: #{_lambda_.26} parent=5 // pred_check_branch
      %226 = sbr.rel (%p223) target = $region32
    $region31: #{_lambda_.26} parent=5 // pred_region
      %s227 = ssub.s32 %s12, 1
      %p228 = scmp.lt.s32.totalorder %s21, 1
      %s229 = scalar_select %p228, %s21, 1
      %s230 = smul.addr %s229, 8
      %s231 = scalar_lea.vmem %s0, %s230
      %p232 = pneg %p50
      %p233 = pneg %p47
      %p234 = scmp.lt.s32.totalorder %s22, 0
      %s235 = scalar_select %p234, %s22, 0
      %s236 = smul.addr %s235, 4
      %s237 = scalar_lea.vmem %s1, %s236
      %p238 = pneg %p76
      %p239 = pneg %p73
      %p240 = scmp.lt.s32.totalorder %s22, 0
      %s241 = scalar_select %p240, %s22, 0
      %s242 = scalar_lea.vmem %s2, %s241
      %p243 = pneg %p102
      %p244 = pneg %p99
      %p245 = pneg %p130
      %p246 = pneg %p127
      %p247 = scmp.lt.s32.totalorder %s21, 1
      %s248 = scalar_select %p247, %s21, 1
      %p249 = scmp.lt.s32.totalorder %s22, 0
      %s250 = scalar_select %p249, %s22, 0
      %s251 = sadd.s32 %s250, %s248
      %s252 = smul.addr %s251, 8
      %s253 = scalar_lea.vmem %s3, %s252
      %p254 = pneg %p156
      %p255 = pneg %p153
      %p256 = scmp.lt.s32.totalorder %s21, 1
      %s257 = scalar_select %p256, %s21, 1
      %s258 = smul.addr %s257, 8
      %s259 = scalar_lea.vmem %s4, %s258
      %p260 = pneg %p182
      %p261 = pneg %p179
      %p262 = scmp.lt.s32.totalorder %s21, 1
      %s263 = scalar_select %p262, %s21, 1
      %s264 = smul.addr %s263, 8
      %s265 = scalar_lea.vmem %s5, %s264
      %p266 = scmp.lt.s32.totalorder %s21, 1
      %s267 = scalar_select %p266, %s21, 1
      %s268 = smul.addr %s267, 8
      %s269 = scalar_lea.vmem %s0, %s268
      %p270 = scmp.lt.s32.totalorder %s22, 0
      %s271 = scalar_select %p270, %s22, 0
      %s272 = smul.addr %s271, 4
      %s273 = scalar_lea.vmem %s1, %s272
      %p274 = scmp.lt.s32.totalorder %s22, 0
      %s275 = scalar_select %p274, %s22, 0
      %s276 = scalar_lea.vmem %s2, %s275
      %p277 = scmp.lt.s32.totalorder %s21, 1
      %s278 = scalar_select %p277, %s21, 1
      %p279 = scmp.lt.s32.totalorder %s22, 0
      %s280 = scalar_select %p279, %s22, 0
      %s281 = sadd.s32 %s280, %s278
      %s282 = smul.addr %s281, 8
      %s283 = scalar_lea.vmem %s3, %s282
      %p284 = scmp.lt.s32.totalorder %s21, 1
      %s285 = scalar_select %p284, %s21, 1
      %s286 = smul.addr %s285, 8
      %s287 = scalar_lea.vmem %s4, %s286
      %p288 = scmp.lt.s32.totalorder %s21, 1
      %s289 = scalar_select %p288, %s21, 1
      %s290 = smul.addr %s289, 8
      %s291 = scalar_lea.vmem %s5, %s290
      %v293 = vld [vmem:[%s269] sm:$0xff]
      %v294 = vpack.c.bf16 %v293, %v293
      %v295 = vld [vmem:[%s273] sm:$0xf]
      %v296 = vld [vmem:[%s273 + $0x4] sm:$0xf]
      %v297 = vld [vmem:[%s273 + $0x8] sm:$0xf]
      %v298 = vld [vmem:[%s273 + $0xc] sm:$0xf]
      %v299 = vld [vmem:[%s276] sm:$0x1]
      %v301 = vlaneseq
      %v302 = vshrl.u32 %v301, 7
      %v303 = vsub.s32 0, %v302
      %v304 = vrot.slane %v299, %v303
      %v310 = vunpack.c.l.b16 %v295
      %v311 = vunpack.c.l.b16 %v296
      %v312 = vunpack.c.l.b16 %v297
      %v313 = vunpack.c.l.b16 %v298
      %v314 = vpack.c.b16 %v311, %v310
      %v315 = vpack.c.b16 %v313, %v312
      %vm318 = vcmask 261120
      %v320 = vsel %vm318, %v294, 0
      %322 = vmatprep.subr.bf16.mxu0 0
      %323 = vmatpush1.bf16.msra.mxu0 %v314
      %324 = vmatprep.subr.bf16.mxu0 0
      %325 = vmatpush1.bf16.msra.mxu0 %v315
      %326 = vmatprep.subr.bf16.mxu0 0
      %327 = vmatpush1.bf16.msra.mxu0 0
      %328 = vmatprep.subr.bf16.mxu0 0
      %329 = vmatpush1.bf16.msra.mxu0 0
      %330 = vmatprep.subr.bf16.mxu0 0
      %331 = vmatpush1.bf16.msra.mxu0 0
      %332 = vmatprep.subr.bf16.mxu0 0
      %333 = vmatpush1.bf16.msra.mxu0 0
      %334 = vmatprep.subr.bf16.mxu0 0
      %335 = vmatpush1.bf16.msra.mxu0 0
      %336 = vmatprep.subr.bf16.mxu0 0
      %337 = vmatpush1.bf16.msra.mxu0 0
      %338 = vmatprep.subr.bf16.mxu0 0
      %339 = vmatpush1.bf16.msra.mxu0 0
      %340 = vmatprep.subr.bf16.mxu0 0
      %341 = vmatpush1.bf16.msra.mxu0 0
      %342 = vmatprep.subr.bf16.mxu0 0
      %343 = vmatpush1.bf16.msra.mxu0 0
      %344 = vmatprep.subr.bf16.mxu0 0
      %345 = vmatpush1.bf16.msra.mxu0 0
      %346 = vmatprep.subr.bf16.mxu0 0
      %347 = vmatpush1.bf16.msra.mxu0 0
      %348 = vmatprep.subr.bf16.mxu0 0
      %349 = vmatpush1.bf16.msra.mxu0 0
      %350 = vmatprep.subr.bf16.mxu0 0
      %351 = vmatpush1.bf16.msra.mxu0 0
      %352 = vmatprep.subr.bf16.mxu0 0
      %353 = vmatpush1.bf16.msra.mxu0 0
      %354 = vmatprep.mubr.bf16.mxu0 0
      %355 = vmatmul.mubr.bf16.gmra.mrb[0].mxu0 %v320
      %v356 = vpop.f32.mrb[0].mxu0
      %v357 = vadd.f32 %v304, %v356
      %v358 = vpop.f32.mrb[0].mxu0
      %v359 = vpop.f32.mrb[0].mxu0
      %v360 = vpop.f32.mrb[0].mxu0
      %361 = vdwg.mxu0
      %362 = vst [vmem:[%s283] sm:$0xff] %v357
      %363 = vmax.xlane.f32.xlu0 %v357
      %v364 = vpop.xlane.xlu0 %363
      %p365 = scmp.eq.s32.totalorder %s22, 0
      // Predicated region
      $region33: #{_lambda_.26} parent=31 // pred_check
        %p366 = pneg %p365
      $region34: #{_lambda_.26} parent=31 // pred_check_branch
        %368 = sbr.rel (%p366) target = $region36
      $region35: #{_lambda_.26} parent=31 // pred_region
        %vm369 = vcmask 7168
        %370 = vst.msk [vmem:[%s287] sm:$0xff] %vm369, %v364
        %v371 = vsub.f32 %v357, %v364
        %v372 = vmul.f32 %v371, 1.442695
        %v373 = vpow.pop %v372
        %374 = vadd.xlane.f32.xlu0 %v373
        %v375 = vpop.xlane.xlu0 %374
        %376 = vst.msk [vmem:[%s291] sm:$0xff] %vm369, %v375
      $region36: #{_lambda_.26} parent=31 // pred_fallthru
        _
      %p377 = scmp.gt.s32.totalorder %s22, 0
      // Predicated region
      $region37: #{_lambda_.26} parent=31 // pred_check
        %p378 = pneg %p377
      $region38: #{_lambda_.26} parent=31 // pred_check_branch
        %380 = sbr.rel (%p378) target = $region40
      $region39: #{_lambda_.26} parent=31 // pred_region
        %v381 = vld [vmem:[%s287] sm:$0xff]
        %v382 = vmax.f32 %v381, %v364
        %v383 = vld [vmem:[%s291] sm:$0xff]
        %v384 = vsub.f32 %v381, %v382
        %v385 = vmul.f32 %v384, 1.442695
        %v386 = vpow.pop %v385
        %v387 = vmul.f32 %v383, %v386
        %389 = vset.pattern.permute.xlu0 0
        %390 = vperm.xlu0 %389, %v382
        %v391 = vpop.permute.xlu0 %390
        %v393 = vsub.f32 %v357, %v391
        %v394 = vmul.f32 %v393, 1.442695
        %v395 = vpow.pop %v394
        %396 = vadd.xlane.f32.xlu0 %v395
        %v397 = vpop.xlane.xlu0 %396
        %v398 = vadd.f32 %v387, %v397
        %vm399 = vcmask 7168
        %400 = vst.msk [vmem:[%s291] sm:$0xff] %vm399, %v398
        %401 = vst.msk [vmem:[%s287] sm:$0xff] %vm399, %v382
      $region40: #{_lambda_.26} parent=31 // pred_fallthru
        _
      %p402 = scmp.lt.s32.totalorder %s21, 1
      %s403 = scalar_select %p402, %s21, 1
      %p404 = scmp.lt.s32.totalorder %s22, 0
      %s405 = scalar_select %p404, %s22, 0
      %s406 = sadd.s32 %s405, %s403
      %s407 = smul.addr %s406, 8
      %s408 = scalar_lea.vmem %s3, %s407
      %p409 = scmp.lt.s32.totalorder %s21, 1
      %s410 = scalar_select %p409, %s21, 1
      %s411 = smul.addr %s410, 8
      %s412 = scalar_lea.vmem %s4, %s411
      %p413 = scmp.lt.s32.totalorder %s21, 1
      %s414 = scalar_select %p413, %s21, 1
      %s415 = smul.addr %s414, 8
      %s416 = scalar_lea.vmem %s5, %s415
      // Predicated region
      $region41: #{_lambda_.26} parent=31 // pred_check
        %p417 = pneg %p127
      $region42: #{_lambda_.26} parent=31 // pred_check_branch
        %419 = sbr.rel (%p417) target = $region44
      $region43: #{_lambda_.26} parent=31 // pred_region
        _
      $region44: #{_lambda_.26} parent=31 // pred_fallthru
        _
      // Predicated region
      $region45: #{_lambda_.26} parent=31 // pred_check
        %p420 = pneg %p153
      $region46: #{_lambda_.26} parent=31 // pred_check_branch
        %422 = sbr.rel (%p420) target = $region48
      $region47: #{_lambda_.26} parent=31 // pred_region
        _
      $region48: #{_lambda_.26} parent=31 // pred_fallthru
        _
      // Predicated region
      $region49: #{_lambda_.26} parent=31 // pred_check
        %p423 = pneg %p179
      $region50: #{_lambda_.26} parent=31 // pred_check_branch
        %425 = sbr.rel (%p423) target = $region52
      $region51: #{_lambda_.26} parent=31 // pred_region
        _
      $region52: #{_lambda_.26} parent=31 // pred_fallthru
        _
    $region32: #{_lambda_.26} parent=5 // pred_fallthru
      _
    %p426 = scmp.le.s32.totalorder 2, %s12
    // Predicated region
    $region53: #{_lambda_.26} parent=5 // pred_check
      %p427 = pneg %p426
    $region54: #{_lambda_.26} parent=5 // pred_check_branch
      %429 = sbr.rel (%p427) target = $region56
    $region55: #{_lambda_.26} parent=5 // pred_region
      %s430 = ssub.s32 %s12, 2
      // Predicated region
      $region57: #{_lambda_.26} parent=55 // pred_check
        %p431 = pneg %p133
      $region58: #{_lambda_.26} parent=55 // pred_check_branch
        %433 = sbr.rel (%p431) target = $region60
      $region59: #{_lambda_.26} parent=55 // pred_region
        %p434 = scmp.lt.s32.totalorder %s23, 1
        %s435 = scalar_select %p434, %s23, 1
        %p436 = scmp.lt.s32.totalorder %s24, 0
        %s437 = scalar_select %p436, %s24, 0
        %s438 = sadd.s32 %s437, %s435
        %s439 = smul.addr %s438, 8
        %s440 = scalar_lea.vmem %s3, %s439
      $region60: #{_lambda_.26} parent=55 // pred_fallthru
        _
      // Predicated region
      $region61: #{_lambda_.26} parent=55 // pred_check
        %p441 = pneg %p159
      $region62: #{_lambda_.26} parent=55 // pred_check_branch
        %443 = sbr.rel (%p441) target = $region64
      $region63: #{_lambda_.26} parent=55 // pred_region
        %p444 = scmp.lt.s32.totalorder %s23, 1
        %s445 = scalar_select %p444, %s23, 1
        %s446 = smul.addr %s445, 8
        %s447 = scalar_lea.vmem %s4, %s446
      $region64: #{_lambda_.26} parent=55 // pred_fallthru
        _
      // Predicated region
      $region65: #{_lambda_.26} parent=55 // pred_check
        %p448 = pneg %p185
      $region66: #{_lambda_.26} parent=55 // pred_check_branch
        %450 = sbr.rel (%p448) target = $region68
      $region67: #{_lambda_.26} parent=55 // pred_region
        %p451 = scmp.lt.s32.totalorder %s23, 1
        %s452 = scalar_select %p451, %s23, 1
        %s453 = smul.addr %s452, 8
        %s454 = scalar_lea.vmem %s5, %s453
      $region68: #{_lambda_.26} parent=55 // pred_fallthru
        _
    $region56: #{_lambda_.26} parent=5 // pred_fallthru
      _
  $region6: #{_lambda_.26} parent=0 // loop_footer
    %s16 = sadd.s32 1, %s12
  $region7: #{_lambda_.26} parent=0 // loop_footer_branch
    %11 = sbr.rel target = $region3
  $region8: #{_lambda_.26} parent=0 // loop_exit
    _

// kernel: _lambda_.27
$region0: #{_lambda_.27}
  #allocation0 [shape = 'u32[]', space=smem, size = 0x4, offset = 0x4, fixed_abs, tag = 'smem constant byte address 0x4 - core index']
  #allocation1 [shape = 'u32[144,128]{1,0:T(1,128)}', space=vmem, size = 0x12000, scoped, tag = 'internal scratch']
  %s0 = inlined_call_operand.vmem [shape: f32[16,128], index: 0, kind: input, shape index: {}]
  %s1 = inlined_call_operand.vmem [shape: f32[16,1], index: 1, kind: input, shape index: {}]
  %s2 = inlined_call_operand.vmem [shape: f32[16,1], index: 2, kind: input, shape index: {}]
  %s3 = inlined_call_operand.vmem [shape: f32[16,128], index: 3, kind: output, shape index: {}]
  %s4 = sld [smem:[#allocation0]]
  $region45: #{_lambda_.27} parent=0
    _
  %s6 = ssub.s32 1, %s4
  %s7 = scalar_select 0, %s6, %s4
  loop: start=0, step=1, limit=4
  $region2: #{_lambda_.27} parent=0 // loop_pre_header
    _
  $region3: #{_lambda_.27} parent=0 // loop_header
    %s9 = sphi 0, %s13
    %p10 = scmp.ge.s32.totalorder %s9, 4
    %s16 = sphi 0, %s28
    %s17 = sphi 0, %s24
    %s18 = sphi 0, %s16
    %s19 = sphi 0, %s17
    %s20 = sphi 0, %s18
    %s21 = sphi 0, %s19
    %s33 = sphi 0, %s35
    %s36 = sphi 0, %s33
    %s37 = sphi 0, %s36
    %s53 = sphi 0, %s37
    %s59 = sphi 0, %s61
    %s62 = sphi 0, %s59
    %s63 = sphi 0, %s62
    %s79 = sphi 0, %s63
    %s85 = sphi 0, %s87
    %s88 = sphi 0, %s85
    %s89 = sphi 0, %s88
    %s105 = sphi 0, %s89
    %s113 = sphi 0, %s115
    %s116 = sphi 0, %s113
    %s117 = sphi 0, %s116
    %s133 = sphi 0, %s117
  $region4: #{_lambda_.27} parent=0 // loop_header_branch
    %12 = sbr.rel (%p10) target = $region8
  $region5: #{_lambda_.27} parent=0 // loop_body
    %s14 = ssub.s32 %s9, 1
    %s15 = ssub.s32 %s9, 2
    %s22 = sadd.s32 1, %s17
    %p23 = scmp.ge.s32.totalorder %s22, 1
    %s24 = scalar_select %p23, 0, %s22
    %s25 = sadd.s32 1, %s16
    %s26 = scalar_select %p23, %s25, %s16
    %p27 = scmp.ge.s32.totalorder %s26, 2
    %s28 = scalar_select %p27, 0, %s26
    %s29 = ssub.s32 %s16, %s28
    %s30 = ssub.s32 %s17, %s24
    %s31 = sor.u32 %s29, %s30
    %p32 = scmp.eq.s32.totalorder %s31, 0
    %s34 = sadd.s32 %s33, 1
    %s35 = scalar_select %p32, %s33, %s34
    %p38 = pneg %p32
    %p39 = scmp.eq.s32.totalorder %s9, 1
    %p40 = por %p38, %p39
    %p41 = scmp.ne.s32.totalorder %s33, %s36
    %p42 = scmp.eq.s32.totalorder %s9, 0
    %p43 = por %p41, %p42
    %p44 = scmp.ne.s32.totalorder %s33, %s36
    %p45 = scmp.eq.s32.totalorder %s14, 1
    %p46 = por %p44, %p45
    %p47 = scmp.ne.s32.totalorder %s36, %s37
    %p48 = scmp.eq.s32.totalorder %s14, 0
    %p49 = por %p47, %p48
    %p50 = scmp.ne.s32.totalorder %s36, %s37
    %p51 = scmp.eq.s32.totalorder %s15, 1
    %p52 = por %p50, %p51
    %p54 = scmp.ne.s32.totalorder %s37, %s53
    %p55 = scmp.eq.s32.totalorder %s15, 0
    %p56 = por %p54, %p55
    %s57 = ssub.s32 %s16, %s28
    %p58 = scmp.eq.s32.totalorder %s57, 0
    %s60 = sadd.s32 %s59, 1
    %s61 = scalar_select %p58, %s59, %s60
    %p64 = pneg %p58
    %p65 = scmp.eq.s32.totalorder %s9, 1
    %p66 = por %p64, %p65
    %p67 = scmp.ne.s32.totalorder %s59, %s62
    %p68 = scmp.eq.s32.totalorder %s9, 0
    %p69 = por %p67, %p68
    %p70 = scmp.ne.s32.totalorder %s59, %s62
    %p71 = scmp.eq.s32.totalorder %s14, 1
    %p72 = por %p70, %p71
    %p73 = scmp.ne.s32.totalorder %s62, %s63
    %p74 = scmp.eq.s32.totalorder %s14, 0
    %p75 = por %p73, %p74
    %p76 = scmp.ne.s32.totalorder %s62, %s63
    %p77 = scmp.eq.s32.totalorder %s15, 1
    %p78 = por %p76, %p77
    %p80 = scmp.ne.s32.totalorder %s63, %s79
    %p81 = scmp.eq.s32.totalorder %s15, 0
    %p82 = por %p80, %p81
    %s83 = ssub.s32 %s16, %s28
    %p84 = scmp.eq.s32.totalorder %s83, 0
    %s86 = sadd.s32 %s85, 1
    %s87 = scalar_select %p84, %s85, %s86
    %p90 = pneg %p84
    %p91 = scmp.eq.s32.totalorder %s9, 1
    %p92 = por %p90, %p91
    %p93 = scmp.ne.s32.totalorder %s85, %s88
    %p94 = scmp.eq.s32.totalorder %s9, 0
    %p95 = por %p93, %p94
    %p96 = scmp.ne.s32.totalorder %s85, %s88
    %p97 = scmp.eq.s32.totalorder %s14, 1
    %p98 = por %p96, %p97
    %p99 = scmp.ne.s32.totalorder %s88, %s89
    %p100 = scmp.eq.s32.totalorder %s14, 0
    %p101 = por %p99, %p100
    %p102 = scmp.ne.s32.totalorder %s88, %s89
    %p103 = scmp.eq.s32.totalorder %s15, 1
    %p104 = por %p102, %p103
    %p106 = scmp.ne.s32.totalorder %s89, %s105
    %p107 = scmp.eq.s32.totalorder %s15, 0
    %p108 = por %p106, %p107
    %s109 = ssub.s32 %s16, %s28
    %s110 = ssub.s32 %s17, %s24
    %s111 = sor.u32 %s109, %s110
    %p112 = scmp.eq.s32.totalorder %s111, 0
    %s114 = sadd.s32 %s113, 1
    %s115 = scalar_select %p112, %s113, %s114
    %p118 = pneg %p112
    %p119 = scmp.eq.s32.totalorder %s9, 1
    %p120 = por %p118, %p119
    %p121 = scmp.ne.s32.totalorder %s113, %s116
    %p122 = scmp.eq.s32.totalorder %s9, 0
    %p123 = por %p121, %p122
    %p124 = scmp.ne.s32.totalorder %s113, %s116
    %p125 = scmp.eq.s32.totalorder %s14, 1
    %p126 = por %p124, %p125
    %p127 = scmp.ne.s32.totalorder %s116, %s117
    %p128 = scmp.eq.s32.totalorder %s14, 0
    %p129 = por %p127, %p128
    %p130 = scmp.ne.s32.totalorder %s116, %s117
    %p131 = scmp.eq.s32.totalorder %s15, 1
    %p132 = por %p130, %p131
    %p134 = scmp.ne.s32.totalorder %s117, %s133
    %p135 = scmp.eq.s32.totalorder %s15, 0
    %p136 = por %p134, %p135
    %p137 = scmp.le.s32.totalorder 1, %s9
    %p138 = scmp.lt.s32.totalorder %s9, 3
    %p139 = pnand %p137, %p138
    %p140 = pneg %p139
    // Predicated region
    $region9: #{_lambda_.27} parent=5 // pred_check
      _
    $region10: #{_lambda_.27} parent=5 // pred_check_branch
      %142 = sbr.rel (%p139) target = $region12
    $region11: #{_lambda_.27} parent=5 // pred_region
      %s143 = ssub.s32 %s9, 1
    $region12: #{_lambda_.27} parent=5 // pred_fallthru
      _
    %p144 = scmp.lt.s32.totalorder %s9, 2
    // Predicated region
    $region13: #{_lambda_.27} parent=5 // pred_check
      %p145 = pneg %p144
    $region14: #{_lambda_.27} parent=5 // pred_check_branch
      %147 = sbr.rel (%p145) target = $region16
    $region15: #{_lambda_.27} parent=5 // pred_region
      // Predicated region
      $region17: #{_lambda_.27} parent=15 // pred_check
        %p148 = pneg %p43
      $region18: #{_lambda_.27} parent=15 // pred_check_branch
        %150 = sbr.rel (%p148) target = $region20
      $region19: #{_lambda_.27} parent=15 // pred_region
        %p151 = scmp.lt.s32.totalorder %s16, 1
        %s152 = scalar_select %p151, %s16, 1
        %p153 = scmp.lt.s32.totalorder %s17, 0
        %s154 = scalar_select %p153, %s17, 0
        %s155 = sadd.s32 %s154, %s152
        %s156 = smul.addr %s155, 8
        %s157 = scalar_lea.vmem %s0, %s156
      $region20: #{_lambda_.27} parent=15 // pred_fallthru
        _
      // Predicated region
      $region21: #{_lambda_.27} parent=15 // pred_check
        %p158 = pneg %p69
      $region22: #{_lambda_.27} parent=15 // pred_check_branch
        %160 = sbr.rel (%p158) target = $region24
      $region23: #{_lambda_.27} parent=15 // pred_region
        %p161 = scmp.lt.s32.totalorder %s16, 1
        %s162 = scalar_select %p161, %s16, 1
        %s163 = smul.addr %s162, 8
        %s164 = scalar_lea.vmem %s1, %s163
      $region24: #{_lambda_.27} parent=15 // pred_fallthru
        _
      // Predicated region
      $region25: #{_lambda_.27} parent=15 // pred_check
        %p165 = pneg %p95
      $region26: #{_lambda_.27} parent=15 // pred_check_branch
        %167 = sbr.rel (%p165) target = $region28
      $region27: #{_lambda_.27} parent=15 // pred_region
        %p168 = scmp.lt.s32.totalorder %s16, 1
        %s169 = scalar_select %p168, %s16, 1
        %s170 = smul.addr %s169, 8
        %s171 = scalar_lea.vmem %s2, %s170
      $region28: #{_lambda_.27} parent=15 // pred_fallthru
        _
    $region16: #{_lambda_.27} parent=5 // pred_fallthru
      _
    %p172 = scmp.le.s32.totalorder 1, %s9
    %p173 = scmp.lt.s32.totalorder %s9, 3
    %p174 = pnand %p172, %p173
    %p175 = pneg %p174
    // Predicated region
    $region29: #{_lambda_.27} parent=5 // pred_check
      _
    $region30: #{_lambda_.27} parent=5 // pred_check_branch
      %177 = sbr.rel (%p174) target = $region32
    $region31: #{_lambda_.27} parent=5 // pred_region
      %s178 = ssub.s32 %s9, 1
      %p179 = scmp.lt.s32.totalorder %s18, 1
      %s180 = scalar_select %p179, %s18, 1
      %p181 = scmp.lt.s32.totalorder %s19, 0
      %s182 = scalar_select %p181, %s19, 0
      %s183 = sadd.s32 %s182, %s180
      %s184 = smul.addr %s183, 8
      %s185 = scalar_lea.vmem %s0, %s184
      %p186 = pneg %p49
      %p187 = pneg %p46
      %p188 = scmp.lt.s32.totalorder %s18, 1
      %s189 = scalar_select %p188, %s18, 1
      %s190 = smul.addr %s189, 8
      %s191 = scalar_lea.vmem %s1, %s190
      %p192 = pneg %p75
      %p193 = pneg %p72
      %p194 = scmp.lt.s32.totalorder %s18, 1
      %s195 = scalar_select %p194, %s18, 1
      %s196 = smul.addr %s195, 8
      %s197 = scalar_lea.vmem %s2, %s196
      %p198 = pneg %p101
      %p199 = pneg %p98
      %p200 = pneg %p129
      %p201 = pneg %p126
      %p202 = scmp.lt.s32.totalorder %s18, 1
      %s203 = scalar_select %p202, %s18, 1
      %p204 = scmp.lt.s32.totalorder %s19, 0
      %s205 = scalar_select %p204, %s19, 0
      %s206 = sadd.s32 %s205, %s203
      %s207 = smul.addr %s206, 8
      %s208 = scalar_lea.vmem %s3, %s207
      %p209 = scmp.lt.s32.totalorder %s18, 1
      %s210 = scalar_select %p209, %s18, 1
      %p211 = scmp.lt.s32.totalorder %s19, 0
      %s212 = scalar_select %p211, %s19, 0
      %s213 = sadd.s32 %s212, %s210
      %s214 = smul.addr %s213, 8
      %s215 = scalar_lea.vmem %s0, %s214
      %p216 = scmp.lt.s32.totalorder %s18, 1
      %s217 = scalar_select %p216, %s18, 1
      %s218 = smul.addr %s217, 8
      %s219 = scalar_lea.vmem %s1, %s218
      %p220 = scmp.lt.s32.totalorder %s18, 1
      %s221 = scalar_select %p220, %s18, 1
      %s222 = smul.addr %s221, 8
      %s223 = scalar_lea.vmem %s2, %s222
      %p224 = scmp.lt.s32.totalorder %s18, 1
      %s225 = scalar_select %p224, %s18, 1
      %p226 = scmp.lt.s32.totalorder %s19, 0
      %s227 = scalar_select %p226, %s19, 0
      %s228 = sadd.s32 %s227, %s225
      %s229 = smul.addr %s228, 8
      %s230 = scalar_lea.vmem %s3, %s229
      %v231 = vld [vmem:[%s215] sm:$0xff]
      %v232 = vld [vmem:[%s219] sm:$0xff]
      %234 = vset.pattern.permute.xlu0 0
      %235 = vperm.xlu0 %234, %v232
      %v236 = vpop.permute.xlu0 %235
      %v238 = vsub.f32 %v231, %v236
      %v239 = vmul.f32 %v238, 1.442695
      %v240 = vpow.pop %v239
      %v241 = vld [vmem:[%s223] sm:$0xff]
      %v242 = vrcp.pop %v241
      %244 = vset.pattern.permute.xlu0 0
      %245 = vperm.xlu0 %244, %v242
      %v246 = vpop.permute.xlu0 %245
      %v248 = vmul.f32 %v240, %v246
      %249 = vst [vmem:[%s230] sm:$0xff] %v248
      %p250 = scmp.lt.s32.totalorder %s18, 1
      %s251 = scalar_select %p250, %s18, 1
      %p252 = scmp.lt.s32.totalorder %s19, 0
      %s253 = scalar_select %p252, %s19, 0
      %s254 = sadd.s32 %s253, %s251
      %s255 = smul.addr %s254, 8
      %s256 = scalar_lea.vmem %s3, %s255
      // Predicated region
      $region33: #{_lambda_.27} parent=31 // pred_check
        %p257 = pneg %p126
      $region34: #{_lambda_.27} parent=31 // pred_check_branch
        %259 = sbr.rel (%p257) target = $region36
      $region35: #{_lambda_.27} parent=31 // pred_region
        _
      $region36: #{_lambda_.27} parent=31 // pred_fallthru
        _
    $region32: #{_lambda_.27} parent=5 // pred_fallthru
      _
    %p260 = scmp.le.s32.totalorder 2, %s9
    // Predicated region
    $region37: #{_lambda_.27} parent=5 // pred_check
      %p261 = pneg %p260
    $region38: #{_lambda_.27} parent=5 // pred_check_branch
      %263 = sbr.rel (%p261) target = $region40
    $region39: #{_lambda_.27} parent=5 // pred_region
      %s264 = ssub.s32 %s9, 2
      // Predicated region
      $region41: #{_lambda_.27} parent=39 // pred_check
        %p265 = pneg %p132
      $region42: #{_lambda_.27} parent=39 // pred_check_branch
        %267 = sbr.rel (%p265) target = $region44
      $region43: #{_lambda_.27} parent=39 // pred_region
        %p268 = scmp.lt.s32.totalorder %s20, 1
        %s269 = scalar_select %p268, %s20, 1
        %p270 = scmp.lt.s32.totalorder %s21, 0
        %s271 = scalar_select %p270, %s21, 0
        %s272 = sadd.s32 %s271, %s269
        %s273 = smul.addr %s272, 8
        %s274 = scalar_lea.vmem %s3, %s273
      $region44: #{_lambda_.27} parent=39 // pred_fallthru
        _
    $region40: #{_lambda_.27} parent=5 // pred_fallthru
      _
  $region6: #{_lambda_.27} parent=0 // loop_footer
    %s13 = sadd.s32 1, %s9
  $region7: #{_lambda_.27} parent=0 // loop_footer_branch
    %8 = sbr.rel target = $region3
  $region8: #{_lambda_.27} parent=0 // loop_exit
    _

</llo_original>
